<compile_context>
chip_gen: v6e
topology: v6e:2x2x1
jax: 0.10.0
libtpu: 0.0.40
codegen_flags: <defaults>
</compile_context>

<pallas_src>
import jax
import jax.numpy as jnp
import numpy as np
from jax.experimental import pallas as pl
from jax.experimental.pallas import tpu as pltpu


def _vmem_limit_bytes():
    """Generation-aware scoped-VMEM limit: ~3/4 of physical, capped at 96 MiB."""
    cap = 64 * 1024 * 1024
    try:
        cap = int(getattr(pltpu.get_tpu_info(), "vmem_capacity_bytes", cap))
    except Exception:
        pass
    return max(32 * 1024 * 1024, min(cap * 3 // 4, 96 * 1024 * 1024))


def _choose_strip_rows(H, W, C, compute_itemsize):
    """Largest even divisor of H whose per-strip working set fits ~1/4 of VMEM."""
    budget = _vmem_limit_bytes() // 4
    smallest = None
    for th in range(H, 1, -1):
        if H % th or th % 2:
            continue
        smallest = th
        scratches = ((th + 4) + (th + 2)) * (W + 2) * C * compute_itemsize
        io_blocks = 2 * 2 * th * W * C * 4        # in + out blocks, double-buffered
        live_f32 = 3 * (th + 2) * W * C * 4       # h / acc / y live f32 slabs
        if scratches + io_blocks + live_f32 <= budget:
            return th
    if smallest is None:
        raise ValueError("H must be even for strip tiling")
    return smallest


def resblock_pallas(x_nhwc, w1, b1, w2, b2, *,
                    compute_dtype=jnp.bfloat16, strip_rows=None):
    """Fused residual block in NHWC: one pallas_call, H-strip tiled."""
    N, H, W, C = x_nhwc.shape
    assert w1.shape == (3, 3, C, C) and w2.shape == (3, 3, C, C)
    assert H % 2 == 0, "even H required (halo blocks are 2 rows tall)"

    cdt = compute_dtype
    cit = np.dtype(compute_dtype).itemsize
    TH = strip_rows if strip_rows is not None else _choose_strip_rows(H, W, C, cit)
    assert TH % 2 == 0 and H % TH == 0, "strip_rows must be even and divide H"
    ns = H // TH
    hb = TH // 2                       # halo-block granularity (2 rows / block)

    # Weight layout: tap-concatenated (3, 3C, C) when C is lane-aligned so each
    # conv is 3 fat K=3C matmuls; plain tap-major (9, C, C) otherwise.
    band = (C % 128 == 0)
    if band:
        w1t = w1.reshape(3, 3 * C, C).astype(cdt)
        w2t = w2.reshape(3, 3 * C, C).astype(cdt)
    else:
        w1t = w1.reshape(9, C, C).astype(cdt)
        w2t = w2.reshape(9, C, C).astype(cdt)
    b1r = b1.reshape(1, C).astype(jnp.float32)
    b2r = b2.reshape(1, C).astype(jnp.float32)

    def conv3x3(pad_ref, w_ref, b_ref, rows):
        """SAME 3x3 conv over a zero-padded scratch; f32 acc, bias-folded init."""
        M = rows * W
        acc = jnp.broadcast_to(b_ref[...], (M, C)).astype(jnp.float32)
        if band:
            for dy in range(3):                     # 3 MXU pushes, K = 3C
                patches = jnp.concatenate(
                    [pad_ref[pl.ds(dy, rows), pl.ds(dx, W), :] for dx in range(3)],
                    axis=-1)
                acc = acc + jnp.dot(patches.reshape(M, 3 * C), w_ref[dy],
                                    preferred_element_type=jnp.float32)
        else:
            for dy in range(3):                     # straight unrolled chain
                for dx in range(3):                 # (MRB-friendly on v7x)
                    patch = pad_ref[pl.ds(dy, rows), pl.ds(dx, W), :]
                    acc = acc + jnp.dot(patch.reshape(M, C), w_ref[dy * 3 + dx],
                                        preferred_element_type=jnp.float32)
        return acc

    def kernel(x_ref, xtop_ref, xbot_ref, w1_ref, b1_ref, w2_ref, b2_ref,
               out_ref, xpad_s, hpad_s):
        s = pl.program_id(1)
        last = pl.num_programs(1) - 1

        # ---- assemble the zero-padded input strip (2-row halo, 1-col halo).
        # Only border columns + out-of-image halo rows are zero-filled; the
        # interior is fully overwritten every step (megacore-safe, no memset).
        xpad_s[:, pl.ds(0, 1), :] = jnp.zeros((TH + 4, 1, C), cdt)
        xpad_s[:, pl.ds(W + 1, 1), :] = jnp.zeros((TH + 4, 1, C), cdt)
        hpad_s[:, pl.ds(0, 1), :] = jnp.zeros((TH + 2, 1, C), cdt)
        hpad_s[:, pl.ds(W + 1, 1), :] = jnp.zeros((TH + 2, 1, C), cdt)

        xpad_s[pl.ds(2, TH), pl.ds(1, W), :] = x_ref[0].astype(cdt)

        @pl.when(s > 0)
        def _():                                    # real rows from strip s-1
            xpad_s[pl.ds(0, 2), pl.ds(1, W), :] = xtop_ref[0].astype(cdt)

        @pl.when(s == 0)
        def _():                                    # image top edge -> zeros
            xpad_s[pl.ds(0, 2), pl.ds(1, W), :] = jnp.zeros((2, W, C), cdt)

        @pl.when(s < last)
        def _():                                    # real rows from strip s+1
            xpad_s[pl.ds(TH + 2, 2), pl.ds(1, W), :] = xbot_ref[0].astype(cdt)

        @pl.when(s == last)
        def _():                                    # image bottom edge -> zeros
            xpad_s[pl.ds(TH + 2, 2), pl.ds(1, W), :] = jnp.zeros((2, W, C), cdt)

        # ---- conv1 + ReLU over TH+2 rows (strip + 1-row halo); stays in VMEM.
        h = jnp.maximum(conv3x3(xpad_s, w1_ref, b1_ref, TH + 2), 0.0)
        hpad_s[pl.ds(0, TH + 2), pl.ds(1, W), :] = (
            h.reshape(TH + 2, W, C).astype(cdt))

        # conv2's SAME padding: h outside the image is zero, not conv1(zero-pad).
        @pl.when(s == 0)
        def _():
            hpad_s[pl.ds(0, 1), :, :] = jnp.zeros((1, W + 2, C), cdt)

        @pl.when(s == last)
        def _():
            hpad_s[pl.ds(TH + 1, 1), :, :] = jnp.zeros((1, W + 2, C), cdt)

        # ---- conv2 + residual + ReLU, one lane-dense store per strip.
        y = conv3x3(hpad_s, w2_ref, b2_ref, TH)
        y = jnp.maximum(y + x_ref[0].reshape(TH * W, C).astype(jnp.float32), 0.0)
        out_ref[...] = y.reshape(1, TH, W, C).astype(out_ref.dtype)

    flops = 4 * 9 * N * H * W * C * C           # 2 convs x 2 flops/MAC x 9 taps
    bytes_accessed = int(
        2 * N * H * W * C * x_nhwc.dtype.itemsize                 # x in + y out
        + 4 * N * ns * W * C * x_nhwc.dtype.itemsize              # halo re-reads
        + (w1t.size + w2t.size) * np.dtype(cdt).itemsize
        + (b1r.size + b2r.size) * 4)

    # TODO(synk): single-buffer the grid-invariant weight/bias blocks
    # (pipeline_mode=pl.Buffered(1)) once validated on this toolchain, and chunk
    # the M dim of the accumulation into vreg-sized pieces for very wide strips.
    return pl.pallas_call(
        kernel,
        out_shape=jax.ShapeDtypeStruct((N, H, W, C), x_nhwc.dtype),
        grid=(N, ns),
        in_specs=[
            # main strip
            pl.BlockSpec((1, TH, W, C), lambda n, s: (n, s, 0, 0)),
            # 2-row top halo (rows [s*TH-2, s*TH)), clamped at the image edge
            pl.BlockSpec((1, 2, W, C),
                         lambda n, s: (n, jnp.maximum(s * hb - 1, 0), 0, 0)),
            # 2-row bottom halo (rows [(s+1)*TH, (s+1)*TH+2)), clamped
            pl.BlockSpec((1, 2, W, C),
                         lambda n, s: (n, jnp.minimum((s + 1) * hb, H // 2 - 1),
                                       0, 0)),
            pl.BlockSpec(w1t.shape, lambda n, s: (0, 0, 0)),
            pl.BlockSpec((1, C), lambda n, s: (0, 0)),
            pl.BlockSpec(w2t.shape, lambda n, s: (0, 0, 0)),
            pl.BlockSpec((1, C), lambda n, s: (0, 0)),
        ],
        out_specs=pl.BlockSpec((1, TH, W, C), lambda n, s: (n, s, 0, 0)),
        scratch_shapes=[
            pltpu.VMEM((TH + 4, W + 2, C), cdt),   # padded x strip (2-row halo)
            pltpu.VMEM((TH + 2, W + 2, C), cdt),   # padded h strip (1-row halo)
        ],
        compiler_params=pltpu.CompilerParams(
            dimension_semantics=("parallel", "parallel"),
            vmem_limit_bytes=_vmem_limit_bytes(),
        ),
        cost_estimate=pl.CostEstimate(flops=flops, transcendentals=0,
                                      bytes_accessed=bytes_accessed),
    )(x_nhwc, x_nhwc, x_nhwc, w1t, b1r, w2t, b2r)


class ResBlock:
    """Residual block y = relu(x + conv2(relu(conv1(x) + b1)) + b2), 3x3 SAME.

    bf16 matmul operands by default (f32 accumulation / elementwise); pass
    compute_dtype=jnp.float32 for bit-tight results.
    """

    def __init__(self, key, channels, compute_dtype=jnp.bfloat16,
                 strip_rows=None, params=None):
        if params is None:
            k1, k2, k3, k4 = jax.random.split(key, 4)
            std = (2.0 / (channels * 9)) ** 0.5
            params = {
                "w1": std * jax.random.normal(k1, (3, 3, channels, channels),
                                              jnp.float32),
                "b1": 0.1 * jax.random.normal(k2, (channels,), jnp.float32),
                "w2": std * jax.random.normal(k3, (3, 3, channels, channels),
                                              jnp.float32),
                "b2": 0.1 * jax.random.normal(k4, (channels,), jnp.float32),
            }
        self._params = params
        self.compute_dtype = compute_dtype
        self.strip_rows = strip_rows

    def __call__(self, x_nhwc):
        p = self._params
        return resblock_pallas(x_nhwc, p["w1"], p["b1"], p["w2"], p["b2"],
                               compute_dtype=self.compute_dtype,
                               strip_rows=self.strip_rows)

    def params(self):
        return self._params


class ResNet:
    """Mirrors SE3ResNet.ResNet: applies blocks sequentially, skipping None."""

    def __init__(self, *blocks):
        self.blocks = [b for b in blocks if b is not None]

    def __call__(self, x_nchw):
        x = jnp.transpose(x_nchw, (0, 2, 3, 1))      # NCHW -> NHWC once
        for blk in self.blocks:
            x = blk(x)
        return jnp.transpose(x, (0, 3, 1, 2))


# ---------------- pure-JAX reference (for correctness checks) ----------------
def _conv_ref(x_nhwc, w, b):
    y = jax.lax.conv_general_dilated(
        x_nhwc, w, window_strides=(1, 1), padding="SAME",
        dimension_numbers=("NHWC", "HWIO", "NHWC"))
    return y + b


def _resnet_ref(x_nchw, block_params):
    x = jnp.transpose(x_nchw, (0, 2, 3, 1))
    for p in block_params:
        h = jax.nn.relu(_conv_ref(x, p["w1"], p["b1"]))
        x = jax.nn.relu(x + _conv_ref(h, p["w2"], p["b2"]))
    return jnp.transpose(x, (0, 3, 1, 2))


if __name__ == "__main__":
    key = jax.random.PRNGKey(0)
    kx, kb1, kb2 = jax.random.split(key, 3)

    N, C, H, W = 2, 4, 16, 16
    x = jax.random.normal(kx, (N, C, H, W), jnp.float32)

    p1 = ResBlock(kb1, C).params()
    p2 = ResBlock(kb2, C).params()
    ref = jax.block_until_ready(_resnet_ref(x, [p1, p2]))

    # 1) f32, H-strip tiled (2 strips of 8 rows: exercises interior halos sourced
    #    from neighbouring strips AND zero-padded image edges).
    model = ResNet(ResBlock(None, C, jnp.float32, strip_rows=8, params=p1),
                   None,   # mimics the PyTorch constructor's filtering of None
                   ResBlock(None, C, jnp.float32, strip_rows=8, params=p2))
    out = jax.block_until_ready(model(x))
    assert out.shape == (N, C, H, W) and out.dtype == jnp.float32
    np.testing.assert_allclose(np.asarray(out), np.asarray(ref),
                               rtol=2e-4, atol=2e-4)

    # 2) f32, auto strip size (single whole-image strip at this toy shape).
    model_auto = ResNet(ResBlock(None, C, jnp.float32, params=p1),
                        ResBlock(None, C, jnp.float32, params=p2))
    out_auto = jax.block_until_ready(model_auto(x))
    np.testing.assert_allclose(np.asarray(out_auto), np.asarray(ref),
                               rtol=2e-4, atol=2e-4)

    # 3) bf16 operands/scratches (the v6e/v7x default), f32 accumulation:
    #    smoke-check one block against the f32 reference at loose tolerance.
    ref1 = jax.block_until_ready(_resnet_ref(x, [p1]))
    model_bf16 = ResNet(ResBlock(None, C, jnp.bfloat16, strip_rows=8, params=p1))
    out_bf16 = jax.block_until_ready(model_bf16(x))
    np.testing.assert_allclose(np.asarray(out_bf16), np.asarray(ref1),
                               rtol=1e-1, atol=1e-1)

    print("KERNEL_OK")
</pallas_src>

<mosaic_0001>
module attributes {stable_mosaic.version = 11 : i64} {
  func.func @kernel(%arg0: i32, %arg1: i32, %arg2: memref<1x8x16x4xf32, #tpu.memory_space<vmem>>, %arg3: memref<1x2x16x4xf32, #tpu.memory_space<vmem>>, %arg4: memref<1x2x16x4xf32, #tpu.memory_space<vmem>>, %arg5: memref<9x4x4xf32, #tpu.memory_space<vmem>>, %arg6: memref<1x4xf32, #tpu.memory_space<vmem>>, %arg7: memref<9x4x4xf32, #tpu.memory_space<vmem>>, %arg8: memref<1x4xf32, #tpu.memory_space<vmem>>, %arg9: memref<1x8x16x4xf32, #tpu.memory_space<vmem>>, %arg10: memref<12x18x4xf32, #tpu.memory_space<vmem>>, %arg11: memref<10x18x4xf32, #tpu.memory_space<vmem>>) attributes {dimension_semantics = [#tpu.dimension_semantics<parallel>, #tpu.dimension_semantics<parallel>], iteration_bounds = array<i64: 2, 2>, scalar_prefetch = 0 : i64, scratch_operands = 2 : i64, tpu.core_type = #tpu.core_type<tc>, window_params = [{transform_indices = @transform_0, window_bounds = array<i64: 1, 8, 16, 4>}, {transform_indices = @transform_1, window_bounds = array<i64: 1, 2, 16, 4>}, {transform_indices = @transform_2, window_bounds = array<i64: 1, 2, 16, 4>}, {pipeline_mode = #tpu.pipeline_mode<synchronous>, transform_indices = @transform_3, window_bounds = array<i64: 9, 4, 4>}, {pipeline_mode = #tpu.pipeline_mode<synchronous>, transform_indices = @transform_4, window_bounds = array<i64: 1, 4>}, {pipeline_mode = #tpu.pipeline_mode<synchronous>, transform_indices = @transform_5, window_bounds = array<i64: 9, 4, 4>}, {pipeline_mode = #tpu.pipeline_mode<synchronous>, transform_indices = @transform_6, window_bounds = array<i64: 1, 4>}, {transform_indices = @transform_7, window_bounds = array<i64: 1, 8, 16, 4>}]} {
    %cst = arith.constant 0.000000e+00 : f32
    %0 = vector.broadcast %cst : f32 to vector<12x1x4xf32>
    %c0 = arith.constant 0 : index
    %c0_0 = arith.constant 0 : index
    %c0_1 = arith.constant 0 : index
    %1 = vector.load %arg10[%c0, %c0_0, %c0_1] : memref<12x18x4xf32, #tpu.memory_space<vmem>>, vector<12x1x4xf32>
    tpu.vector_store %arg10[%c0, %c0_0, %c0_1], %0 {strides = array<i32>} : memref<12x18x4xf32, #tpu.memory_space<vmem>>, vector<12x1x4xf32>,
    %cst_2 = arith.constant 0.000000e+00 : f32
    %2 = vector.broadcast %cst_2 : f32 to vector<12x1x4xf32>
    %c0_3 = arith.constant 0 : index
    %c17 = arith.constant 17 : index
    %c0_4 = arith.constant 0 : index
    %3 = vector.load %arg10[%c0_3, %c17, %c0_4] : memref<12x18x4xf32, #tpu.memory_space<vmem>>, vector<12x1x4xf32>
    tpu.vector_store %arg10[%c0_3, %c17, %c0_4], %2 {strides = array<i32>} : memref<12x18x4xf32, #tpu.memory_space<vmem>>, vector<12x1x4xf32>,
    %cst_5 = arith.constant 0.000000e+00 : f32
    %4 = vector.broadcast %cst_5 : f32 to vector<10x1x4xf32>
    %c0_6 = arith.constant 0 : index
    %c0_7 = arith.constant 0 : index
    %c0_8 = arith.constant 0 : index
    %5 = vector.load %arg11[%c0_6, %c0_7, %c0_8] : memref<10x18x4xf32, #tpu.memory_space<vmem>>, vector<10x1x4xf32>
    tpu.vector_store %arg11[%c0_6, %c0_7, %c0_8], %4 {strides = array<i32>} : memref<10x18x4xf32, #tpu.memory_space<vmem>>, vector<10x1x4xf32>,
    %cst_9 = arith.constant 0.000000e+00 : f32
    %6 = vector.broadcast %cst_9 : f32 to vector<10x1x4xf32>
    %c0_10 = arith.constant 0 : index
    %c17_11 = arith.constant 17 : index
    %c0_12 = arith.constant 0 : index
    %7 = vector.load %arg11[%c0_10, %c17_11, %c0_12] : memref<10x18x4xf32, #tpu.memory_space<vmem>>, vector<10x1x4xf32>
    tpu.vector_store %arg11[%c0_10, %c17_11, %c0_12], %6 {strides = array<i32>} : memref<10x18x4xf32, #tpu.memory_space<vmem>>, vector<10x1x4xf32>,
    %c0_13 = arith.constant 0 : index
    %c0_14 = arith.constant 0 : index
    %c0_15 = arith.constant 0 : index
    %c0_16 = arith.constant 0 : index
    %8 = vector.load %arg2[%c0_13, %c0_14, %c0_15, %c0_16] : memref<1x8x16x4xf32, #tpu.memory_space<vmem>>, vector<1x8x16x4xf32>
    %9 = vector.shape_cast %8 : vector<1x8x16x4xf32> to vector<8x16x4xf32>
    %c2 = arith.constant 2 : index
    %c1 = arith.constant 1 : index
    %c0_17 = arith.constant 0 : index
    %10 = vector.load %arg10[%c2, %c1, %c0_17] : memref<12x18x4xf32, #tpu.memory_space<vmem>>, vector<8x16x4xf32>
    tpu.vector_store %arg10[%c2, %c1, %c0_17], %9 {strides = array<i32>} : memref<12x18x4xf32, #tpu.memory_space<vmem>>, vector<8x16x4xf32>,
    %c0_i32 = arith.constant 0 : i32
    %11 = arith.cmpi sgt, %arg1, %c0_i32 : i32
    %12 = arith.extui %11 : i1 to i32
    %c0_i32_18 = arith.constant 0 : i32
    %13 = arith.cmpi ne, %12, %c0_i32_18 : i32
    scf.if %13 {
      %c0_165 = arith.constant 0 : index
      %c0_166 = arith.constant 0 : index
      %c0_167 = arith.constant 0 : index
      %c0_168 = arith.constant 0 : index
      %155 = vector.load %arg3[%c0_165, %c0_166, %c0_167, %c0_168] : memref<1x2x16x4xf32, #tpu.memory_space<vmem>>, vector<1x2x16x4xf32>
      %156 = vector.shape_cast %155 : vector<1x2x16x4xf32> to vector<2x16x4xf32>
      %c0_169 = arith.constant 0 : index
      %c1_170 = arith.constant 1 : index
      %c0_171 = arith.constant 0 : index
      %157 = vector.load %arg10[%c0_169, %c1_170, %c0_171] : memref<12x18x4xf32, #tpu.memory_space<vmem>>, vector<2x16x4xf32>
      tpu.vector_store %arg10[%c0_169, %c1_170, %c0_171], %156 {strides = array<i32>} : memref<12x18x4xf32, #tpu.memory_space<vmem>>, vector<2x16x4xf32>,
    } else {
    }
    %c0_i32_19 = arith.constant 0 : i32
    %14 = arith.cmpi eq, %arg1, %c0_i32_19 : i32
    %15 = arith.extui %14 : i1 to i32
    %c0_i32_20 = arith.constant 0 : i32
    %16 = arith.cmpi ne, %15, %c0_i32_20 : i32
    scf.if %16 {
      %cst_165 = arith.constant 0.000000e+00 : f32
      %155 = vector.broadcast %cst_165 : f32 to vector<2x16x4xf32>
      %c0_166 = arith.constant 0 : index
      %c1_167 = arith.constant 1 : index
      %c0_168 = arith.constant 0 : index
      %156 = vector.load %arg10[%c0_166, %c1_167, %c0_168] : memref<12x18x4xf32, #tpu.memory_space<vmem>>, vector<2x16x4xf32>
      tpu.vector_store %arg10[%c0_166, %c1_167, %c0_168], %155 {strides = array<i32>} : memref<12x18x4xf32, #tpu.memory_space<vmem>>, vector<2x16x4xf32>,
    } else {
    }
    %c1_i32 = arith.constant 1 : i32
    %17 = arith.cmpi slt, %arg1, %c1_i32 : i32
    %18 = arith.extui %17 : i1 to i32
    %c0_i32_21 = arith.constant 0 : i32
    %19 = arith.cmpi ne, %18, %c0_i32_21 : i32
    scf.if %19 {
      %c0_165 = arith.constant 0 : index
      %c0_166 = arith.constant 0 : index
      %c0_167 = arith.constant 0 : index
      %c0_168 = arith.constant 0 : index
      %155 = vector.load %arg4[%c0_165, %c0_166, %c0_167, %c0_168] : memref<1x2x16x4xf32, #tpu.memory_space<vmem>>, vector<1x2x16x4xf32>
      %156 = vector.shape_cast %155 : vector<1x2x16x4xf32> to vector<2x16x4xf32>
      %c10 = arith.constant 10 : index
      %c1_169 = arith.constant 1 : index
      %c0_170 = arith.constant 0 : index
      %157 = vector.load %arg10[%c10, %c1_169, %c0_170] : memref<12x18x4xf32, #tpu.memory_space<vmem>>, vector<2x16x4xf32>
      tpu.vector_store %arg10[%c10, %c1_169, %c0_170], %156 {strides = array<i32>} : memref<12x18x4xf32, #tpu.memory_space<vmem>>, vector<2x16x4xf32>,
    } else {
    }
    %c1_i32_22 = arith.constant 1 : i32
    %20 = arith.cmpi eq, %arg1, %c1_i32_22 : i32
    %21 = arith.extui %20 : i1 to i32
    %c0_i32_23 = arith.constant 0 : i32
    %22 = arith.cmpi ne, %21, %c0_i32_23 : i32
    scf.if %22 {
      %cst_165 = arith.constant 0.000000e+00 : f32
      %155 = vector.broadcast %cst_165 : f32 to vector<2x16x4xf32>
      %c10 = arith.constant 10 : index
      %c1_166 = arith.constant 1 : index
      %c0_167 = arith.constant 0 : index
      %156 = vector.load %arg10[%c10, %c1_166, %c0_167] : memref<12x18x4xf32, #tpu.memory_space<vmem>>, vector<2x16x4xf32>
      tpu.vector_store %arg10[%c10, %c1_166, %c0_167], %155 {strides = array<i32>} : memref<12x18x4xf32, #tpu.memory_space<vmem>>, vector<2x16x4xf32>,
    } else {
    }
    %c0_24 = arith.constant 0 : index
    %c0_25 = arith.constant 0 : index
    %23 = vector.load %arg6[%c0_24, %c0_25] : memref<1x4xf32, #tpu.memory_space<vmem>>, vector<1x4xf32>
    %24 = vector.shape_cast %23 : vector<1x4xf32> to vector<1x4xf32>
    %25 = vector.broadcast %24 : vector<1x4xf32> to vector<160x4xf32>
    %c0_26 = arith.constant 0 : index
    %c0_27 = arith.constant 0 : index
    %c0_28 = arith.constant 0 : index
    %26 = vector.load %arg10[%c0_26, %c0_27, %c0_28] : memref<12x18x4xf32, #tpu.memory_space<vmem>>, vector<10x16x4xf32>
    %27 = vector.shape_cast %26 : vector<10x16x4xf32> to vector<160x4xf32>
    %c0_29 = arith.constant 0 : index
    %c0_30 = arith.constant 0 : index
    %c0_31 = arith.constant 0 : index
    %28 = vector.load %arg5[%c0_29, %c0_30, %c0_31] : memref<9x4x4xf32, #tpu.memory_space<vmem>>, vector<1x4x4xf32>
    %29 = vector.shape_cast %28 : vector<1x4x4xf32> to vector<4x4xf32>
    %cst_32 = arith.constant dense<0.000000e+00> : vector<160x4xf32>
    %30 = tpu.matmul %27, %29, %cst_32 {dimension_numbers = #tpu.dot_dimension_numbers<[1], [0], [0], [1], [0, 0, 1, 1], [], []>} : vector<160x4xf32>, vector<4x4xf32>, vector<160x4xf32> -> vector<160x4xf32>
    %31 = arith.addf %25, %30 : vector<160x4xf32>
    %c0_33 = arith.constant 0 : index
    %c1_34 = arith.constant 1 : index
    %c0_35 = arith.constant 0 : index
    %32 = vector.load %arg10[%c0_33, %c1_34, %c0_35] : memref<12x18x4xf32, #tpu.memory_space<vmem>>, vector<10x16x4xf32>
    %33 = vector.shape_cast %32 : vector<10x16x4xf32> to vector<160x4xf32>
    %c1_36 = arith.constant 1 : index
    %c0_37 = arith.constant 0 : index
    %c0_38 = arith.constant 0 : index
    %34 = vector.load %arg5[%c1_36, %c0_37, %c0_38] : memref<9x4x4xf32, #tpu.memory_space<vmem>>, vector<1x4x4xf32>
    %35 = vector.shape_cast %34 : vector<1x4x4xf32> to vector<4x4xf32>
    %cst_39 = arith.constant dense<0.000000e+00> : vector<160x4xf32>
    %36 = tpu.matmul %33, %35, %cst_39 {dimension_numbers = #tpu.dot_dimension_numbers<[1], [0], [0], [1], [0, 0, 1, 1], [], []>} : vector<160x4xf32>, vector<4x4xf32>, vector<160x4xf32> -> vector<160x4xf32>
    %37 = arith.addf %31, %36 : vector<160x4xf32>
    %c0_40 = arith.constant 0 : index
    %c2_41 = arith.constant 2 : index
    %c0_42 = arith.constant 0 : index
    %38 = vector.load %arg10[%c0_40, %c2_41, %c0_42] : memref<12x18x4xf32, #tpu.memory_space<vmem>>, vector<10x16x4xf32>
    %39 = vector.shape_cast %38 : vector<10x16x4xf32> to vector<160x4xf32>
    %c2_43 = arith.constant 2 : index
    %c0_44 = arith.constant 0 : index
    %c0_45 = arith.constant 0 : index
    %40 = vector.load %arg5[%c2_43, %c0_44, %c0_45] : memref<9x4x4xf32, #tpu.memory_space<vmem>>, vector<1x4x4xf32>
    %41 = vector.shape_cast %40 : vector<1x4x4xf32> to vector<4x4xf32>
    %cst_46 = arith.constant dense<0.000000e+00> : vector<160x4xf32>
    %42 = tpu.matmul %39, %41, %cst_46 {dimension_numbers = #tpu.dot_dimension_numbers<[1], [0], [0], [1], [0, 0, 1, 1], [], []>} : vector<160x4xf32>, vector<4x4xf32>, vector<160x4xf32> -> vector<160x4xf32>
    %43 = arith.addf %37, %42 : vector<160x4xf32>
    %c1_47 = arith.constant 1 : index
    %c0_48 = arith.constant 0 : index
    %c0_49 = arith.constant 0 : index
    %44 = vector.load %arg10[%c1_47, %c0_48, %c0_49] : memref<12x18x4xf32, #tpu.memory_space<vmem>>, vector<10x16x4xf32>
    %45 = vector.shape_cast %44 : vector<10x16x4xf32> to vector<160x4xf32>
    %c3 = arith.constant 3 : index
    %c0_50 = arith.constant 0 : index
    %c0_51 = arith.constant 0 : index
    %46 = vector.load %arg5[%c3, %c0_50, %c0_51] : memref<9x4x4xf32, #tpu.memory_space<vmem>>, vector<1x4x4xf32>
    %47 = vector.shape_cast %46 : vector<1x4x4xf32> to vector<4x4xf32>
    %cst_52 = arith.constant dense<0.000000e+00> : vector<160x4xf32>
    %48 = tpu.matmul %45, %47, %cst_52 {dimension_numbers = #tpu.dot_dimension_numbers<[1], [0], [0], [1], [0, 0, 1, 1], [], []>} : vector<160x4xf32>, vector<4x4xf32>, vector<160x4xf32> -> vector<160x4xf32>
    %49 = arith.addf %43, %48 : vector<160x4xf32>
    %c1_53 = arith.constant 1 : index
    %c1_54 = arith.constant 1 : index
    %c0_55 = arith.constant 0 : index
    %50 = vector.load %arg10[%c1_53, %c1_54, %c0_55] : memref<12x18x4xf32, #tpu.memory_space<vmem>>, vector<10x16x4xf32>
    %51 = vector.shape_cast %50 : vector<10x16x4xf32> to vector<160x4xf32>
    %c4 = arith.constant 4 : index
    %c0_56 = arith.constant 0 : index
    %c0_57 = arith.constant 0 : index
    %52 = vector.load %arg5[%c4, %c0_56, %c0_57] : memref<9x4x4xf32, #tpu.memory_space<vmem>>, vector<1x4x4xf32>
    %53 = vector.shape_cast %52 : vector<1x4x4xf32> to vector<4x4xf32>
    %cst_58 = arith.constant dense<0.000000e+00> : vector<160x4xf32>
    %54 = tpu.matmul %51, %53, %cst_58 {dimension_numbers = #tpu.dot_dimension_numbers<[1], [0], [0], [1], [0, 0, 1, 1], [], []>} : vector<160x4xf32>, vector<4x4xf32>, vector<160x4xf32> -> vector<160x4xf32>
    %55 = arith.addf %49, %54 : vector<160x4xf32>
    %c1_59 = arith.constant 1 : index
    %c2_60 = arith.constant 2 : index
    %c0_61 = arith.constant 0 : index
    %56 = vector.load %arg10[%c1_59, %c2_60, %c0_61] : memref<12x18x4xf32, #tpu.memory_space<vmem>>, vector<10x16x4xf32>
    %57 = vector.shape_cast %56 : vector<10x16x4xf32> to vector<160x4xf32>
    %c5 = arith.constant 5 : index
    %c0_62 = arith.constant 0 : index
    %c0_63 = arith.constant 0 : index
    %58 = vector.load %arg5[%c5, %c0_62, %c0_63] : memref<9x4x4xf32, #tpu.memory_space<vmem>>, vector<1x4x4xf32>
    %59 = vector.shape_cast %58 : vector<1x4x4xf32> to vector<4x4xf32>
    %cst_64 = arith.constant dense<0.000000e+00> : vector<160x4xf32>
    %60 = tpu.matmul %57, %59, %cst_64 {dimension_numbers = #tpu.dot_dimension_numbers<[1], [0], [0], [1], [0, 0, 1, 1], [], []>} : vector<160x4xf32>, vector<4x4xf32>, vector<160x4xf32> -> vector<160x4xf32>
    %61 = arith.addf %55, %60 : vector<160x4xf32>
    %c2_65 = arith.constant 2 : index
    %c0_66 = arith.constant 0 : index
    %c0_67 = arith.constant 0 : index
    %62 = vector.load %arg10[%c2_65, %c0_66, %c0_67] : memref<12x18x4xf32, #tpu.memory_space<vmem>>, vector<10x16x4xf32>
    %63 = vector.shape_cast %62 : vector<10x16x4xf32> to vector<160x4xf32>
    %c6 = arith.constant 6 : index
    %c0_68 = arith.constant 0 : index
    %c0_69 = arith.constant 0 : index
    %64 = vector.load %arg5[%c6, %c0_68, %c0_69] : memref<9x4x4xf32, #tpu.memory_space<vmem>>, vector<1x4x4xf32>
    %65 = vector.shape_cast %64 : vector<1x4x4xf32> to vector<4x4xf32>
    %cst_70 = arith.constant dense<0.000000e+00> : vector<160x4xf32>
    %66 = tpu.matmul %63, %65, %cst_70 {dimension_numbers = #tpu.dot_dimension_numbers<[1], [0], [0], [1], [0, 0, 1, 1], [], []>} : vector<160x4xf32>, vector<4x4xf32>, vector<160x4xf32> -> vector<160x4xf32>
    %67 = arith.addf %61, %66 : vector<160x4xf32>
    %c2_71 = arith.constant 2 : index
    %c1_72 = arith.constant 1 : index
    %c0_73 = arith.constant 0 : index
    %68 = vector.load %arg10[%c2_71, %c1_72, %c0_73] : memref<12x18x4xf32, #tpu.memory_space<vmem>>, vector<10x16x4xf32>
    %69 = vector.shape_cast %68 : vector<10x16x4xf32> to vector<160x4xf32>
    %c7 = arith.constant 7 : index
    %c0_74 = arith.constant 0 : index
    %c0_75 = arith.constant 0 : index
    %70 = vector.load %arg5[%c7, %c0_74, %c0_75] : memref<9x4x4xf32, #tpu.memory_space<vmem>>, vector<1x4x4xf32>
    %71 = vector.shape_cast %70 : vector<1x4x4xf32> to vector<4x4xf32>
    %cst_76 = arith.constant dense<0.000000e+00> : vector<160x4xf32>
    %72 = tpu.matmul %69, %71, %cst_76 {dimension_numbers = #tpu.dot_dimension_numbers<[1], [0], [0], [1], [0, 0, 1, 1], [], []>} : vector<160x4xf32>, vector<4x4xf32>, vector<160x4xf32> -> vector<160x4xf32>
    %73 = arith.addf %67, %72 : vector<160x4xf32>
    %c2_77 = arith.constant 2 : index
    %c2_78 = arith.constant 2 : index
    %c0_79 = arith.constant 0 : index
    %74 = vector.load %arg10[%c2_77, %c2_78, %c0_79] : memref<12x18x4xf32, #tpu.memory_space<vmem>>, vector<10x16x4xf32>
    %75 = vector.shape_cast %74 : vector<10x16x4xf32> to vector<160x4xf32>
    %c8 = arith.constant 8 : index
    %c0_80 = arith.constant 0 : index
    %c0_81 = arith.constant 0 : index
    %76 = vector.load %arg5[%c8, %c0_80, %c0_81] : memref<9x4x4xf32, #tpu.memory_space<vmem>>, vector<1x4x4xf32>
    %77 = vector.shape_cast %76 : vector<1x4x4xf32> to vector<4x4xf32>
    %cst_82 = arith.constant dense<0.000000e+00> : vector<160x4xf32>
    %78 = tpu.matmul %75, %77, %cst_82 {dimension_numbers = #tpu.dot_dimension_numbers<[1], [0], [0], [1], [0, 0, 1, 1], [], []>} : vector<160x4xf32>, vector<4x4xf32>, vector<160x4xf32> -> vector<160x4xf32>
    %79 = arith.addf %73, %78 : vector<160x4xf32>
    %cst_83 = arith.constant 0.000000e+00 : f32
    %80 = vector.broadcast %cst_83 : f32 to vector<160x4xf32>
    %81 = arith.maximumf %79, %80 : vector<160x4xf32>
    %82 = vector.shape_cast %81 : vector<160x4xf32> to vector<10x16x4xf32>
    %c0_84 = arith.constant 0 : index
    %c1_85 = arith.constant 1 : index
    %c0_86 = arith.constant 0 : index
    %83 = vector.load %arg11[%c0_84, %c1_85, %c0_86] : memref<10x18x4xf32, #tpu.memory_space<vmem>>, vector<10x16x4xf32>
    tpu.vector_store %arg11[%c0_84, %c1_85, %c0_86], %82 {strides = array<i32>} : memref<10x18x4xf32, #tpu.memory_space<vmem>>, vector<10x16x4xf32>,
    %c0_i32_87 = arith.constant 0 : i32
    %84 = arith.cmpi eq, %arg1, %c0_i32_87 : i32
    %85 = arith.extui %84 : i1 to i32
    %c0_i32_88 = arith.constant 0 : i32
    %86 = arith.cmpi ne, %85, %c0_i32_88 : i32
    scf.if %86 {
      %cst_165 = arith.constant 0.000000e+00 : f32
      %155 = vector.broadcast %cst_165 : f32 to vector<1x18x4xf32>
      %c0_166 = arith.constant 0 : index
      %c0_167 = arith.constant 0 : index
      %c0_168 = arith.constant 0 : index
      %156 = vector.load %arg11[%c0_166, %c0_167, %c0_168] : memref<10x18x4xf32, #tpu.memory_space<vmem>>, vector<1x18x4xf32>
      tpu.vector_store %arg11[%c0_166, %c0_167, %c0_168], %155 {strides = array<i32>} : memref<10x18x4xf32, #tpu.memory_space<vmem>>, vector<1x18x4xf32>,
    } else {
    }
    %c1_i32_89 = arith.constant 1 : i32
    %87 = arith.cmpi eq, %arg1, %c1_i32_89 : i32
    %88 = arith.extui %87 : i1 to i32
    %c0_i32_90 = arith.constant 0 : i32
    %89 = arith.cmpi ne, %88, %c0_i32_90 : i32
    scf.if %89 {
      %cst_165 = arith.constant 0.000000e+00 : f32
      %155 = vector.broadcast %cst_165 : f32 to vector<1x18x4xf32>
      %c9 = arith.constant 9 : index
      %c0_166 = arith.constant 0 : index
      %c0_167 = arith.constant 0 : index
      %156 = vector.load %arg11[%c9, %c0_166, %c0_167] : memref<10x18x4xf32, #tpu.memory_space<vmem>>, vector<1x18x4xf32>
      tpu.vector_store %arg11[%c9, %c0_166, %c0_167], %155 {strides = array<i32>} : memref<10x18x4xf32, #tpu.memory_space<vmem>>, vector<1x18x4xf32>,
    } else {
    }
    %c0_91 = arith.constant 0 : index
    %c0_92 = arith.constant 0 : index
    %90 = vector.load %arg8[%c0_91, %c0_92] : memref<1x4xf32, #tpu.memory_space<vmem>>, vector<1x4xf32>
    %91 = vector.shape_cast %90 : vector<1x4xf32> to vector<1x4xf32>
    %92 = vector.broadcast %91 : vector<1x4xf32> to vector<128x4xf32>
    %c0_93 = arith.constant 0 : index
    %c0_94 = arith.constant 0 : index
    %c0_95 = arith.constant 0 : index
    %93 = vector.load %arg11[%c0_93, %c0_94, %c0_95] : memref<10x18x4xf32, #tpu.memory_space<vmem>>, vector<8x16x4xf32>
    %94 = vector.shape_cast %93 : vector<8x16x4xf32> to vector<128x4xf32>
    %c0_96 = arith.constant 0 : index
    %c0_97 = arith.constant 0 : index
    %c0_98 = arith.constant 0 : index
    %95 = vector.load %arg7[%c0_96, %c0_97, %c0_98] : memref<9x4x4xf32, #tpu.memory_space<vmem>>, vector<1x4x4xf32>
    %96 = vector.shape_cast %95 : vector<1x4x4xf32> to vector<4x4xf32>
    %cst_99 = arith.constant dense<0.000000e+00> : vector<128x4xf32>
    %97 = tpu.matmul %94, %96, %cst_99 {dimension_numbers = #tpu.dot_dimension_numbers<[1], [0], [0], [1], [0, 0, 1, 1], [], []>} : vector<128x4xf32>, vector<4x4xf32>, vector<128x4xf32> -> vector<128x4xf32>
    %98 = arith.addf %92, %97 : vector<128x4xf32>
    %c0_100 = arith.constant 0 : index
    %c1_101 = arith.constant 1 : index
    %c0_102 = arith.constant 0 : index
    %99 = vector.load %arg11[%c0_100, %c1_101, %c0_102] : memref<10x18x4xf32, #tpu.memory_space<vmem>>, vector<8x16x4xf32>
    %100 = vector.shape_cast %99 : vector<8x16x4xf32> to vector<128x4xf32>
    %c1_103 = arith.constant 1 : index
    %c0_104 = arith.constant 0 : index
    %c0_105 = arith.constant 0 : index
    %101 = vector.load %arg7[%c1_103, %c0_104, %c0_105] : memref<9x4x4xf32, #tpu.memory_space<vmem>>, vector<1x4x4xf32>
    %102 = vector.shape_cast %101 : vector<1x4x4xf32> to vector<4x4xf32>
    %cst_106 = arith.constant dense<0.000000e+00> : vector<128x4xf32>
    %103 = tpu.matmul %100, %102, %cst_106 {dimension_numbers = #tpu.dot_dimension_numbers<[1], [0], [0], [1], [0, 0, 1, 1], [], []>} : vector<128x4xf32>, vector<4x4xf32>, vector<128x4xf32> -> vector<128x4xf32>
    %104 = arith.addf %98, %103 : vector<128x4xf32>
    %c0_107 = arith.constant 0 : index
    %c2_108 = arith.constant 2 : index
    %c0_109 = arith.constant 0 : index
    %105 = vector.load %arg11[%c0_107, %c2_108, %c0_109] : memref<10x18x4xf32, #tpu.memory_space<vmem>>, vector<8x16x4xf32>
    %106 = vector.shape_cast %105 : vector<8x16x4xf32> to vector<128x4xf32>
    %c2_110 = arith.constant 2 : index
    %c0_111 = arith.constant 0 : index
    %c0_112 = arith.constant 0 : index
    %107 = vector.load %arg7[%c2_110, %c0_111, %c0_112] : memref<9x4x4xf32, #tpu.memory_space<vmem>>, vector<1x4x4xf32>
    %108 = vector.shape_cast %107 : vector<1x4x4xf32> to vector<4x4xf32>
    %cst_113 = arith.constant dense<0.000000e+00> : vector<128x4xf32>
    %109 = tpu.matmul %106, %108, %cst_113 {dimension_numbers = #tpu.dot_dimension_numbers<[1], [0], [0], [1], [0, 0, 1, 1], [], []>} : vector<128x4xf32>, vector<4x4xf32>, vector<128x4xf32> -> vector<128x4xf32>
    %110 = arith.addf %104, %109 : vector<128x4xf32>
    %c1_114 = arith.constant 1 : index
    %c0_115 = arith.constant 0 : index
    %c0_116 = arith.constant 0 : index
    %111 = vector.load %arg11[%c1_114, %c0_115, %c0_116] : memref<10x18x4xf32, #tpu.memory_space<vmem>>, vector<8x16x4xf32>
    %112 = vector.shape_cast %111 : vector<8x16x4xf32> to vector<128x4xf32>
    %c3_117 = arith.constant 3 : index
    %c0_118 = arith.constant 0 : index
    %c0_119 = arith.constant 0 : index
    %113 = vector.load %arg7[%c3_117, %c0_118, %c0_119] : memref<9x4x4xf32, #tpu.memory_space<vmem>>, vector<1x4x4xf32>
    %114 = vector.shape_cast %113 : vector<1x4x4xf32> to vector<4x4xf32>
    %cst_120 = arith.constant dense<0.000000e+00> : vector<128x4xf32>
    %115 = tpu.matmul %112, %114, %cst_120 {dimension_numbers = #tpu.dot_dimension_numbers<[1], [0], [0], [1], [0, 0, 1, 1], [], []>} : vector<128x4xf32>, vector<4x4xf32>, vector<128x4xf32> -> vector<128x4xf32>
    %116 = arith.addf %110, %115 : vector<128x4xf32>
    %c1_121 = arith.constant 1 : index
    %c1_122 = arith.constant 1 : index
    %c0_123 = arith.constant 0 : index
    %117 = vector.load %arg11[%c1_121, %c1_122, %c0_123] : memref<10x18x4xf32, #tpu.memory_space<vmem>>, vector<8x16x4xf32>
    %118 = vector.shape_cast %117 : vector<8x16x4xf32> to vector<128x4xf32>
    %c4_124 = arith.constant 4 : index
    %c0_125 = arith.constant 0 : index
    %c0_126 = arith.constant 0 : index
    %119 = vector.load %arg7[%c4_124, %c0_125, %c0_126] : memref<9x4x4xf32, #tpu.memory_space<vmem>>, vector<1x4x4xf32>
    %120 = vector.shape_cast %119 : vector<1x4x4xf32> to vector<4x4xf32>
    %cst_127 = arith.constant dense<0.000000e+00> : vector<128x4xf32>
    %121 = tpu.matmul %118, %120, %cst_127 {dimension_numbers = #tpu.dot_dimension_numbers<[1], [0], [0], [1], [0, 0, 1, 1], [], []>} : vector<128x4xf32>, vector<4x4xf32>, vector<128x4xf32> -> vector<128x4xf32>
    %122 = arith.addf %116, %121 : vector<128x4xf32>
    %c1_128 = arith.constant 1 : index
    %c2_129 = arith.constant 2 : index
    %c0_130 = arith.constant 0 : index
    %123 = vector.load %arg11[%c1_128, %c2_129, %c0_130] : memref<10x18x4xf32, #tpu.memory_space<vmem>>, vector<8x16x4xf32>
    %124 = vector.shape_cast %123 : vector<8x16x4xf32> to vector<128x4xf32>
    %c5_131 = arith.constant 5 : index
    %c0_132 = arith.constant 0 : index
    %c0_133 = arith.constant 0 : index
    %125 = vector.load %arg7[%c5_131, %c0_132, %c0_133] : memref<9x4x4xf32, #tpu.memory_space<vmem>>, vector<1x4x4xf32>
    %126 = vector.shape_cast %125 : vector<1x4x4xf32> to vector<4x4xf32>
    %cst_134 = arith.constant dense<0.000000e+00> : vector<128x4xf32>
    %127 = tpu.matmul %124, %126, %cst_134 {dimension_numbers = #tpu.dot_dimension_numbers<[1], [0], [0], [1], [0, 0, 1, 1], [], []>} : vector<128x4xf32>, vector<4x4xf32>, vector<128x4xf32> -> vector<128x4xf32>
    %128 = arith.addf %122, %127 : vector<128x4xf32>
    %c2_135 = arith.constant 2 : index
    %c0_136 = arith.constant 0 : index
    %c0_137 = arith.constant 0 : index
    %129 = vector.load %arg11[%c2_135, %c0_136, %c0_137] : memref<10x18x4xf32, #tpu.memory_space<vmem>>, vector<8x16x4xf32>
    %130 = vector.shape_cast %129 : vector<8x16x4xf32> to vector<128x4xf32>
    %c6_138 = arith.constant 6 : index
    %c0_139 = arith.constant 0 : index
    %c0_140 = arith.constant 0 : index
    %131 = vector.load %arg7[%c6_138, %c0_139, %c0_140] : memref<9x4x4xf32, #tpu.memory_space<vmem>>, vector<1x4x4xf32>
    %132 = vector.shape_cast %131 : vector<1x4x4xf32> to vector<4x4xf32>
    %cst_141 = arith.constant dense<0.000000e+00> : vector<128x4xf32>
    %133 = tpu.matmul %130, %132, %cst_141 {dimension_numbers = #tpu.dot_dimension_numbers<[1], [0], [0], [1], [0, 0, 1, 1], [], []>} : vector<128x4xf32>, vector<4x4xf32>, vector<128x4xf32> -> vector<128x4xf32>
    %134 = arith.addf %128, %133 : vector<128x4xf32>
    %c2_142 = arith.constant 2 : index
    %c1_143 = arith.constant 1 : index
    %c0_144 = arith.constant 0 : index
    %135 = vector.load %arg11[%c2_142, %c1_143, %c0_144] : memref<10x18x4xf32, #tpu.memory_space<vmem>>, vector<8x16x4xf32>
    %136 = vector.shape_cast %135 : vector<8x16x4xf32> to vector<128x4xf32>
    %c7_145 = arith.constant 7 : index
    %c0_146 = arith.constant 0 : index
    %c0_147 = arith.constant 0 : index
    %137 = vector.load %arg7[%c7_145, %c0_146, %c0_147] : memref<9x4x4xf32, #tpu.memory_space<vmem>>, vector<1x4x4xf32>
    %138 = vector.shape_cast %137 : vector<1x4x4xf32> to vector<4x4xf32>
    %cst_148 = arith.constant dense<0.000000e+00> : vector<128x4xf32>
    %139 = tpu.matmul %136, %138, %cst_148 {dimension_numbers = #tpu.dot_dimension_numbers<[1], [0], [0], [1], [0, 0, 1, 1], [], []>} : vector<128x4xf32>, vector<4x4xf32>, vector<128x4xf32> -> vector<128x4xf32>
    %140 = arith.addf %134, %139 : vector<128x4xf32>
    %c2_149 = arith.constant 2 : index
    %c2_150 = arith.constant 2 : index
    %c0_151 = arith.constant 0 : index
    %141 = vector.load %arg11[%c2_149, %c2_150, %c0_151] : memref<10x18x4xf32, #tpu.memory_space<vmem>>, vector<8x16x4xf32>
    %142 = vector.shape_cast %141 : vector<8x16x4xf32> to vector<128x4xf32>
    %c8_152 = arith.constant 8 : index
    %c0_153 = arith.constant 0 : index
    %c0_154 = arith.constant 0 : index
    %143 = vector.load %arg7[%c8_152, %c0_153, %c0_154] : memref<9x4x4xf32, #tpu.memory_space<vmem>>, vector<1x4x4xf32>
    %144 = vector.shape_cast %143 : vector<1x4x4xf32> to vector<4x4xf32>
    %cst_155 = arith.constant dense<0.000000e+00> : vector<128x4xf32>
    %145 = tpu.matmul %142, %144, %cst_155 {dimension_numbers = #tpu.dot_dimension_numbers<[1], [0], [0], [1], [0, 0, 1, 1], [], []>} : vector<128x4xf32>, vector<4x4xf32>, vector<128x4xf32> -> vector<128x4xf32>
    %146 = arith.addf %140, %145 : vector<128x4xf32>
    %c0_156 = arith.constant 0 : index
    %c0_157 = arith.constant 0 : index
    %c0_158 = arith.constant 0 : index
    %c0_159 = arith.constant 0 : index
    %147 = vector.load %arg2[%c0_156, %c0_157, %c0_158, %c0_159] : memref<1x8x16x4xf32, #tpu.memory_space<vmem>>, vector<1x8x16x4xf32>
    %148 = vector.shape_cast %147 : vector<1x8x16x4xf32> to vector<8x16x4xf32>
    %149 = vector.shape_cast %148 : vector<8x16x4xf32> to vector<128x4xf32>
    %150 = arith.addf %146, %149 : vector<128x4xf32>
    %cst_160 = arith.constant 0.000000e+00 : f32
    %151 = vector.broadcast %cst_160 : f32 to vector<128x4xf32>
    %152 = arith.maximumf %150, %151 : vector<128x4xf32>
    %153 = vector.shape_cast %152 : vector<128x4xf32> to vector<1x8x16x4xf32>
    %c0_161 = arith.constant 0 : index
    %c0_162 = arith.constant 0 : index
    %c0_163 = arith.constant 0 : index
    %c0_164 = arith.constant 0 : index
    %154 = vector.load %arg9[%c0_161, %c0_162, %c0_163, %c0_164] : memref<1x8x16x4xf32, #tpu.memory_space<vmem>>, vector<1x8x16x4xf32>
    tpu.vector_store %arg9[%c0_161, %c0_162, %c0_163, %c0_164], %153 {strides = array<i32>} : memref<1x8x16x4xf32, #tpu.memory_space<vmem>>, vector<1x8x16x4xf32>,
    return
  }
  func.func @transform_0(%arg0: i32, %arg1: i32) -> (i32, i32, i32, i32) {
    %c0_i32 = arith.constant 0 : i32
    %c0_i32_0 = arith.constant 0 : i32
    %c0_i32_1 = arith.constant 0 : i32
    return %arg0, %arg1, %c0_i32, %c0_i32_0 : i32, i32, i32, i32
  }
  func.func @transform_1(%arg0: i32, %arg1: i32) -> (i32, i32, i32, i32) {
    %c4_i32 = arith.constant 4 : i32
    %0 = arith.muli %arg1, %c4_i32 : i32
    %c1_i32 = arith.constant 1 : i32
    %1 = arith.subi %0, %c1_i32 : i32
    %c0_i32 = arith.constant 0 : i32
    %2 = arith.maxsi %1, %c0_i32 : i32
    %c0_i32_0 = arith.constant 0 : i32
    %c0_i32_1 = arith.constant 0 : i32
    %c0_i32_2 = arith.constant 0 : i32
    return %arg0, %2, %c0_i32_0, %c0_i32_1 : i32, i32, i32, i32
  }
  func.func @transform_2(%arg0: i32, %arg1: i32) -> (i32, i32, i32, i32) {
    %c1_i32 = arith.constant 1 : i32
    %0 = arith.addi %arg1, %c1_i32 : i32
    %c4_i32 = arith.constant 4 : i32
    %1 = arith.muli %0, %c4_i32 : i32
    %c7_i32 = arith.constant 7 : i32
    %2 = arith.minsi %1, %c7_i32 : i32
    %c0_i32 = arith.constant 0 : i32
    %c0_i32_0 = arith.constant 0 : i32
    %c0_i32_1 = arith.constant 0 : i32
    return %arg0, %2, %c0_i32, %c0_i32_0 : i32, i32, i32, i32
  }
  func.func @transform_3(%arg0: i32, %arg1: i32) -> (i32, i32, i32) {
    %c0_i32 = arith.constant 0 : i32
    %c0_i32_0 = arith.constant 0 : i32
    %c0_i32_1 = arith.constant 0 : i32
    %c0_i32_2 = arith.constant 0 : i32
    return %c0_i32, %c0_i32_0, %c0_i32_1 : i32, i32, i32
  }
  func.func @transform_4(%arg0: i32, %arg1: i32) -> (i32, i32) {
    %c0_i32 = arith.constant 0 : i32
    %c0_i32_0 = arith.constant 0 : i32
    %c0_i32_1 = arith.constant 0 : i32
    return %c0_i32, %c0_i32_0 : i32, i32
  }
  func.func @transform_5(%arg0: i32, %arg1: i32) -> (i32, i32, i32) {
    %c0_i32 = arith.constant 0 : i32
    %c0_i32_0 = arith.constant 0 : i32
    %c0_i32_1 = arith.constant 0 : i32
    %c0_i32_2 = arith.constant 0 : i32
    return %c0_i32, %c0_i32_0, %c0_i32_1 : i32, i32, i32
  }
  func.func @transform_6(%arg0: i32, %arg1: i32) -> (i32, i32) {
    %c0_i32 = arith.constant 0 : i32
    %c0_i32_0 = arith.constant 0 : i32
    %c0_i32_1 = arith.constant 0 : i32
    return %c0_i32, %c0_i32_0 : i32, i32
  }
  func.func @transform_7(%arg0: i32, %arg1: i32) -> (i32, i32, i32, i32) {
    %c0_i32 = arith.constant 0 : i32
    %c0_i32_0 = arith.constant 0 : i32
    %c0_i32_1 = arith.constant 0 : i32
    return %arg0, %arg1, %c0_i32, %c0_i32_0 : i32, i32, i32, i32
  }
}

</mosaic_0001>

<llo_original>
// kernel: tpu_custom_call.1
$region0: #{tpu_custom_call.1}
  #allocation0 [shape = 'u32[]', space=smem, size = 0x4, offset = 0x4, fixed_abs, tag = 'smem constant byte address 0x4 - core index']
  #allocation1 [shape = 'u32[144,128]{1,0:T(1,128)}', space=vmem, size = 0x12000, scoped, tag = 'internal scratch']
  #allocation2 [shape = 'f32[12,18,4]{2,1,0:T(8,128)}', space=vmem, size = 0x24000, scoped, tag = 'scratch operand']
  #allocation3 [shape = 'f32[10,18,4]{2,1,0:T(8,128)}', space=vmem, size = 0x1e000, scoped, tag = 'scratch operand']
  %s0 = inlined_call_operand.vmem [shape: f32[2,16,16,4], index: 0, kind: input, shape index: {}]
  %s1 = inlined_call_operand.vmem [shape: f32[2,16,16,4], index: 1, kind: input, shape index: {}]
  %s2 = inlined_call_operand.vmem [shape: f32[2,16,16,4], index: 2, kind: input, shape index: {}]
  %s3 = inlined_call_operand.vmem [shape: f32[9,4,4], index: 3, kind: input, shape index: {}]
  %s4 = inlined_call_operand.vmem [shape: f32[1,4], index: 4, kind: input, shape index: {}]
  %s5 = inlined_call_operand.vmem [shape: f32[9,4,4], index: 5, kind: input, shape index: {}]
  %s6 = inlined_call_operand.vmem [shape: f32[1,4], index: 6, kind: input, shape index: {}]
  %s7 = inlined_call_operand.vmem [shape: f32[2,16,16,4], index: 7, kind: output, shape index: {}]
  %s8 = sld [smem:[#allocation0]]
  $region85: #{tpu_custom_call.1} parent=0
    _
  %s10 = ssub.s32 1, %s8
  %s11 = scalar_select 0, %s10, %s8
  loop: start=0, step=1, limit=6
  $region2: #{tpu_custom_call.1} parent=0 // loop_pre_header
    _
  $region3: #{tpu_custom_call.1} parent=0 // loop_header
    %s13 = sphi 0, %s17
    %p14 = scmp.ge.s32.totalorder %s13, 6
    %s20 = sphi 0, %s32
    %s21 = sphi 0, %s28
    %s22 = sphi 0, %s20
    %s23 = sphi 0, %s21
    %s24 = sphi 0, %s22
    %s25 = sphi 0, %s23
    %s37 = sphi 0, %s39
    %s40 = sphi 0, %s37
    %s41 = sphi 0, %s40
    %s57 = sphi 0, %s41
    %s73 = sphi 0, %s75
    %s76 = sphi 0, %s73
    %s77 = sphi 0, %s76
    %s93 = sphi 0, %s77
    %s109 = sphi 0, %s111
    %s112 = sphi 0, %s109
    %s113 = sphi 0, %s112
    %s129 = sphi 0, %s113
    %s133 = sphi 0, %s133
    %s135 = sphi 0, %s133
    %s136 = sphi 0, %s135
    %s150 = sphi 0, %s136
    %s154 = sphi 0, %s154
    %s156 = sphi 0, %s154
    %s157 = sphi 0, %s156
    %s171 = sphi 0, %s157
    %s175 = sphi 0, %s175
    %s177 = sphi 0, %s175
    %s178 = sphi 0, %s177
    %s192 = sphi 0, %s178
    %s196 = sphi 0, %s196
    %s198 = sphi 0, %s196
    %s199 = sphi 0, %s198
    %s213 = sphi 0, %s199
    %s221 = sphi 0, %s223
    %s224 = sphi 0, %s221
    %s225 = sphi 0, %s224
    %s241 = sphi 0, %s225
  $region4: #{tpu_custom_call.1} parent=0 // loop_header_branch
    %16 = sbr.rel (%p14) target = $region8
  $region5: #{tpu_custom_call.1} parent=0 // loop_body
    %s18 = ssub.s32 %s13, 1
    %s19 = ssub.s32 %s13, 2
    %s26 = sadd.s32 1, %s21
    %p27 = scmp.ge.s32.totalorder %s26, 2
    %s28 = scalar_select %p27, 0, %s26
    %s29 = sadd.s32 1, %s20
    %s30 = scalar_select %p27, %s29, %s20
    %p31 = scmp.ge.s32.totalorder %s30, 2
    %s32 = scalar_select %p31, 0, %s30
    %s33 = ssub.s32 %s20, %s32
    %s34 = ssub.s32 %s21, %s28
    %s35 = sor.u32 %s33, %s34
    %p36 = scmp.eq.s32.totalorder %s35, 0
    %s38 = sadd.s32 %s37, 1
    %s39 = scalar_select %p36, %s37, %s38
    %p42 = pneg %p36
    %p43 = scmp.eq.s32.totalorder %s13, 3
    %p44 = por %p42, %p43
    %p45 = scmp.ne.s32.totalorder %s37, %s40
    %p46 = scmp.eq.s32.totalorder %s13, 0
    %p47 = por %p45, %p46
    %p48 = scmp.ne.s32.totalorder %s37, %s40
    %p49 = scmp.eq.s32.totalorder %s18, 3
    %p50 = por %p48, %p49
    %p51 = scmp.ne.s32.totalorder %s40, %s41
    %p52 = scmp.eq.s32.totalorder %s18, 0
    %p53 = por %p51, %p52
    %p54 = scmp.ne.s32.totalorder %s40, %s41
    %p55 = scmp.eq.s32.totalorder %s19, 3
    %p56 = por %p54, %p55
    %p58 = scmp.ne.s32.totalorder %s41, %s57
    %p59 = scmp.eq.s32.totalorder %s19, 0
    %p60 = por %p58, %p59
    %s61 = smul.u32 %s21, 4
    %s62 = ssub.s32 %s61, 1
    %p63 = scmp.gt.s32.totalorder %s62, 0
    %s64 = scalar_select %p63, %s62, 0
    %s65 = smul.u32 %s28, 4
    %s66 = ssub.s32 %s65, 1
    %p67 = scmp.gt.s32.totalorder %s66, 0
    %s68 = scalar_select %p67, %s66, 0
    %s69 = ssub.s32 %s20, %s32
    %s70 = ssub.s32 %s64, %s68
    %s71 = sor.u32 %s69, %s70
    %p72 = scmp.eq.s32.totalorder %s71, 0
    %s74 = sadd.s32 %s73, 1
    %s75 = scalar_select %p72, %s73, %s74
    %p78 = pneg %p72
    %p79 = scmp.eq.s32.totalorder %s13, 3
    %p80 = por %p78, %p79
    %p81 = scmp.ne.s32.totalorder %s73, %s76
    %p82 = scmp.eq.s32.totalorder %s13, 0
    %p83 = por %p81, %p82
    %p84 = scmp.ne.s32.totalorder %s73, %s76
    %p85 = scmp.eq.s32.totalorder %s18, 3
    %p86 = por %p84, %p85
    %p87 = scmp.ne.s32.totalorder %s76, %s77
    %p88 = scmp.eq.s32.totalorder %s18, 0
    %p89 = por %p87, %p88
    %p90 = scmp.ne.s32.totalorder %s76, %s77
    %p91 = scmp.eq.s32.totalorder %s19, 3
    %p92 = por %p90, %p91
    %p94 = scmp.ne.s32.totalorder %s77, %s93
    %p95 = scmp.eq.s32.totalorder %s19, 0
    %p96 = por %p94, %p95
    %s97 = sadd.s32 %s21, 1
    %s98 = smul.u32 %s97, 4
    %p99 = scmp.lt.s32.totalorder %s98, 7
    %s100 = scalar_select %p99, %s98, 7
    %s101 = sadd.s32 %s28, 1
    %s102 = smul.u32 %s101, 4
    %p103 = scmp.lt.s32.totalorder %s102, 7
    %s104 = scalar_select %p103, %s102, 7
    %s105 = ssub.s32 %s20, %s32
    %s106 = ssub.s32 %s100, %s104
    %s107 = sor.u32 %s105, %s106
    %p108 = scmp.eq.s32.totalorder %s107, 0
    %s110 = sadd.s32 %s109, 1
    %s111 = scalar_select %p108, %s109, %s110
    %p114 = pneg %p108
    %p115 = scmp.eq.s32.totalorder %s13, 3
    %p116 = por %p114, %p115
    %p117 = scmp.ne.s32.totalorder %s109, %s112
    %p118 = scmp.eq.s32.totalorder %s13, 0
    %p119 = por %p117, %p118
    %p120 = scmp.ne.s32.totalorder %s109, %s112
    %p121 = scmp.eq.s32.totalorder %s18, 3
    %p122 = por %p120, %p121
    %p123 = scmp.ne.s32.totalorder %s112, %s113
    %p124 = scmp.eq.s32.totalorder %s18, 0
    %p125 = por %p123, %p124
    %p126 = scmp.ne.s32.totalorder %s112, %s113
    %p127 = scmp.eq.s32.totalorder %s19, 3
    %p128 = por %p126, %p127
    %p130 = scmp.ne.s32.totalorder %s113, %s129
    %p131 = scmp.eq.s32.totalorder %s19, 0
    %p132 = por %p130, %p131
    %s134 = sadd.s32 %s133, 1
    %p137 = scmp.eq.s32.totalorder %s13, 3
    %p138 = scmp.ne.s32.totalorder %s133, %s135
    %p139 = scmp.eq.s32.totalorder %s13, 0
    %p140 = por %p138, %p139
    %p141 = scmp.ne.s32.totalorder %s133, %s135
    %p142 = scmp.eq.s32.totalorder %s18, 3
    %p143 = por %p141, %p142
    %p144 = scmp.ne.s32.totalorder %s135, %s136
    %p145 = scmp.eq.s32.totalorder %s18, 0
    %p146 = por %p144, %p145
    %p147 = scmp.ne.s32.totalorder %s135, %s136
    %p148 = scmp.eq.s32.totalorder %s19, 3
    %p149 = por %p147, %p148
    %p151 = scmp.ne.s32.totalorder %s136, %s150
    %p152 = scmp.eq.s32.totalorder %s19, 0
    %p153 = por %p151, %p152
    %s155 = sadd.s32 %s154, 1
    %p158 = scmp.eq.s32.totalorder %s13, 3
    %p159 = scmp.ne.s32.totalorder %s154, %s156
    %p160 = scmp.eq.s32.totalorder %s13, 0
    %p161 = por %p159, %p160
    %p162 = scmp.ne.s32.totalorder %s154, %s156
    %p163 = scmp.eq.s32.totalorder %s18, 3
    %p164 = por %p162, %p163
    %p165 = scmp.ne.s32.totalorder %s156, %s157
    %p166 = scmp.eq.s32.totalorder %s18, 0
    %p167 = por %p165, %p166
    %p168 = scmp.ne.s32.totalorder %s156, %s157
    %p169 = scmp.eq.s32.totalorder %s19, 3
    %p170 = por %p168, %p169
    %p172 = scmp.ne.s32.totalorder %s157, %s171
    %p173 = scmp.eq.s32.totalorder %s19, 0
    %p174 = por %p172, %p173
    %s176 = sadd.s32 %s175, 1
    %p179 = scmp.eq.s32.totalorder %s13, 3
    %p180 = scmp.ne.s32.totalorder %s175, %s177
    %p181 = scmp.eq.s32.totalorder %s13, 0
    %p182 = por %p180, %p181
    %p183 = scmp.ne.s32.totalorder %s175, %s177
    %p184 = scmp.eq.s32.totalorder %s18, 3
    %p185 = por %p183, %p184
    %p186 = scmp.ne.s32.totalorder %s177, %s178
    %p187 = scmp.eq.s32.totalorder %s18, 0
    %p188 = por %p186, %p187
    %p189 = scmp.ne.s32.totalorder %s177, %s178
    %p190 = scmp.eq.s32.totalorder %s19, 3
    %p191 = por %p189, %p190
    %p193 = scmp.ne.s32.totalorder %s178, %s192
    %p194 = scmp.eq.s32.totalorder %s19, 0
    %p195 = por %p193, %p194
    %s197 = sadd.s32 %s196, 1
    %p200 = scmp.eq.s32.totalorder %s13, 3
    %p201 = scmp.ne.s32.totalorder %s196, %s198
    %p202 = scmp.eq.s32.totalorder %s13, 0
    %p203 = por %p201, %p202
    %p204 = scmp.ne.s32.totalorder %s196, %s198
    %p205 = scmp.eq.s32.totalorder %s18, 3
    %p206 = por %p204, %p205
    %p207 = scmp.ne.s32.totalorder %s198, %s199
    %p208 = scmp.eq.s32.totalorder %s18, 0
    %p209 = por %p207, %p208
    %p210 = scmp.ne.s32.totalorder %s198, %s199
    %p211 = scmp.eq.s32.totalorder %s19, 3
    %p212 = por %p210, %p211
    %p214 = scmp.ne.s32.totalorder %s199, %s213
    %p215 = scmp.eq.s32.totalorder %s19, 0
    %p216 = por %p214, %p215
    %s217 = ssub.s32 %s20, %s32
    %s218 = ssub.s32 %s21, %s28
    %s219 = sor.u32 %s217, %s218
    %p220 = scmp.eq.s32.totalorder %s219, 0
    %s222 = sadd.s32 %s221, 1
    %s223 = scalar_select %p220, %s221, %s222
    %p226 = pneg %p220
    %p227 = scmp.eq.s32.totalorder %s13, 3
    %p228 = por %p226, %p227
    %p229 = scmp.ne.s32.totalorder %s221, %s224
    %p230 = scmp.eq.s32.totalorder %s13, 0
    %p231 = por %p229, %p230
    %p232 = scmp.ne.s32.totalorder %s221, %s224
    %p233 = scmp.eq.s32.totalorder %s18, 3
    %p234 = por %p232, %p233
    %p235 = scmp.ne.s32.totalorder %s224, %s225
    %p236 = scmp.eq.s32.totalorder %s18, 0
    %p237 = por %p235, %p236
    %p238 = scmp.ne.s32.totalorder %s224, %s225
    %p239 = scmp.eq.s32.totalorder %s19, 3
    %p240 = por %p238, %p239
    %p242 = scmp.ne.s32.totalorder %s225, %s241
    %p243 = scmp.eq.s32.totalorder %s19, 0
    %p244 = por %p242, %p243
    %p245 = scmp.le.s32.totalorder 1, %s13
    %p246 = scmp.lt.s32.totalorder %s13, 5
    %p247 = pnand %p245, %p246
    %p248 = pneg %p247
    // Predicated region
    $region9: #{tpu_custom_call.1} parent=5 // pred_check
      _
    $region10: #{tpu_custom_call.1} parent=5 // pred_check_branch
      %250 = sbr.rel (%p247) target = $region12
    $region11: #{tpu_custom_call.1} parent=5 // pred_region
      %s251 = ssub.s32 %s13, 1
      // Predicated region
      $region13: #{tpu_custom_call.1} parent=11 // pred_check
        %p252 = pneg %p146
      $region14: #{tpu_custom_call.1} parent=11 // pred_check_branch
        %254 = sbr.rel (%p252) target = $region16
      $region15: #{tpu_custom_call.1} parent=11 // pred_region
        _
      $region16: #{tpu_custom_call.1} parent=11 // pred_fallthru
        _
      // Predicated region
      $region17: #{tpu_custom_call.1} parent=11 // pred_check
        %p255 = pneg %p167
      $region18: #{tpu_custom_call.1} parent=11 // pred_check_branch
        %257 = sbr.rel (%p255) target = $region20
      $region19: #{tpu_custom_call.1} parent=11 // pred_region
        _
      $region20: #{tpu_custom_call.1} parent=11 // pred_fallthru
        _
      // Predicated region
      $region21: #{tpu_custom_call.1} parent=11 // pred_check
        %p258 = pneg %p188
      $region22: #{tpu_custom_call.1} parent=11 // pred_check_branch
        %260 = sbr.rel (%p258) target = $region24
      $region23: #{tpu_custom_call.1} parent=11 // pred_region
        _
      $region24: #{tpu_custom_call.1} parent=11 // pred_fallthru
        _
      // Predicated region
      $region25: #{tpu_custom_call.1} parent=11 // pred_check
        %p261 = pneg %p209
      $region26: #{tpu_custom_call.1} parent=11 // pred_check_branch
        %263 = sbr.rel (%p261) target = $region28
      $region27: #{tpu_custom_call.1} parent=11 // pred_region
        _
      $region28: #{tpu_custom_call.1} parent=11 // pred_fallthru
        _
    $region12: #{tpu_custom_call.1} parent=5 // pred_fallthru
      _
    %p264 = scmp.lt.s32.totalorder %s13, 4
    // Predicated region
    $region29: #{tpu_custom_call.1} parent=5 // pred_check
      %p265 = pneg %p264
    $region30: #{tpu_custom_call.1} parent=5 // pred_check_branch
      %267 = sbr.rel (%p265) target = $region32
    $region31: #{tpu_custom_call.1} parent=5 // pred_region
      // Predicated region
      $region33: #{tpu_custom_call.1} parent=31 // pred_check
        %p268 = pneg %p47
      $region34: #{tpu_custom_call.1} parent=31 // pred_check_branch
        %270 = sbr.rel (%p268) target = $region36
      $region35: #{tpu_custom_call.1} parent=31 // pred_region
        %s271 = smul.u32 8, %s21
        %p272 = scmp.lt.s32.totalorder %s20, 1
        %s273 = scalar_select %p272, %s20, 1
        %p274 = scmp.lt.s32.totalorder %s271, 15
        %s275 = scalar_select %p274, %s271, 15
        %s276 = smul.addr %s275, 2
        %s277 = smul.addr %s273, 32
        %s278 = sadd.s32 %s276, %s277
        %s279 = smul.addr %s278, 8
        %s280 = scalar_lea.vmem %s0, %s279
        %s281 = smul.u32 8, %s21
      $region36: #{tpu_custom_call.1} parent=31 // pred_fallthru
        _
      // Predicated region
      $region37: #{tpu_custom_call.1} parent=31 // pred_check
        %p282 = pneg %p83
      $region38: #{tpu_custom_call.1} parent=31 // pred_check_branch
        %284 = sbr.rel (%p282) target = $region40
      $region39: #{tpu_custom_call.1} parent=31 // pred_region
        %s285 = smul.u32 %s21, 4
        %s286 = ssub.s32 %s285, 1
        %p287 = scmp.gt.s32.totalorder %s286, 0
        %s288 = scalar_select %p287, %s286, 0
        %s289 = smul.u32 2, %s288
        %p290 = scmp.lt.s32.totalorder %s20, 1
        %s291 = scalar_select %p290, %s20, 1
        %p292 = scmp.lt.s32.totalorder %s289, 15
        %s293 = scalar_select %p292, %s289, 15
        %s294 = smul.addr %s293, 2
        %s295 = smul.addr %s291, 32
        %s296 = sadd.s32 %s294, %s295
        %s297 = smul.addr %s296, 8
        %s298 = scalar_lea.vmem %s1, %s297
        %s299 = smul.u32 %s21, 4
        %s300 = ssub.s32 %s299, 1
        %p301 = scmp.gt.s32.totalorder %s300, 0
        %s302 = scalar_select %p301, %s300, 0
        %s303 = smul.u32 2, %s302
      $region40: #{tpu_custom_call.1} parent=31 // pred_fallthru
        _
      // Predicated region
      $region41: #{tpu_custom_call.1} parent=31 // pred_check
        %p304 = pneg %p119
      $region42: #{tpu_custom_call.1} parent=31 // pred_check_branch
        %306 = sbr.rel (%p304) target = $region44
      $region43: #{tpu_custom_call.1} parent=31 // pred_region
        %s307 = sadd.s32 %s21, 1
        %s308 = smul.u32 %s307, 4
        %p309 = scmp.lt.s32.totalorder %s308, 7
        %s310 = scalar_select %p309, %s308, 7
        %s311 = smul.u32 2, %s310
        %p312 = scmp.lt.s32.totalorder %s20, 1
        %s313 = scalar_select %p312, %s20, 1
        %p314 = scmp.lt.s32.totalorder %s311, 15
        %s315 = scalar_select %p314, %s311, 15
        %s316 = smul.addr %s315, 2
        %s317 = smul.addr %s313, 32
        %s318 = sadd.s32 %s316, %s317
        %s319 = smul.addr %s318, 8
        %s320 = scalar_lea.vmem %s2, %s319
        %s321 = sadd.s32 %s21, 1
        %s322 = smul.u32 %s321, 4
        %p323 = scmp.lt.s32.totalorder %s322, 7
        %s324 = scalar_select %p323, %s322, 7
        %s325 = smul.u32 2, %s324
      $region44: #{tpu_custom_call.1} parent=31 // pred_fallthru
        _
    $region32: #{tpu_custom_call.1} parent=5 // pred_fallthru
      _
    %p326 = scmp.le.s32.totalorder 1, %s13
    %p327 = scmp.lt.s32.totalorder %s13, 5
    %p328 = pnand %p326, %p327
    %p329 = pneg %p328
    // Predicated region
    $region45: #{tpu_custom_call.1} parent=5 // pred_check
      _
    $region46: #{tpu_custom_call.1} parent=5 // pred_check_branch
      %331 = sbr.rel (%p328) target = $region48
    $region47: #{tpu_custom_call.1} parent=5 // pred_region
      %s332 = ssub.s32 %s13, 1
      %s333 = smul.u32 8, %s23
      %p334 = scmp.lt.s32.totalorder %s22, 1
      %s335 = scalar_select %p334, %s22, 1
      %p336 = scmp.lt.s32.totalorder %s333, 15
      %s337 = scalar_select %p336, %s333, 15
      %s338 = smul.addr %s337, 2
      %s339 = smul.addr %s335, 32
      %s340 = sadd.s32 %s338, %s339
      %s341 = smul.addr %s340, 8
      %s342 = scalar_lea.vmem %s0, %s341
      %p343 = pneg %p53
      %p344 = pneg %p50
      %s345 = smul.u32 %s23, 4
      %s346 = ssub.s32 %s345, 1
      %p347 = scmp.gt.s32.totalorder %s346, 0
      %s348 = scalar_select %p347, %s346, 0
      %s349 = smul.u32 2, %s348
      %p350 = scmp.lt.s32.totalorder %s22, 1
      %s351 = scalar_select %p350, %s22, 1
      %p352 = scmp.lt.s32.totalorder %s349, 15
      %s353 = scalar_select %p352, %s349, 15
      %s354 = smul.addr %s353, 2
      %s355 = smul.addr %s351, 32
      %s356 = sadd.s32 %s354, %s355
      %s357 = smul.addr %s356, 8
      %s358 = scalar_lea.vmem %s1, %s357
      %p359 = pneg %p89
      %p360 = pneg %p86
      %s361 = sadd.s32 %s23, 1
      %s362 = smul.u32 %s361, 4
      %p363 = scmp.lt.s32.totalorder %s362, 7
      %s364 = scalar_select %p363, %s362, 7
      %s365 = smul.u32 2, %s364
      %p366 = scmp.lt.s32.totalorder %s22, 1
      %s367 = scalar_select %p366, %s22, 1
      %p368 = scmp.lt.s32.totalorder %s365, 15
      %s369 = scalar_select %p368, %s365, 15
      %s370 = smul.addr %s369, 2
      %s371 = smul.addr %s367, 32
      %s372 = sadd.s32 %s370, %s371
      %s373 = smul.addr %s372, 8
      %s374 = scalar_lea.vmem %s2, %s373
      %p375 = pneg %p125
      %p376 = pneg %p122
      %p377 = pneg %p146
      %p378 = pneg %p143
      %p379 = pneg %p167
      %p380 = pneg %p164
      %p381 = pneg %p188
      %p382 = pneg %p185
      %p383 = pneg %p209
      %p384 = pneg %p206
      %p385 = pneg %p237
      %p386 = pneg %p234
      %s387 = smul.u32 8, %s23
      %p388 = scmp.lt.s32.totalorder %s22, 1
      %s389 = scalar_select %p388, %s22, 1
      %p390 = scmp.lt.s32.totalorder %s387, 15
      %s391 = scalar_select %p390, %s387, 15
      %s392 = smul.addr %s391, 2
      %s393 = smul.addr %s389, 32
      %s394 = sadd.s32 %s392, %s393
      %s395 = smul.addr %s394, 8
      %s396 = scalar_lea.vmem %s7, %s395
      %s397 = smul.u32 8, %s23
      %p398 = scmp.lt.s32.totalorder %s22, 1
      %s399 = scalar_select %p398, %s22, 1
      %p400 = scmp.lt.s32.totalorder %s397, 15
      %s401 = scalar_select %p400, %s397, 15
      %s402 = smul.addr %s401, 2
      %s403 = smul.addr %s399, 32
      %s404 = sadd.s32 %s402, %s403
      %s405 = smul.addr %s404, 8
      %s406 = scalar_lea.vmem %s0, %s405
      %s407 = smul.u32 8, %s23
      %s408 = smul.u32 %s23, 4
      %s409 = ssub.s32 %s408, 1
      %p410 = scmp.gt.s32.totalorder %s409, 0
      %s411 = scalar_select %p410, %s409, 0
      %s412 = smul.u32 2, %s411
      %p413 = scmp.lt.s32.totalorder %s22, 1
      %s414 = scalar_select %p413, %s22, 1
      %p415 = scmp.lt.s32.totalorder %s412, 15
      %s416 = scalar_select %p415, %s412, 15
      %s417 = smul.addr %s416, 2
      %s418 = smul.addr %s414, 32
      %s419 = sadd.s32 %s417, %s418
      %s420 = smul.addr %s419, 8
      %s421 = scalar_lea.vmem %s1, %s420
      %s422 = smul.u32 %s23, 4
      %s423 = ssub.s32 %s422, 1
      %p424 = scmp.gt.s32.totalorder %s423, 0
      %s425 = scalar_select %p424, %s423, 0
      %s426 = smul.u32 2, %s425
      %s427 = sadd.s32 %s23, 1
      %s428 = smul.u32 %s427, 4
      %p429 = scmp.lt.s32.totalorder %s428, 7
      %s430 = scalar_select %p429, %s428, 7
      %s431 = smul.u32 2, %s430
      %p432 = scmp.lt.s32.totalorder %s22, 1
      %s433 = scalar_select %p432, %s22, 1
      %p434 = scmp.lt.s32.totalorder %s431, 15
      %s435 = scalar_select %p434, %s431, 15
      %s436 = smul.addr %s435, 2
      %s437 = smul.addr %s433, 32
      %s438 = sadd.s32 %s436, %s437
      %s439 = smul.addr %s438, 8
      %s440 = scalar_lea.vmem %s2, %s439
      %s441 = sadd.s32 %s23, 1
      %s442 = smul.u32 %s441, 4
      %p443 = scmp.lt.s32.totalorder %s442, 7
      %s444 = scalar_select %p443, %s442, 7
      %s445 = smul.u32 2, %s444
      %s446 = smul.u32 8, %s23
      %p447 = scmp.lt.s32.totalorder %s22, 1
      %s448 = scalar_select %p447, %s22, 1
      %p449 = scmp.lt.s32.totalorder %s446, 15
      %s450 = scalar_select %p449, %s446, 15
      %s451 = smul.addr %s450, 2
      %s452 = smul.addr %s448, 32
      %s453 = sadd.s32 %s451, %s452
      %s454 = smul.addr %s453, 8
      %s455 = scalar_lea.vmem %s7, %s454
      %s456 = smul.u32 8, %s23
      %vm457 = vcmask 24576
      %458 = vst.msk [vmem:[#allocation2] sm:$0x1] %vm457, 0.0
      %459 = vst.msk [vmem:[#allocation2 + $0x18] sm:$0x1] %vm457, 0.0
      %460 = vst.msk [vmem:[#allocation2 + $0x30] sm:$0x1] %vm457, 0.0
      %461 = vst.msk [vmem:[#allocation2 + $0x48] sm:$0x1] %vm457, 0.0
      %462 = vst.msk [vmem:[#allocation2 + $0x60] sm:$0x1] %vm457, 0.0
      %463 = vst.msk [vmem:[#allocation2 + $0x78] sm:$0x1] %vm457, 0.0
      %464 = vst.msk [vmem:[#allocation2 + $0x90] sm:$0x1] %vm457, 0.0
      %465 = vst.msk [vmem:[#allocation2 + $0xa8] sm:$0x1] %vm457, 0.0
      %466 = vst.msk [vmem:[#allocation2 + $0xc0] sm:$0x1] %vm457, 0.0
      %467 = vst.msk [vmem:[#allocation2 + $0xd8] sm:$0x1] %vm457, 0.0
      %468 = vst.msk [vmem:[#allocation2 + $0xf0] sm:$0x1] %vm457, 0.0
      %469 = vst.msk [vmem:[#allocation2 + $0x108] sm:$0x1] %vm457, 0.0
      %470 = vst.msk [vmem:[#allocation2 + $0x11] sm:$0x1] %vm457, 0.0
      %471 = vst.msk [vmem:[#allocation2 + $0x29] sm:$0x1] %vm457, 0.0
      %472 = vst.msk [vmem:[#allocation2 + $0x41] sm:$0x1] %vm457, 0.0
      %473 = vst.msk [vmem:[#allocation2 + $0x59] sm:$0x1] %vm457, 0.0
      %474 = vst.msk [vmem:[#allocation2 + $0x71] sm:$0x1] %vm457, 0.0
      %475 = vst.msk [vmem:[#allocation2 + $0x89] sm:$0x1] %vm457, 0.0
      %476 = vst.msk [vmem:[#allocation2 + $0xa1] sm:$0x1] %vm457, 0.0
      %477 = vst.msk [vmem:[#allocation2 + $0xb9] sm:$0x1] %vm457, 0.0
      %478 = vst.msk [vmem:[#allocation2 + $0xd1] sm:$0x1] %vm457, 0.0
      %479 = vst.msk [vmem:[#allocation2 + $0xe9] sm:$0x1] %vm457, 0.0
      %480 = vst.msk [vmem:[#allocation2 + $0x101] sm:$0x1] %vm457, 0.0
      %481 = vst.msk [vmem:[#allocation2 + $0x119] sm:$0x1] %vm457, 0.0
      %482 = vst.msk [vmem:[#allocation3] sm:$0x1] %vm457, 0.0
      %483 = vst.msk [vmem:[#allocation3 + $0x18] sm:$0x1] %vm457, 0.0
      %484 = vst.msk [vmem:[#allocation3 + $0x30] sm:$0x1] %vm457, 0.0
      %485 = vst.msk [vmem:[#allocation3 + $0x48] sm:$0x1] %vm457, 0.0
      %486 = vst.msk [vmem:[#allocation3 + $0x60] sm:$0x1] %vm457, 0.0
      %487 = vst.msk [vmem:[#allocation3 + $0x78] sm:$0x1] %vm457, 0.0
      %488 = vst.msk [vmem:[#allocation3 + $0x90] sm:$0x1] %vm457, 0.0
      %489 = vst.msk [vmem:[#allocation3 + $0xa8] sm:$0x1] %vm457, 0.0
      %490 = vst.msk [vmem:[#allocation3 + $0xc0] sm:$0x1] %vm457, 0.0
      %491 = vst.msk [vmem:[#allocation3 + $0xd8] sm:$0x1] %vm457, 0.0
      %492 = vst.msk [vmem:[#allocation3 + $0x11] sm:$0x1] %vm457, 0.0
      %493 = vst.msk [vmem:[#allocation3 + $0x29] sm:$0x1] %vm457, 0.0
      %494 = vst.msk [vmem:[#allocation3 + $0x41] sm:$0x1] %vm457, 0.0
      %495 = vst.msk [vmem:[#allocation3 + $0x59] sm:$0x1] %vm457, 0.0
      %496 = vst.msk [vmem:[#allocation3 + $0x71] sm:$0x1] %vm457, 0.0
      %497 = vst.msk [vmem:[#allocation3 + $0x89] sm:$0x1] %vm457, 0.0
      %498 = vst.msk [vmem:[#allocation3 + $0xa1] sm:$0x1] %vm457, 0.0
      %499 = vst.msk [vmem:[#allocation3 + $0xb9] sm:$0x1] %vm457, 0.0
      %500 = vst.msk [vmem:[#allocation3 + $0xd1] sm:$0x1] %vm457, 0.0
      %501 = vst.msk [vmem:[#allocation3 + $0xe9] sm:$0x1] %vm457, 0.0
      %v502 = vld [vmem:[%s406] sm:$0xff]
      %v503 = vld [vmem:[%s406 + $0x8] sm:$0xff]
      %v504 = vld [vmem:[%s406 + $0x10] sm:$0xff]
      %v505 = vld [vmem:[%s406 + $0x18] sm:$0xff]
      %v506 = vld [vmem:[%s406 + $0x20] sm:$0xff]
      %v507 = vld [vmem:[%s406 + $0x28] sm:$0xff]
      %v508 = vld [vmem:[%s406 + $0x30] sm:$0xff]
      %v509 = vld [vmem:[%s406 + $0x38] sm:$0xff]
      %v510 = vld [vmem:[%s406 + $0x40] sm:$0xff]
      %v511 = vld [vmem:[%s406 + $0x48] sm:$0xff]
      %v512 = vld [vmem:[%s406 + $0x50] sm:$0xff]
      %v513 = vld [vmem:[%s406 + $0x58] sm:$0xff]
      %v514 = vld [vmem:[%s406 + $0x60] sm:$0xff]
      %v515 = vld [vmem:[%s406 + $0x68] sm:$0xff]
      %v516 = vld [vmem:[%s406 + $0x70] sm:$0xff]
      %v517 = vld [vmem:[%s406 + $0x78] sm:$0xff]
      %s518 = scalar_lea.vmem [#allocation2], 48
      %vm519 = vcmask 31744
      %520 = vst.msk [vmem:[%s518 + $0x1] sm:$0xff] %vm519, %v502
      %521 = vst.msk [vmem:[%s518 + $0x9] sm:$0xff] %vm519, %v503
      %522 = vst.msk [vmem:[%s518 + $0x19] sm:$0xff] %vm519, %v504
      %523 = vst.msk [vmem:[%s518 + $0x21] sm:$0xff] %vm519, %v505
      %524 = vst.msk [vmem:[%s518 + $0x31] sm:$0xff] %vm519, %v506
      %525 = vst.msk [vmem:[%s518 + $0x39] sm:$0xff] %vm519, %v507
      %526 = vst.msk [vmem:[%s518 + $0x49] sm:$0xff] %vm519, %v508
      %527 = vst.msk [vmem:[%s518 + $0x51] sm:$0xff] %vm519, %v509
      %528 = vst.msk [vmem:[%s518 + $0x61] sm:$0xff] %vm519, %v510
      %529 = vst.msk [vmem:[%s518 + $0x69] sm:$0xff] %vm519, %v511
      %530 = vst.msk [vmem:[%s518 + $0x79] sm:$0xff] %vm519, %v512
      %531 = vst.msk [vmem:[%s518 + $0x81] sm:$0xff] %vm519, %v513
      %532 = vst.msk [vmem:[%s518 + $0x91] sm:$0xff] %vm519, %v514
      %533 = vst.msk [vmem:[%s518 + $0x99] sm:$0xff] %vm519, %v515
      %534 = vst.msk [vmem:[%s518 + $0xa9] sm:$0xff] %vm519, %v516
      %535 = vst.msk [vmem:[%s518 + $0xb1] sm:$0xff] %vm519, %v517
      %p536 = scmp.gt.s32.totalorder %s23, 0
      // Predicated region
      $region49: #{tpu_custom_call.1} parent=47 // pred_check
        %p537 = pneg %p536
      $region50: #{tpu_custom_call.1} parent=47 // pred_check_branch
        %539 = sbr.rel (%p537) target = $region52
      $region51: #{tpu_custom_call.1} parent=47 // pred_region
        %v540 = vld [vmem:[%s421] sm:$0xff]
        %v541 = vld [vmem:[%s421 + $0x8] sm:$0xff]
        %v542 = vld [vmem:[%s421 + $0x10] sm:$0xff]
        %v543 = vld [vmem:[%s421 + $0x18] sm:$0xff]
        %544 = vst.msk [vmem:[#allocation2 + $0x1] sm:$0xff] %vm519, %v540
        %545 = vst.msk [vmem:[#allocation2 + $0x9] sm:$0xff] %vm519, %v541
        %546 = vst.msk [vmem:[#allocation2 + $0x19] sm:$0xff] %vm519, %v542
        %547 = vst.msk [vmem:[#allocation2 + $0x21] sm:$0xff] %vm519, %v543
      $region52: #{tpu_custom_call.1} parent=47 // pred_fallthru
        _
      %p548 = scmp.eq.s32.totalorder %s23, 0
      // Predicated region
      $region53: #{tpu_custom_call.1} parent=47 // pred_check
        %p549 = pneg %p548
      $region54: #{tpu_custom_call.1} parent=47 // pred_check_branch
        %551 = sbr.rel (%p549) target = $region56
      $region55: #{tpu_custom_call.1} parent=47 // pred_region
        %552 = vst.msk [vmem:[#allocation2 + $0x1] sm:$0xff] %vm519, 0.0
        %553 = vst.msk [vmem:[#allocation2 + $0x9] sm:$0xff] %vm519, 0.0
        %554 = vst.msk [vmem:[#allocation2 + $0x19] sm:$0xff] %vm519, 0.0
        %555 = vst.msk [vmem:[#allocation2 + $0x21] sm:$0xff] %vm519, 0.0
      $region56: #{tpu_custom_call.1} parent=47 // pred_fallthru
        _
      %p556 = scmp.lt.s32.totalorder %s23, 1
      // Predicated region
      $region57: #{tpu_custom_call.1} parent=47 // pred_check
        %p557 = pneg %p556
      $region58: #{tpu_custom_call.1} parent=47 // pred_check_branch
        %559 = sbr.rel (%p557) target = $region60
      $region59: #{tpu_custom_call.1} parent=47 // pred_region
        %v560 = vld [vmem:[%s440] sm:$0xff]
        %v561 = vld [vmem:[%s440 + $0x8] sm:$0xff]
        %v562 = vld [vmem:[%s440 + $0x10] sm:$0xff]
        %v563 = vld [vmem:[%s440 + $0x18] sm:$0xff]
        %s564 = scalar_lea.vmem [#allocation2], 240
        %565 = vst.msk [vmem:[%s564 + $0x1] sm:$0xff] %vm519, %v560
        %566 = vst.msk [vmem:[%s564 + $0x9] sm:$0xff] %vm519, %v561
        %567 = vst.msk [vmem:[%s564 + $0x19] sm:$0xff] %vm519, %v562
        %568 = vst.msk [vmem:[%s564 + $0x21] sm:$0xff] %vm519, %v563
      $region60: #{tpu_custom_call.1} parent=47 // pred_fallthru
        _
      %p569 = scmp.eq.s32.totalorder %s23, 1
      // Predicated region
      $region61: #{tpu_custom_call.1} parent=47 // pred_check
        %p570 = pneg %p569
      $region62: #{tpu_custom_call.1} parent=47 // pred_check_branch
        %572 = sbr.rel (%p570) target = $region64
      $region63: #{tpu_custom_call.1} parent=47 // pred_region
        %s573 = scalar_lea.vmem [#allocation2], 240
        %574 = vst.msk [vmem:[%s573 + $0x1] sm:$0xff] %vm519, 0.0
        %575 = vst.msk [vmem:[%s573 + $0x9] sm:$0xff] %vm519, 0.0
        %576 = vst.msk [vmem:[%s573 + $0x19] sm:$0xff] %vm519, 0.0
        %577 = vst.msk [vmem:[%s573 + $0x21] sm:$0xff] %vm519, 0.0
      $region64: #{tpu_custom_call.1} parent=47 // pred_fallthru
        _
      %v578 = vld [vmem:[%s4] sm:$0x1]
      %v580 = vlaneseq
      %v581 = vshrl.u32 %v580, 7
      %v582 = vsub.s32 0, %v581
      %v583 = vrot.slane %v578, %v582
      %v585 = vld [vmem:[#allocation2] sm:$0xff]
      %v586 = vld [vmem:[#allocation2 + $0x8] sm:$0xff]
      %v587 = vld [vmem:[#allocation2 + $0x18] sm:$0xff]
      %v588 = vld [vmem:[#allocation2 + $0x20] sm:$0xff]
      %v589 = vld [vmem:[#allocation2 + $0x30] sm:$0xff]
      %v590 = vld [vmem:[#allocation2 + $0x38] sm:$0xff]
      %v591 = vld [vmem:[#allocation2 + $0x48] sm:$0xff]
      %v592 = vld [vmem:[#allocation2 + $0x50] sm:$0xff]
      %v593 = vld [vmem:[#allocation2 + $0x60] sm:$0xff]
      %v594 = vld [vmem:[#allocation2 + $0x68] sm:$0xff]
      %v595 = vld [vmem:[#allocation2 + $0x78] sm:$0xff]
      %v596 = vld [vmem:[#allocation2 + $0x80] sm:$0xff]
      %v597 = vld [vmem:[#allocation2 + $0x90] sm:$0xff]
      %v598 = vld [vmem:[#allocation2 + $0x98] sm:$0xff]
      %v599 = vld [vmem:[#allocation2 + $0xa8] sm:$0xff]
      %v600 = vld [vmem:[#allocation2 + $0xb0] sm:$0xff]
      %v601 = vld [vmem:[#allocation2 + $0xc0] sm:$0xff]
      %v602 = vld [vmem:[#allocation2 + $0xc8] sm:$0xff]
      %v603 = vld [vmem:[#allocation2 + $0xd8] sm:$0xff]
      %v604 = vld [vmem:[#allocation2 + $0xe0] sm:$0xff]
      %v605 = vld [vmem:[%s3] sm:$0xf]
      %v607 = vsel %vm519, %v585, 0
      %v610 = vsel %vm519, %v586, 0
      %v613 = vsel %vm519, %v587, 0
      %v616 = vsel %vm519, %v588, 0
      %v619 = vsel %vm519, %v589, 0
      %v622 = vsel %vm519, %v590, 0
      %v625 = vsel %vm519, %v591, 0
      %v628 = vsel %vm519, %v592, 0
      %v631 = vsel %vm519, %v593, 0
      %v634 = vsel %vm519, %v594, 0
      %v637 = vsel %vm519, %v595, 0
      %v640 = vsel %vm519, %v596, 0
      %v643 = vsel %vm519, %v597, 0
      %v646 = vsel %vm519, %v598, 0
      %v649 = vsel %vm519, %v599, 0
      %v652 = vsel %vm519, %v600, 0
      %v655 = vsel %vm519, %v601, 0
      %v658 = vsel %vm519, %v602, 0
      %v661 = vsel %vm519, %v603, 0
      %v664 = vsel %vm519, %v604, 0
      %vm666 = vcmask 1043456
      %v668 = vsel %vm666, %v605, 0
      %670 = vmatprep.subr.mxu0 0.0
      %671 = vmatpush1.msra.mxu0 0.0
      %672 = vmatprep.subr.mxu0 0.0
      %673 = vmatpush1.msra.mxu0 0.0
      %674 = vmatprep.subr.mxu0 0.0
      %675 = vmatpush1.msra.mxu0 0.0
      %676 = vmatprep.subr.mxu0 0.0
      %677 = vmatpush1.msra.mxu0 0.0
      %678 = vmatprep.subr.mxu0 0.0
      %679 = vmatpush1.msra.mxu0 0.0
      %680 = vmatprep.subr.mxu0 0.0
      %681 = vmatpush1.msra.mxu0 0.0
      %682 = vmatprep.subr.mxu0 0.0
      %683 = vmatpush1.msra.mxu0 0.0
      %684 = vmatprep.subr.mxu0 0.0
      %685 = vmatpush1.msra.mxu0 0.0
      %686 = vmatprep.subr.mxu0 0.0
      %687 = vmatpush1.msra.mxu0 0.0
      %688 = vmatprep.subr.mxu0 0.0
      %689 = vmatpush1.msra.mxu0 0.0
      %690 = vmatprep.subr.mxu0 0.0
      %691 = vmatpush1.msra.mxu0 0.0
      %692 = vmatprep.subr.mxu0 0.0
      %693 = vmatpush1.msra.mxu0 0.0
      %694 = vmatprep.subr.mxu0 0.0
      %695 = vmatpush1.msra.mxu0 0.0
      %696 = vmatprep.subr.mxu0 0.0
      %697 = vmatpush1.msra.mxu0 0.0
      %698 = vmatprep.subr.mxu0 0.0
      %699 = vmatpush1.msra.mxu0 0.0
      %700 = vmatprep.subr.mxu0 0.0
      %701 = vmatpush1.msra.mxu0 %v668
      %702 = vmatprep.subr.mxu0 0.0
      %703 = vmatpush2.msra.mxu0 0.0
      %704 = vmatprep.subr.mxu0 0.0
      %705 = vmatpush2.msra.mxu0 0.0
      %706 = vmatprep.subr.mxu0 0.0
      %707 = vmatpush2.msra.mxu0 0.0
      %708 = vmatprep.subr.mxu0 0.0
      %709 = vmatpush2.msra.mxu0 0.0
      %710 = vmatprep.subr.mxu0 0.0
      %711 = vmatpush2.msra.mxu0 0.0
      %712 = vmatprep.subr.mxu0 0.0
      %713 = vmatpush2.msra.mxu0 0.0
      %714 = vmatprep.subr.mxu0 0.0
      %715 = vmatpush2.msra.mxu0 0.0
      %716 = vmatprep.subr.mxu0 0.0
      %717 = vmatpush2.msra.mxu0 0.0
      %718 = vmatprep.subr.mxu0 0.0
      %719 = vmatpush2.msra.mxu0 0.0
      %720 = vmatprep.subr.mxu0 0.0
      %721 = vmatpush2.msra.mxu0 0.0
      %722 = vmatprep.subr.mxu0 0.0
      %723 = vmatpush2.msra.mxu0 0.0
      %724 = vmatprep.subr.mxu0 0.0
      %725 = vmatpush2.msra.mxu0 0.0
      %726 = vmatprep.subr.mxu0 0.0
      %727 = vmatpush2.msra.mxu0 0.0
      %728 = vmatprep.subr.mxu0 0.0
      %729 = vmatpush2.msra.mxu0 0.0
      %730 = vmatprep.subr.mxu0 0.0
      %731 = vmatpush2.msra.mxu0 0.0
      %732 = vmatprep.subr.mxu0 0.0
      %733 = vmatpush2.msra.mxu0 0.0
      %734 = vmatprep.mubr.f32.mxu0 0.0
      %735 = vmatmul.mubr.f32.gmra.mxu0 %v607
      %v736 = vpop.f32.mrf.mxu0
      %v737 = vadd.f32 0.0, %v736
      %v738 = vpop.f32.mrf.mxu0
      %739 = vmatprep.mubr.f32.mxu0 0.0
      %740 = vmatmul.mubr.f32.gmra.mxu0 %v610
      %v741 = vpop.f32.mrf.mxu0
      %v742 = vadd.f32 0.0, %v741
      %v743 = vpop.f32.mrf.mxu0
      %744 = vmatprep.mubr.f32.mxu0 0.0
      %745 = vmatmul.mubr.f32.gmra.mxu0 %v613
      %v746 = vpop.f32.mrf.mxu0
      %v747 = vadd.f32 0.0, %v746
      %v748 = vpop.f32.mrf.mxu0
      %749 = vmatprep.mubr.f32.mxu0 0.0
      %750 = vmatmul.mubr.f32.gmra.mxu0 %v616
      %v751 = vpop.f32.mrf.mxu0
      %v752 = vadd.f32 0.0, %v751
      %v753 = vpop.f32.mrf.mxu0
      %754 = vmatprep.mubr.f32.mxu0 0.0
      %755 = vmatmul.mubr.f32.gmra.mxu0 %v619
      %v756 = vpop.f32.mrf.mxu0
      %v757 = vadd.f32 0.0, %v756
      %v758 = vpop.f32.mrf.mxu0
      %759 = vmatprep.mubr.f32.mxu0 0.0
      %760 = vmatmul.mubr.f32.gmra.mxu0 %v622
      %v761 = vpop.f32.mrf.mxu0
      %v762 = vadd.f32 0.0, %v761
      %v763 = vpop.f32.mrf.mxu0
      %764 = vmatprep.mubr.f32.mxu0 0.0
      %765 = vmatmul.mubr.f32.gmra.mxu0 %v625
      %v766 = vpop.f32.mrf.mxu0
      %v767 = vadd.f32 0.0, %v766
      %v768 = vpop.f32.mrf.mxu0
      %769 = vmatprep.mubr.f32.mxu0 0.0
      %770 = vmatmul.mubr.f32.gmra.mxu0 %v628
      %v771 = vpop.f32.mrf.mxu0
      %v772 = vadd.f32 0.0, %v771
      %v773 = vpop.f32.mrf.mxu0
      %774 = vmatprep.mubr.f32.mxu0 0.0
      %775 = vmatmul.mubr.f32.gmra.mxu0 %v631
      %v776 = vpop.f32.mrf.mxu0
      %v777 = vadd.f32 0.0, %v776
      %v778 = vpop.f32.mrf.mxu0
      %779 = vmatprep.mubr.f32.mxu0 0.0
      %780 = vmatmul.mubr.f32.gmra.mxu0 %v634
      %v781 = vpop.f32.mrf.mxu0
      %v782 = vadd.f32 0.0, %v781
      %v783 = vpop.f32.mrf.mxu0
      %784 = vmatprep.mubr.f32.mxu0 0.0
      %785 = vmatmul.mubr.f32.gmra.mxu0 %v637
      %v786 = vpop.f32.mrf.mxu0
      %v787 = vadd.f32 0.0, %v786
      %v788 = vpop.f32.mrf.mxu0
      %789 = vmatprep.mubr.f32.mxu0 0.0
      %790 = vmatmul.mubr.f32.gmra.mxu0 %v640
      %v791 = vpop.f32.mrf.mxu0
      %v792 = vadd.f32 0.0, %v791
      %v793 = vpop.f32.mrf.mxu0
      %794 = vmatprep.mubr.f32.mxu0 0.0
      %795 = vmatmul.mubr.f32.gmra.mxu0 %v643
      %v796 = vpop.f32.mrf.mxu0
      %v797 = vadd.f32 0.0, %v796
      %v798 = vpop.f32.mrf.mxu0
      %799 = vmatprep.mubr.f32.mxu0 0.0
      %800 = vmatmul.mubr.f32.gmra.mxu0 %v646
      %v801 = vpop.f32.mrf.mxu0
      %v802 = vadd.f32 0.0, %v801
      %v803 = vpop.f32.mrf.mxu0
      %804 = vmatprep.mubr.f32.mxu0 0.0
      %805 = vmatmul.mubr.f32.gmra.mxu0 %v649
      %v806 = vpop.f32.mrf.mxu0
      %v807 = vadd.f32 0.0, %v806
      %v808 = vpop.f32.mrf.mxu0
      %809 = vmatprep.mubr.f32.mxu0 0.0
      %810 = vmatmul.mubr.f32.gmra.mxu0 %v652
      %v811 = vpop.f32.mrf.mxu0
      %v812 = vadd.f32 0.0, %v811
      %v813 = vpop.f32.mrf.mxu0
      %814 = vmatprep.mubr.f32.mxu0 0.0
      %815 = vmatmul.mubr.f32.gmra.mxu0 %v655
      %v816 = vpop.f32.mrf.mxu0
      %v817 = vadd.f32 0.0, %v816
      %v818 = vpop.f32.mrf.mxu0
      %819 = vmatprep.mubr.f32.mxu0 0.0
      %820 = vmatmul.mubr.f32.gmra.mxu0 %v658
      %v821 = vpop.f32.mrf.mxu0
      %v822 = vadd.f32 0.0, %v821
      %v823 = vpop.f32.mrf.mxu0
      %824 = vmatprep.mubr.f32.mxu0 0.0
      %825 = vmatmul.mubr.f32.gmra.mxu0 %v661
      %v826 = vpop.f32.mrf.mxu0
      %v827 = vadd.f32 0.0, %v826
      %v828 = vpop.f32.mrf.mxu0
      %829 = vmatprep.mubr.f32.mxu0 0.0
      %830 = vmatmul.mubr.f32.gmra.mxu0 %v664
      %v831 = vpop.f32.mrf.mxu0
      %v832 = vadd.f32 0.0, %v831
      %v833 = vpop.f32.mrf.mxu0
      %834 = vdwg.mxu0
      %v835 = vadd.f32 %v583, %v737
      %v836 = vadd.f32 %v583, %v742
      %v837 = vadd.f32 %v583, %v747
      %v838 = vadd.f32 %v583, %v752
      %v839 = vadd.f32 %v583, %v757
      %v840 = vadd.f32 %v583, %v762
      %v841 = vadd.f32 %v583, %v767
      %v842 = vadd.f32 %v583, %v772
      %v843 = vadd.f32 %v583, %v777
      %v844 = vadd.f32 %v583, %v782
      %v845 = vadd.f32 %v583, %v787
      %v846 = vadd.f32 %v583, %v792
      %v847 = vadd.f32 %v583, %v797
      %v848 = vadd.f32 %v583, %v802
      %v849 = vadd.f32 %v583, %v807
      %v850 = vadd.f32 %v583, %v812
      %v851 = vadd.f32 %v583, %v817
      %v852 = vadd.f32 %v583, %v822
      %v853 = vadd.f32 %v583, %v827
      %v854 = vadd.f32 %v583, %v832
      %v855 = vld [vmem:[#allocation2 + $0x1] sm:$0xff]
      %v856 = vld [vmem:[#allocation2 + $0x9] sm:$0xff]
      %v857 = vld [vmem:[#allocation2 + $0x19] sm:$0xff]
      %v858 = vld [vmem:[#allocation2 + $0x21] sm:$0xff]
      %v859 = vld [vmem:[#allocation2 + $0x31] sm:$0xff]
      %v860 = vld [vmem:[#allocation2 + $0x39] sm:$0xff]
      %v861 = vld [vmem:[#allocation2 + $0x49] sm:$0xff]
      %v862 = vld [vmem:[#allocation2 + $0x51] sm:$0xff]
      %v863 = vld [vmem:[#allocation2 + $0x61] sm:$0xff]
      %v864 = vld [vmem:[#allocation2 + $0x69] sm:$0xff]
      %v865 = vld [vmem:[#allocation2 + $0x79] sm:$0xff]
      %v866 = vld [vmem:[#allocation2 + $0x81] sm:$0xff]
      %v867 = vld [vmem:[#allocation2 + $0x91] sm:$0xff]
      %v868 = vld [vmem:[#allocation2 + $0x99] sm:$0xff]
      %v869 = vld [vmem:[#allocation2 + $0xa9] sm:$0xff]
      %v870 = vld [vmem:[#allocation2 + $0xb1] sm:$0xff]
      %v871 = vld [vmem:[#allocation2 + $0xc1] sm:$0xff]
      %v872 = vld [vmem:[#allocation2 + $0xc9] sm:$0xff]
      %v873 = vld [vmem:[#allocation2 + $0xd9] sm:$0xff]
      %v874 = vld [vmem:[#allocation2 + $0xe1] sm:$0xff]
      %s875 = scalar_lea.vmem %s3, 4
      %v876 = vld [vmem:[%s875] sm:$0xf]
      %v878 = vsel %vm519, %v855, 0
      %v881 = vsel %vm519, %v856, 0
      %v884 = vsel %vm519, %v857, 0
      %v887 = vsel %vm519, %v858, 0
      %v890 = vsel %vm519, %v859, 0
      %v893 = vsel %vm519, %v860, 0
      %v896 = vsel %vm519, %v861, 0
      %v899 = vsel %vm519, %v862, 0
      %v902 = vsel %vm519, %v863, 0
      %v905 = vsel %vm519, %v864, 0
      %v908 = vsel %vm519, %v865, 0
      %v911 = vsel %vm519, %v866, 0
      %v914 = vsel %vm519, %v867, 0
      %v917 = vsel %vm519, %v868, 0
      %v920 = vsel %vm519, %v869, 0
      %v923 = vsel %vm519, %v870, 0
      %v926 = vsel %vm519, %v871, 0
      %v929 = vsel %vm519, %v872, 0
      %v932 = vsel %vm519, %v873, 0
      %v935 = vsel %vm519, %v874, 0
      %v938 = vsel %vm666, %v876, 0
      %940 = vmatprep.subr.mxu0 0.0
      %941 = vmatpush1.msra.mxu0 0.0
      %942 = vmatprep.subr.mxu0 0.0
      %943 = vmatpush1.msra.mxu0 0.0
      %944 = vmatprep.subr.mxu0 0.0
      %945 = vmatpush1.msra.mxu0 0.0
      %946 = vmatprep.subr.mxu0 0.0
      %947 = vmatpush1.msra.mxu0 0.0
      %948 = vmatprep.subr.mxu0 0.0
      %949 = vmatpush1.msra.mxu0 0.0
      %950 = vmatprep.subr.mxu0 0.0
      %951 = vmatpush1.msra.mxu0 0.0
      %952 = vmatprep.subr.mxu0 0.0
      %953 = vmatpush1.msra.mxu0 0.0
      %954 = vmatprep.subr.mxu0 0.0
      %955 = vmatpush1.msra.mxu0 0.0
      %956 = vmatprep.subr.mxu0 0.0
      %957 = vmatpush1.msra.mxu0 0.0
      %958 = vmatprep.subr.mxu0 0.0
      %959 = vmatpush1.msra.mxu0 0.0
      %960 = vmatprep.subr.mxu0 0.0
      %961 = vmatpush1.msra.mxu0 0.0
      %962 = vmatprep.subr.mxu0 0.0
      %963 = vmatpush1.msra.mxu0 0.0
      %964 = vmatprep.subr.mxu0 0.0
      %965 = vmatpush1.msra.mxu0 0.0
      %966 = vmatprep.subr.mxu0 0.0
      %967 = vmatpush1.msra.mxu0 0.0
      %968 = vmatprep.subr.mxu0 0.0
      %969 = vmatpush1.msra.mxu0 0.0
      %970 = vmatprep.subr.mxu0 0.0
      %971 = vmatpush1.msra.mxu0 %v938
      %972 = vmatprep.subr.mxu0 0.0
      %973 = vmatpush2.msra.mxu0 0.0
      %974 = vmatprep.subr.mxu0 0.0
      %975 = vmatpush2.msra.mxu0 0.0
      %976 = vmatprep.subr.mxu0 0.0
      %977 = vmatpush2.msra.mxu0 0.0
      %978 = vmatprep.subr.mxu0 0.0
      %979 = vmatpush2.msra.mxu0 0.0
      %980 = vmatprep.subr.mxu0 0.0
      %981 = vmatpush2.msra.mxu0 0.0
      %982 = vmatprep.subr.mxu0 0.0
      %983 = vmatpush2.msra.mxu0 0.0
      %984 = vmatprep.subr.mxu0 0.0
      %985 = vmatpush2.msra.mxu0 0.0
      %986 = vmatprep.subr.mxu0 0.0
      %987 = vmatpush2.msra.mxu0 0.0
      %988 = vmatprep.subr.mxu0 0.0
      %989 = vmatpush2.msra.mxu0 0.0
      %990 = vmatprep.subr.mxu0 0.0
      %991 = vmatpush2.msra.mxu0 0.0
      %992 = vmatprep.subr.mxu0 0.0
      %993 = vmatpush2.msra.mxu0 0.0
      %994 = vmatprep.subr.mxu0 0.0
      %995 = vmatpush2.msra.mxu0 0.0
      %996 = vmatprep.subr.mxu0 0.0
      %997 = vmatpush2.msra.mxu0 0.0
      %998 = vmatprep.subr.mxu0 0.0
      %999 = vmatpush2.msra.mxu0 0.0
      %1000 = vmatprep.subr.mxu0 0.0
      %1001 = vmatpush2.msra.mxu0 0.0
      %1002 = vmatprep.subr.mxu0 0.0
      %1003 = vmatpush2.msra.mxu0 0.0
      %1004 = vmatprep.mubr.f32.mxu0 0.0
      %1005 = vmatmul.mubr.f32.gmra.mxu0 %v878
      %v1006 = vpop.f32.mrf.mxu0
      %v1007 = vadd.f32 0.0, %v1006
      %v1008 = vpop.f32.mrf.mxu0
      %1009 = vmatprep.mubr.f32.mxu0 0.0
      %1010 = vmatmul.mubr.f32.gmra.mxu0 %v881
      %v1011 = vpop.f32.mrf.mxu0
      %v1012 = vadd.f32 0.0, %v1011
      %v1013 = vpop.f32.mrf.mxu0
      %1014 = vmatprep.mubr.f32.mxu0 0.0
      %1015 = vmatmul.mubr.f32.gmra.mxu0 %v884
      %v1016 = vpop.f32.mrf.mxu0
      %v1017 = vadd.f32 0.0, %v1016
      %v1018 = vpop.f32.mrf.mxu0
      %1019 = vmatprep.mubr.f32.mxu0 0.0
      %1020 = vmatmul.mubr.f32.gmra.mxu0 %v887
      %v1021 = vpop.f32.mrf.mxu0
      %v1022 = vadd.f32 0.0, %v1021
      %v1023 = vpop.f32.mrf.mxu0
      %1024 = vmatprep.mubr.f32.mxu0 0.0
      %1025 = vmatmul.mubr.f32.gmra.mxu0 %v890
      %v1026 = vpop.f32.mrf.mxu0
      %v1027 = vadd.f32 0.0, %v1026
      %v1028 = vpop.f32.mrf.mxu0
      %1029 = vmatprep.mubr.f32.mxu0 0.0
      %1030 = vmatmul.mubr.f32.gmra.mxu0 %v893
      %v1031 = vpop.f32.mrf.mxu0
      %v1032 = vadd.f32 0.0, %v1031
      %v1033 = vpop.f32.mrf.mxu0
      %1034 = vmatprep.mubr.f32.mxu0 0.0
      %1035 = vmatmul.mubr.f32.gmra.mxu0 %v896
      %v1036 = vpop.f32.mrf.mxu0
      %v1037 = vadd.f32 0.0, %v1036
      %v1038 = vpop.f32.mrf.mxu0
      %1039 = vmatprep.mubr.f32.mxu0 0.0
      %1040 = vmatmul.mubr.f32.gmra.mxu0 %v899
      %v1041 = vpop.f32.mrf.mxu0
      %v1042 = vadd.f32 0.0, %v1041
      %v1043 = vpop.f32.mrf.mxu0
      %1044 = vmatprep.mubr.f32.mxu0 0.0
      %1045 = vmatmul.mubr.f32.gmra.mxu0 %v902
      %v1046 = vpop.f32.mrf.mxu0
      %v1047 = vadd.f32 0.0, %v1046
      %v1048 = vpop.f32.mrf.mxu0
      %1049 = vmatprep.mubr.f32.mxu0 0.0
      %1050 = vmatmul.mubr.f32.gmra.mxu0 %v905
      %v1051 = vpop.f32.mrf.mxu0
      %v1052 = vadd.f32 0.0, %v1051
      %v1053 = vpop.f32.mrf.mxu0
      %1054 = vmatprep.mubr.f32.mxu0 0.0
      %1055 = vmatmul.mubr.f32.gmra.mxu0 %v908
      %v1056 = vpop.f32.mrf.mxu0
      %v1057 = vadd.f32 0.0, %v1056
      %v1058 = vpop.f32.mrf.mxu0
      %1059 = vmatprep.mubr.f32.mxu0 0.0
      %1060 = vmatmul.mubr.f32.gmra.mxu0 %v911
      %v1061 = vpop.f32.mrf.mxu0
      %v1062 = vadd.f32 0.0, %v1061
      %v1063 = vpop.f32.mrf.mxu0
      %1064 = vmatprep.mubr.f32.mxu0 0.0
      %1065 = vmatmul.mubr.f32.gmra.mxu0 %v914
      %v1066 = vpop.f32.mrf.mxu0
      %v1067 = vadd.f32 0.0, %v1066
      %v1068 = vpop.f32.mrf.mxu0
      %1069 = vmatprep.mubr.f32.mxu0 0.0
      %1070 = vmatmul.mubr.f32.gmra.mxu0 %v917
      %v1071 = vpop.f32.mrf.mxu0
      %v1072 = vadd.f32 0.0, %v1071
      %v1073 = vpop.f32.mrf.mxu0
      %1074 = vmatprep.mubr.f32.mxu0 0.0
      %1075 = vmatmul.mubr.f32.gmra.mxu0 %v920
      %v1076 = vpop.f32.mrf.mxu0
      %v1077 = vadd.f32 0.0, %v1076
      %v1078 = vpop.f32.mrf.mxu0
      %1079 = vmatprep.mubr.f32.mxu0 0.0
      %1080 = vmatmul.mubr.f32.gmra.mxu0 %v923
      %v1081 = vpop.f32.mrf.mxu0
      %v1082 = vadd.f32 0.0, %v1081
      %v1083 = vpop.f32.mrf.mxu0
      %1084 = vmatprep.mubr.f32.mxu0 0.0
      %1085 = vmatmul.mubr.f32.gmra.mxu0 %v926
      %v1086 = vpop.f32.mrf.mxu0
      %v1087 = vadd.f32 0.0, %v1086
      %v1088 = vpop.f32.mrf.mxu0
      %1089 = vmatprep.mubr.f32.mxu0 0.0
      %1090 = vmatmul.mubr.f32.gmra.mxu0 %v929
      %v1091 = vpop.f32.mrf.mxu0
      %v1092 = vadd.f32 0.0, %v1091
      %v1093 = vpop.f32.mrf.mxu0
      %1094 = vmatprep.mubr.f32.mxu0 0.0
      %1095 = vmatmul.mubr.f32.gmra.mxu0 %v932
      %v1096 = vpop.f32.mrf.mxu0
      %v1097 = vadd.f32 0.0, %v1096
      %v1098 = vpop.f32.mrf.mxu0
      %1099 = vmatprep.mubr.f32.mxu0 0.0
      %1100 = vmatmul.mubr.f32.gmra.mxu0 %v935
      %v1101 = vpop.f32.mrf.mxu0
      %v1102 = vadd.f32 0.0, %v1101
      %v1103 = vpop.f32.mrf.mxu0
      %1104 = vdwg.mxu0
      %v1105 = vadd.f32 %v835, %v1007
      %v1106 = vadd.f32 %v836, %v1012
      %v1107 = vadd.f32 %v837, %v1017
      %v1108 = vadd.f32 %v838, %v1022
      %v1109 = vadd.f32 %v839, %v1027
      %v1110 = vadd.f32 %v840, %v1032
      %v1111 = vadd.f32 %v841, %v1037
      %v1112 = vadd.f32 %v842, %v1042
      %v1113 = vadd.f32 %v843, %v1047
      %v1114 = vadd.f32 %v844, %v1052
      %v1115 = vadd.f32 %v845, %v1057
      %v1116 = vadd.f32 %v846, %v1062
      %v1117 = vadd.f32 %v847, %v1067
      %v1118 = vadd.f32 %v848, %v1072
      %v1119 = vadd.f32 %v849, %v1077
      %v1120 = vadd.f32 %v850, %v1082
      %v1121 = vadd.f32 %v851, %v1087
      %v1122 = vadd.f32 %v852, %v1092
      %v1123 = vadd.f32 %v853, %v1097
      %v1124 = vadd.f32 %v854, %v1102
      %v1125 = vld [vmem:[#allocation2 + $0x2] sm:$0xff]
      %v1126 = vld [vmem:[#allocation2 + $0xa] sm:$0xff]
      %v1127 = vld [vmem:[#allocation2 + $0x1a] sm:$0xff]
      %v1128 = vld [vmem:[#allocation2 + $0x22] sm:$0xff]
      %v1129 = vld [vmem:[#allocation2 + $0x32] sm:$0xff]
      %v1130 = vld [vmem:[#allocation2 + $0x3a] sm:$0xff]
      %v1131 = vld [vmem:[#allocation2 + $0x4a] sm:$0xff]
      %v1132 = vld [vmem:[#allocation2 + $0x52] sm:$0xff]
      %v1133 = vld [vmem:[#allocation2 + $0x62] sm:$0xff]
      %v1134 = vld [vmem:[#allocation2 + $0x6a] sm:$0xff]
      %v1135 = vld [vmem:[#allocation2 + $0x7a] sm:$0xff]
      %v1136 = vld [vmem:[#allocation2 + $0x82] sm:$0xff]
      %v1137 = vld [vmem:[#allocation2 + $0x92] sm:$0xff]
      %v1138 = vld [vmem:[#allocation2 + $0x9a] sm:$0xff]
      %v1139 = vld [vmem:[#allocation2 + $0xaa] sm:$0xff]
      %v1140 = vld [vmem:[#allocation2 + $0xb2] sm:$0xff]
      %v1141 = vld [vmem:[#allocation2 + $0xc2] sm:$0xff]
      %v1142 = vld [vmem:[#allocation2 + $0xca] sm:$0xff]
      %v1143 = vld [vmem:[#allocation2 + $0xda] sm:$0xff]
      %v1144 = vld [vmem:[#allocation2 + $0xe2] sm:$0xff]
      %s1145 = scalar_lea.vmem %s3, 8
      %v1146 = vld [vmem:[%s1145] sm:$0xf]
      %v1148 = vsel %vm519, %v1125, 0
      %v1151 = vsel %vm519, %v1126, 0
      %v1154 = vsel %vm519, %v1127, 0
      %v1157 = vsel %vm519, %v1128, 0
      %v1160 = vsel %vm519, %v1129, 0
      %v1163 = vsel %vm519, %v1130, 0
      %v1166 = vsel %vm519, %v1131, 0
      %v1169 = vsel %vm519, %v1132, 0
      %v1172 = vsel %vm519, %v1133, 0
      %v1175 = vsel %vm519, %v1134, 0
      %v1178 = vsel %vm519, %v1135, 0
      %v1181 = vsel %vm519, %v1136, 0
      %v1184 = vsel %vm519, %v1137, 0
      %v1187 = vsel %vm519, %v1138, 0
      %v1190 = vsel %vm519, %v1139, 0
      %v1193 = vsel %vm519, %v1140, 0
      %v1196 = vsel %vm519, %v1141, 0
      %v1199 = vsel %vm519, %v1142, 0
      %v1202 = vsel %vm519, %v1143, 0
      %v1205 = vsel %vm519, %v1144, 0
      %v1208 = vsel %vm666, %v1146, 0
      %1210 = vmatprep.subr.mxu0 0.0
      %1211 = vmatpush1.msra.mxu0 0.0
      %1212 = vmatprep.subr.mxu0 0.0
      %1213 = vmatpush1.msra.mxu0 0.0
      %1214 = vmatprep.subr.mxu0 0.0
      %1215 = vmatpush1.msra.mxu0 0.0
      %1216 = vmatprep.subr.mxu0 0.0
      %1217 = vmatpush1.msra.mxu0 0.0
      %1218 = vmatprep.subr.mxu0 0.0
      %1219 = vmatpush1.msra.mxu0 0.0
      %1220 = vmatprep.subr.mxu0 0.0
      %1221 = vmatpush1.msra.mxu0 0.0
      %1222 = vmatprep.subr.mxu0 0.0
      %1223 = vmatpush1.msra.mxu0 0.0
      %1224 = vmatprep.subr.mxu0 0.0
      %1225 = vmatpush1.msra.mxu0 0.0
      %1226 = vmatprep.subr.mxu0 0.0
      %1227 = vmatpush1.msra.mxu0 0.0
      %1228 = vmatprep.subr.mxu0 0.0
      %1229 = vmatpush1.msra.mxu0 0.0
      %1230 = vmatprep.subr.mxu0 0.0
      %1231 = vmatpush1.msra.mxu0 0.0
      %1232 = vmatprep.subr.mxu0 0.0
      %1233 = vmatpush1.msra.mxu0 0.0
      %1234 = vmatprep.subr.mxu0 0.0
      %1235 = vmatpush1.msra.mxu0 0.0
      %1236 = vmatprep.subr.mxu0 0.0
      %1237 = vmatpush1.msra.mxu0 0.0
      %1238 = vmatprep.subr.mxu0 0.0
      %1239 = vmatpush1.msra.mxu0 0.0
      %1240 = vmatprep.subr.mxu0 0.0
      %1241 = vmatpush1.msra.mxu0 %v1208
      %1242 = vmatprep.subr.mxu0 0.0
      %1243 = vmatpush2.msra.mxu0 0.0
      %1244 = vmatprep.subr.mxu0 0.0
      %1245 = vmatpush2.msra.mxu0 0.0
      %1246 = vmatprep.subr.mxu0 0.0
      %1247 = vmatpush2.msra.mxu0 0.0
      %1248 = vmatprep.subr.mxu0 0.0
      %1249 = vmatpush2.msra.mxu0 0.0
      %1250 = vmatprep.subr.mxu0 0.0
      %1251 = vmatpush2.msra.mxu0 0.0
      %1252 = vmatprep.subr.mxu0 0.0
      %1253 = vmatpush2.msra.mxu0 0.0
      %1254 = vmatprep.subr.mxu0 0.0
      %1255 = vmatpush2.msra.mxu0 0.0
      %1256 = vmatprep.subr.mxu0 0.0
      %1257 = vmatpush2.msra.mxu0 0.0
      %1258 = vmatprep.subr.mxu0 0.0
      %1259 = vmatpush2.msra.mxu0 0.0
      %1260 = vmatprep.subr.mxu0 0.0
      %1261 = vmatpush2.msra.mxu0 0.0
      %1262 = vmatprep.subr.mxu0 0.0
      %1263 = vmatpush2.msra.mxu0 0.0
      %1264 = vmatprep.subr.mxu0 0.0
      %1265 = vmatpush2.msra.mxu0 0.0
      %1266 = vmatprep.subr.mxu0 0.0
      %1267 = vmatpush2.msra.mxu0 0.0
      %1268 = vmatprep.subr.mxu0 0.0
      %1269 = vmatpush2.msra.mxu0 0.0
      %1270 = vmatprep.subr.mxu0 0.0
      %1271 = vmatpush2.msra.mxu0 0.0
      %1272 = vmatprep.subr.mxu0 0.0
      %1273 = vmatpush2.msra.mxu0 0.0
      %1274 = vmatprep.mubr.f32.mxu0 0.0
      %1275 = vmatmul.mubr.f32.gmra.mxu0 %v1148
      %v1276 = vpop.f32.mrf.mxu0
      %v1277 = vadd.f32 0.0, %v1276
      %v1278 = vpop.f32.mrf.mxu0
      %1279 = vmatprep.mubr.f32.mxu0 0.0
      %1280 = vmatmul.mubr.f32.gmra.mxu0 %v1151
      %v1281 = vpop.f32.mrf.mxu0
      %v1282 = vadd.f32 0.0, %v1281
      %v1283 = vpop.f32.mrf.mxu0
      %1284 = vmatprep.mubr.f32.mxu0 0.0
      %1285 = vmatmul.mubr.f32.gmra.mxu0 %v1154
      %v1286 = vpop.f32.mrf.mxu0
      %v1287 = vadd.f32 0.0, %v1286
      %v1288 = vpop.f32.mrf.mxu0
      %1289 = vmatprep.mubr.f32.mxu0 0.0
      %1290 = vmatmul.mubr.f32.gmra.mxu0 %v1157
      %v1291 = vpop.f32.mrf.mxu0
      %v1292 = vadd.f32 0.0, %v1291
      %v1293 = vpop.f32.mrf.mxu0
      %1294 = vmatprep.mubr.f32.mxu0 0.0
      %1295 = vmatmul.mubr.f32.gmra.mxu0 %v1160
      %v1296 = vpop.f32.mrf.mxu0
      %v1297 = vadd.f32 0.0, %v1296
      %v1298 = vpop.f32.mrf.mxu0
      %1299 = vmatprep.mubr.f32.mxu0 0.0
      %1300 = vmatmul.mubr.f32.gmra.mxu0 %v1163
      %v1301 = vpop.f32.mrf.mxu0
      %v1302 = vadd.f32 0.0, %v1301
      %v1303 = vpop.f32.mrf.mxu0
      %1304 = vmatprep.mubr.f32.mxu0 0.0
      %1305 = vmatmul.mubr.f32.gmra.mxu0 %v1166
      %v1306 = vpop.f32.mrf.mxu0
      %v1307 = vadd.f32 0.0, %v1306
      %v1308 = vpop.f32.mrf.mxu0
      %1309 = vmatprep.mubr.f32.mxu0 0.0
      %1310 = vmatmul.mubr.f32.gmra.mxu0 %v1169
      %v1311 = vpop.f32.mrf.mxu0
      %v1312 = vadd.f32 0.0, %v1311
      %v1313 = vpop.f32.mrf.mxu0
      %1314 = vmatprep.mubr.f32.mxu0 0.0
      %1315 = vmatmul.mubr.f32.gmra.mxu0 %v1172
      %v1316 = vpop.f32.mrf.mxu0
      %v1317 = vadd.f32 0.0, %v1316
      %v1318 = vpop.f32.mrf.mxu0
      %1319 = vmatprep.mubr.f32.mxu0 0.0
      %1320 = vmatmul.mubr.f32.gmra.mxu0 %v1175
      %v1321 = vpop.f32.mrf.mxu0
      %v1322 = vadd.f32 0.0, %v1321
      %v1323 = vpop.f32.mrf.mxu0
      %1324 = vmatprep.mubr.f32.mxu0 0.0
      %1325 = vmatmul.mubr.f32.gmra.mxu0 %v1178
      %v1326 = vpop.f32.mrf.mxu0
      %v1327 = vadd.f32 0.0, %v1326
      %v1328 = vpop.f32.mrf.mxu0
      %1329 = vmatprep.mubr.f32.mxu0 0.0
      %1330 = vmatmul.mubr.f32.gmra.mxu0 %v1181
      %v1331 = vpop.f32.mrf.mxu0
      %v1332 = vadd.f32 0.0, %v1331
      %v1333 = vpop.f32.mrf.mxu0
      %1334 = vmatprep.mubr.f32.mxu0 0.0
      %1335 = vmatmul.mubr.f32.gmra.mxu0 %v1184
      %v1336 = vpop.f32.mrf.mxu0
      %v1337 = vadd.f32 0.0, %v1336
      %v1338 = vpop.f32.mrf.mxu0
      %1339 = vmatprep.mubr.f32.mxu0 0.0
      %1340 = vmatmul.mubr.f32.gmra.mxu0 %v1187
      %v1341 = vpop.f32.mrf.mxu0
      %v1342 = vadd.f32 0.0, %v1341
      %v1343 = vpop.f32.mrf.mxu0
      %1344 = vmatprep.mubr.f32.mxu0 0.0
      %1345 = vmatmul.mubr.f32.gmra.mxu0 %v1190
      %v1346 = vpop.f32.mrf.mxu0
      %v1347 = vadd.f32 0.0, %v1346
      %v1348 = vpop.f32.mrf.mxu0
      %1349 = vmatprep.mubr.f32.mxu0 0.0
      %1350 = vmatmul.mubr.f32.gmra.mxu0 %v1193
      %v1351 = vpop.f32.mrf.mxu0
      %v1352 = vadd.f32 0.0, %v1351
      %v1353 = vpop.f32.mrf.mxu0
      %1354 = vmatprep.mubr.f32.mxu0 0.0
      %1355 = vmatmul.mubr.f32.gmra.mxu0 %v1196
      %v1356 = vpop.f32.mrf.mxu0
      %v1357 = vadd.f32 0.0, %v1356
      %v1358 = vpop.f32.mrf.mxu0
      %1359 = vmatprep.mubr.f32.mxu0 0.0
      %1360 = vmatmul.mubr.f32.gmra.mxu0 %v1199
      %v1361 = vpop.f32.mrf.mxu0
      %v1362 = vadd.f32 0.0, %v1361
      %v1363 = vpop.f32.mrf.mxu0
      %1364 = vmatprep.mubr.f32.mxu0 0.0
      %1365 = vmatmul.mubr.f32.gmra.mxu0 %v1202
      %v1366 = vpop.f32.mrf.mxu0
      %v1367 = vadd.f32 0.0, %v1366
      %v1368 = vpop.f32.mrf.mxu0
      %1369 = vmatprep.mubr.f32.mxu0 0.0
      %1370 = vmatmul.mubr.f32.gmra.mxu0 %v1205
      %v1371 = vpop.f32.mrf.mxu0
      %v1372 = vadd.f32 0.0, %v1371
      %v1373 = vpop.f32.mrf.mxu0
      %1374 = vdwg.mxu0
      %v1375 = vadd.f32 %v1105, %v1277
      %v1376 = vadd.f32 %v1106, %v1282
      %v1377 = vadd.f32 %v1107, %v1287
      %v1378 = vadd.f32 %v1108, %v1292
      %v1379 = vadd.f32 %v1109, %v1297
      %v1380 = vadd.f32 %v1110, %v1302
      %v1381 = vadd.f32 %v1111, %v1307
      %v1382 = vadd.f32 %v1112, %v1312
      %v1383 = vadd.f32 %v1113, %v1317
      %v1384 = vadd.f32 %v1114, %v1322
      %v1385 = vadd.f32 %v1115, %v1327
      %v1386 = vadd.f32 %v1116, %v1332
      %v1387 = vadd.f32 %v1117, %v1337
      %v1388 = vadd.f32 %v1118, %v1342
      %v1389 = vadd.f32 %v1119, %v1347
      %v1390 = vadd.f32 %v1120, %v1352
      %v1391 = vadd.f32 %v1121, %v1357
      %v1392 = vadd.f32 %v1122, %v1362
      %v1393 = vadd.f32 %v1123, %v1367
      %v1394 = vadd.f32 %v1124, %v1372
      %s1395 = scalar_lea.vmem [#allocation2], 24
      %v1396 = vld [vmem:[%s1395] sm:$0xff]
      %v1397 = vld [vmem:[%s1395 + $0x8] sm:$0xff]
      %v1398 = vld [vmem:[%s1395 + $0x18] sm:$0xff]
      %v1399 = vld [vmem:[%s1395 + $0x20] sm:$0xff]
      %v1400 = vld [vmem:[%s1395 + $0x30] sm:$0xff]
      %v1401 = vld [vmem:[%s1395 + $0x38] sm:$0xff]
      %v1402 = vld [vmem:[%s1395 + $0x48] sm:$0xff]
      %v1403 = vld [vmem:[%s1395 + $0x50] sm:$0xff]
      %v1404 = vld [vmem:[%s1395 + $0x60] sm:$0xff]
      %v1405 = vld [vmem:[%s1395 + $0x68] sm:$0xff]
      %v1406 = vld [vmem:[%s1395 + $0x78] sm:$0xff]
      %v1407 = vld [vmem:[%s1395 + $0x80] sm:$0xff]
      %v1408 = vld [vmem:[%s1395 + $0x90] sm:$0xff]
      %v1409 = vld [vmem:[%s1395 + $0x98] sm:$0xff]
      %v1410 = vld [vmem:[%s1395 + $0xa8] sm:$0xff]
      %v1411 = vld [vmem:[%s1395 + $0xb0] sm:$0xff]
      %v1412 = vld [vmem:[%s1395 + $0xc0] sm:$0xff]
      %v1413 = vld [vmem:[%s1395 + $0xc8] sm:$0xff]
      %v1414 = vld [vmem:[%s1395 + $0xd8] sm:$0xff]
      %v1415 = vld [vmem:[%s1395 + $0xe0] sm:$0xff]
      %s1416 = scalar_lea.vmem %s3, 12
      %v1417 = vld [vmem:[%s1416] sm:$0xf]
      %v1419 = vsel %vm519, %v1396, 0
      %v1422 = vsel %vm519, %v1397, 0
      %v1425 = vsel %vm519, %v1398, 0
      %v1428 = vsel %vm519, %v1399, 0
      %v1431 = vsel %vm519, %v1400, 0
      %v1434 = vsel %vm519, %v1401, 0
      %v1437 = vsel %vm519, %v1402, 0
      %v1440 = vsel %vm519, %v1403, 0
      %v1443 = vsel %vm519, %v1404, 0
      %v1446 = vsel %vm519, %v1405, 0
      %v1449 = vsel %vm519, %v1406, 0
      %v1452 = vsel %vm519, %v1407, 0
      %v1455 = vsel %vm519, %v1408, 0
      %v1458 = vsel %vm519, %v1409, 0
      %v1461 = vsel %vm519, %v1410, 0
      %v1464 = vsel %vm519, %v1411, 0
      %v1467 = vsel %vm519, %v1412, 0
      %v1470 = vsel %vm519, %v1413, 0
      %v1473 = vsel %vm519, %v1414, 0
      %v1476 = vsel %vm519, %v1415, 0
      %v1479 = vsel %vm666, %v1417, 0
      %1481 = vmatprep.subr.mxu0 0.0
      %1482 = vmatpush1.msra.mxu0 0.0
      %1483 = vmatprep.subr.mxu0 0.0
      %1484 = vmatpush1.msra.mxu0 0.0
      %1485 = vmatprep.subr.mxu0 0.0
      %1486 = vmatpush1.msra.mxu0 0.0
      %1487 = vmatprep.subr.mxu0 0.0
      %1488 = vmatpush1.msra.mxu0 0.0
      %1489 = vmatprep.subr.mxu0 0.0
      %1490 = vmatpush1.msra.mxu0 0.0
      %1491 = vmatprep.subr.mxu0 0.0
      %1492 = vmatpush1.msra.mxu0 0.0
      %1493 = vmatprep.subr.mxu0 0.0
      %1494 = vmatpush1.msra.mxu0 0.0
      %1495 = vmatprep.subr.mxu0 0.0
      %1496 = vmatpush1.msra.mxu0 0.0
      %1497 = vmatprep.subr.mxu0 0.0
      %1498 = vmatpush1.msra.mxu0 0.0
      %1499 = vmatprep.subr.mxu0 0.0
      %1500 = vmatpush1.msra.mxu0 0.0
      %1501 = vmatprep.subr.mxu0 0.0
      %1502 = vmatpush1.msra.mxu0 0.0
      %1503 = vmatprep.subr.mxu0 0.0
      %1504 = vmatpush1.msra.mxu0 0.0
      %1505 = vmatprep.subr.mxu0 0.0
      %1506 = vmatpush1.msra.mxu0 0.0
      %1507 = vmatprep.subr.mxu0 0.0
      %1508 = vmatpush1.msra.mxu0 0.0
      %1509 = vmatprep.subr.mxu0 0.0
      %1510 = vmatpush1.msra.mxu0 0.0
      %1511 = vmatprep.subr.mxu0 0.0
      %1512 = vmatpush1.msra.mxu0 %v1479
      %1513 = vmatprep.subr.mxu0 0.0
      %1514 = vmatpush2.msra.mxu0 0.0
      %1515 = vmatprep.subr.mxu0 0.0
      %1516 = vmatpush2.msra.mxu0 0.0
      %1517 = vmatprep.subr.mxu0 0.0
      %1518 = vmatpush2.msra.mxu0 0.0
      %1519 = vmatprep.subr.mxu0 0.0
      %1520 = vmatpush2.msra.mxu0 0.0
      %1521 = vmatprep.subr.mxu0 0.0
      %1522 = vmatpush2.msra.mxu0 0.0
      %1523 = vmatprep.subr.mxu0 0.0
      %1524 = vmatpush2.msra.mxu0 0.0
      %1525 = vmatprep.subr.mxu0 0.0
      %1526 = vmatpush2.msra.mxu0 0.0
      %1527 = vmatprep.subr.mxu0 0.0
      %1528 = vmatpush2.msra.mxu0 0.0
      %1529 = vmatprep.subr.mxu0 0.0
      %1530 = vmatpush2.msra.mxu0 0.0
      %1531 = vmatprep.subr.mxu0 0.0
      %1532 = vmatpush2.msra.mxu0 0.0
      %1533 = vmatprep.subr.mxu0 0.0
      %1534 = vmatpush2.msra.mxu0 0.0
      %1535 = vmatprep.subr.mxu0 0.0
      %1536 = vmatpush2.msra.mxu0 0.0
      %1537 = vmatprep.subr.mxu0 0.0
      %1538 = vmatpush2.msra.mxu0 0.0
      %1539 = vmatprep.subr.mxu0 0.0
      %1540 = vmatpush2.msra.mxu0 0.0
      %1541 = vmatprep.subr.mxu0 0.0
      %1542 = vmatpush2.msra.mxu0 0.0
      %1543 = vmatprep.subr.mxu0 0.0
      %1544 = vmatpush2.msra.mxu0 0.0
      %1545 = vmatprep.mubr.f32.mxu0 0.0
      %1546 = vmatmul.mubr.f32.gmra.mxu0 %v1419
      %v1547 = vpop.f32.mrf.mxu0
      %v1548 = vadd.f32 0.0, %v1547
      %v1549 = vpop.f32.mrf.mxu0
      %1550 = vmatprep.mubr.f32.mxu0 0.0
      %1551 = vmatmul.mubr.f32.gmra.mxu0 %v1422
      %v1552 = vpop.f32.mrf.mxu0
      %v1553 = vadd.f32 0.0, %v1552
      %v1554 = vpop.f32.mrf.mxu0
      %1555 = vmatprep.mubr.f32.mxu0 0.0
      %1556 = vmatmul.mubr.f32.gmra.mxu0 %v1425
      %v1557 = vpop.f32.mrf.mxu0
      %v1558 = vadd.f32 0.0, %v1557
      %v1559 = vpop.f32.mrf.mxu0
      %1560 = vmatprep.mubr.f32.mxu0 0.0
      %1561 = vmatmul.mubr.f32.gmra.mxu0 %v1428
      %v1562 = vpop.f32.mrf.mxu0
      %v1563 = vadd.f32 0.0, %v1562
      %v1564 = vpop.f32.mrf.mxu0
      %1565 = vmatprep.mubr.f32.mxu0 0.0
      %1566 = vmatmul.mubr.f32.gmra.mxu0 %v1431
      %v1567 = vpop.f32.mrf.mxu0
      %v1568 = vadd.f32 0.0, %v1567
      %v1569 = vpop.f32.mrf.mxu0
      %1570 = vmatprep.mubr.f32.mxu0 0.0
      %1571 = vmatmul.mubr.f32.gmra.mxu0 %v1434
      %v1572 = vpop.f32.mrf.mxu0
      %v1573 = vadd.f32 0.0, %v1572
      %v1574 = vpop.f32.mrf.mxu0
      %1575 = vmatprep.mubr.f32.mxu0 0.0
      %1576 = vmatmul.mubr.f32.gmra.mxu0 %v1437
      %v1577 = vpop.f32.mrf.mxu0
      %v1578 = vadd.f32 0.0, %v1577
      %v1579 = vpop.f32.mrf.mxu0
      %1580 = vmatprep.mubr.f32.mxu0 0.0
      %1581 = vmatmul.mubr.f32.gmra.mxu0 %v1440
      %v1582 = vpop.f32.mrf.mxu0
      %v1583 = vadd.f32 0.0, %v1582
      %v1584 = vpop.f32.mrf.mxu0
      %1585 = vmatprep.mubr.f32.mxu0 0.0
      %1586 = vmatmul.mubr.f32.gmra.mxu0 %v1443
      %v1587 = vpop.f32.mrf.mxu0
      %v1588 = vadd.f32 0.0, %v1587
      %v1589 = vpop.f32.mrf.mxu0
      %1590 = vmatprep.mubr.f32.mxu0 0.0
      %1591 = vmatmul.mubr.f32.gmra.mxu0 %v1446
      %v1592 = vpop.f32.mrf.mxu0
      %v1593 = vadd.f32 0.0, %v1592
      %v1594 = vpop.f32.mrf.mxu0
      %1595 = vmatprep.mubr.f32.mxu0 0.0
      %1596 = vmatmul.mubr.f32.gmra.mxu0 %v1449
      %v1597 = vpop.f32.mrf.mxu0
      %v1598 = vadd.f32 0.0, %v1597
      %v1599 = vpop.f32.mrf.mxu0
      %1600 = vmatprep.mubr.f32.mxu0 0.0
      %1601 = vmatmul.mubr.f32.gmra.mxu0 %v1452
      %v1602 = vpop.f32.mrf.mxu0
      %v1603 = vadd.f32 0.0, %v1602
      %v1604 = vpop.f32.mrf.mxu0
      %1605 = vmatprep.mubr.f32.mxu0 0.0
      %1606 = vmatmul.mubr.f32.gmra.mxu0 %v1455
      %v1607 = vpop.f32.mrf.mxu0
      %v1608 = vadd.f32 0.0, %v1607
      %v1609 = vpop.f32.mrf.mxu0
      %1610 = vmatprep.mubr.f32.mxu0 0.0
      %1611 = vmatmul.mubr.f32.gmra.mxu0 %v1458
      %v1612 = vpop.f32.mrf.mxu0
      %v1613 = vadd.f32 0.0, %v1612
      %v1614 = vpop.f32.mrf.mxu0
      %1615 = vmatprep.mubr.f32.mxu0 0.0
      %1616 = vmatmul.mubr.f32.gmra.mxu0 %v1461
      %v1617 = vpop.f32.mrf.mxu0
      %v1618 = vadd.f32 0.0, %v1617
      %v1619 = vpop.f32.mrf.mxu0
      %1620 = vmatprep.mubr.f32.mxu0 0.0
      %1621 = vmatmul.mubr.f32.gmra.mxu0 %v1464
      %v1622 = vpop.f32.mrf.mxu0
      %v1623 = vadd.f32 0.0, %v1622
      %v1624 = vpop.f32.mrf.mxu0
      %1625 = vmatprep.mubr.f32.mxu0 0.0
      %1626 = vmatmul.mubr.f32.gmra.mxu0 %v1467
      %v1627 = vpop.f32.mrf.mxu0
      %v1628 = vadd.f32 0.0, %v1627
      %v1629 = vpop.f32.mrf.mxu0
      %1630 = vmatprep.mubr.f32.mxu0 0.0
      %1631 = vmatmul.mubr.f32.gmra.mxu0 %v1470
      %v1632 = vpop.f32.mrf.mxu0
      %v1633 = vadd.f32 0.0, %v1632
      %v1634 = vpop.f32.mrf.mxu0
      %1635 = vmatprep.mubr.f32.mxu0 0.0
      %1636 = vmatmul.mubr.f32.gmra.mxu0 %v1473
      %v1637 = vpop.f32.mrf.mxu0
      %v1638 = vadd.f32 0.0, %v1637
      %v1639 = vpop.f32.mrf.mxu0
      %1640 = vmatprep.mubr.f32.mxu0 0.0
      %1641 = vmatmul.mubr.f32.gmra.mxu0 %v1476
      %v1642 = vpop.f32.mrf.mxu0
      %v1643 = vadd.f32 0.0, %v1642
      %v1644 = vpop.f32.mrf.mxu0
      %1645 = vdwg.mxu0
      %v1646 = vadd.f32 %v1375, %v1548
      %v1647 = vadd.f32 %v1376, %v1553
      %v1648 = vadd.f32 %v1377, %v1558
      %v1649 = vadd.f32 %v1378, %v1563
      %v1650 = vadd.f32 %v1379, %v1568
      %v1651 = vadd.f32 %v1380, %v1573
      %v1652 = vadd.f32 %v1381, %v1578
      %v1653 = vadd.f32 %v1382, %v1583
      %v1654 = vadd.f32 %v1383, %v1588
      %v1655 = vadd.f32 %v1384, %v1593
      %v1656 = vadd.f32 %v1385, %v1598
      %v1657 = vadd.f32 %v1386, %v1603
      %v1658 = vadd.f32 %v1387, %v1608
      %v1659 = vadd.f32 %v1388, %v1613
      %v1660 = vadd.f32 %v1389, %v1618
      %v1661 = vadd.f32 %v1390, %v1623
      %v1662 = vadd.f32 %v1391, %v1628
      %v1663 = vadd.f32 %v1392, %v1633
      %v1664 = vadd.f32 %v1393, %v1638
      %v1665 = vadd.f32 %v1394, %v1643
      %v1666 = vld [vmem:[%s1395 + $0x1] sm:$0xff]
      %v1667 = vld [vmem:[%s1395 + $0x9] sm:$0xff]
      %v1668 = vld [vmem:[%s1395 + $0x19] sm:$0xff]
      %v1669 = vld [vmem:[%s1395 + $0x21] sm:$0xff]
      %v1670 = vld [vmem:[%s1395 + $0x31] sm:$0xff]
      %v1671 = vld [vmem:[%s1395 + $0x39] sm:$0xff]
      %v1672 = vld [vmem:[%s1395 + $0x49] sm:$0xff]
      %v1673 = vld [vmem:[%s1395 + $0x51] sm:$0xff]
      %v1674 = vld [vmem:[%s1395 + $0x61] sm:$0xff]
      %v1675 = vld [vmem:[%s1395 + $0x69] sm:$0xff]
      %v1676 = vld [vmem:[%s1395 + $0x79] sm:$0xff]
      %v1677 = vld [vmem:[%s1395 + $0x81] sm:$0xff]
      %v1678 = vld [vmem:[%s1395 + $0x91] sm:$0xff]
      %v1679 = vld [vmem:[%s1395 + $0x99] sm:$0xff]
      %v1680 = vld [vmem:[%s1395 + $0xa9] sm:$0xff]
      %v1681 = vld [vmem:[%s1395 + $0xb1] sm:$0xff]
      %v1682 = vld [vmem:[%s1395 + $0xc1] sm:$0xff]
      %v1683 = vld [vmem:[%s1395 + $0xc9] sm:$0xff]
      %v1684 = vld [vmem:[%s1395 + $0xd9] sm:$0xff]
      %v1685 = vld [vmem:[%s1395 + $0xe1] sm:$0xff]
      %s1686 = scalar_lea.vmem %s3, 16
      %v1687 = vld [vmem:[%s1686] sm:$0xf]
      %v1689 = vsel %vm519, %v1666, 0
      %v1692 = vsel %vm519, %v1667, 0
      %v1695 = vsel %vm519, %v1668, 0
      %v1698 = vsel %vm519, %v1669, 0
      %v1701 = vsel %vm519, %v1670, 0
      %v1704 = vsel %vm519, %v1671, 0
      %v1707 = vsel %vm519, %v1672, 0
      %v1710 = vsel %vm519, %v1673, 0
      %v1713 = vsel %vm519, %v1674, 0
      %v1716 = vsel %vm519, %v1675, 0
      %v1719 = vsel %vm519, %v1676, 0
      %v1722 = vsel %vm519, %v1677, 0
      %v1725 = vsel %vm519, %v1678, 0
      %v1728 = vsel %vm519, %v1679, 0
      %v1731 = vsel %vm519, %v1680, 0
      %v1734 = vsel %vm519, %v1681, 0
      %v1737 = vsel %vm519, %v1682, 0
      %v1740 = vsel %vm519, %v1683, 0
      %v1743 = vsel %vm519, %v1684, 0
      %v1746 = vsel %vm519, %v1685, 0
      %v1749 = vsel %vm666, %v1687, 0
      %1751 = vmatprep.subr.mxu0 0.0
      %1752 = vmatpush1.msra.mxu0 0.0
      %1753 = vmatprep.subr.mxu0 0.0
      %1754 = vmatpush1.msra.mxu0 0.0
      %1755 = vmatprep.subr.mxu0 0.0
      %1756 = vmatpush1.msra.mxu0 0.0
      %1757 = vmatprep.subr.mxu0 0.0
      %1758 = vmatpush1.msra.mxu0 0.0
      %1759 = vmatprep.subr.mxu0 0.0
      %1760 = vmatpush1.msra.mxu0 0.0
      %1761 = vmatprep.subr.mxu0 0.0
      %1762 = vmatpush1.msra.mxu0 0.0
      %1763 = vmatprep.subr.mxu0 0.0
      %1764 = vmatpush1.msra.mxu0 0.0
      %1765 = vmatprep.subr.mxu0 0.0
      %1766 = vmatpush1.msra.mxu0 0.0
      %1767 = vmatprep.subr.mxu0 0.0
      %1768 = vmatpush1.msra.mxu0 0.0
      %1769 = vmatprep.subr.mxu0 0.0
      %1770 = vmatpush1.msra.mxu0 0.0
      %1771 = vmatprep.subr.mxu0 0.0
      %1772 = vmatpush1.msra.mxu0 0.0
      %1773 = vmatprep.subr.mxu0 0.0
      %1774 = vmatpush1.msra.mxu0 0.0
      %1775 = vmatprep.subr.mxu0 0.0
      %1776 = vmatpush1.msra.mxu0 0.0
      %1777 = vmatprep.subr.mxu0 0.0
      %1778 = vmatpush1.msra.mxu0 0.0
      %1779 = vmatprep.subr.mxu0 0.0
      %1780 = vmatpush1.msra.mxu0 0.0
      %1781 = vmatprep.subr.mxu0 0.0
      %1782 = vmatpush1.msra.mxu0 %v1749
      %1783 = vmatprep.subr.mxu0 0.0
      %1784 = vmatpush2.msra.mxu0 0.0
      %1785 = vmatprep.subr.mxu0 0.0
      %1786 = vmatpush2.msra.mxu0 0.0
      %1787 = vmatprep.subr.mxu0 0.0
      %1788 = vmatpush2.msra.mxu0 0.0
      %1789 = vmatprep.subr.mxu0 0.0
      %1790 = vmatpush2.msra.mxu0 0.0
      %1791 = vmatprep.subr.mxu0 0.0
      %1792 = vmatpush2.msra.mxu0 0.0
      %1793 = vmatprep.subr.mxu0 0.0
      %1794 = vmatpush2.msra.mxu0 0.0
      %1795 = vmatprep.subr.mxu0 0.0
      %1796 = vmatpush2.msra.mxu0 0.0
      %1797 = vmatprep.subr.mxu0 0.0
      %1798 = vmatpush2.msra.mxu0 0.0
      %1799 = vmatprep.subr.mxu0 0.0
      %1800 = vmatpush2.msra.mxu0 0.0
      %1801 = vmatprep.subr.mxu0 0.0
      %1802 = vmatpush2.msra.mxu0 0.0
      %1803 = vmatprep.subr.mxu0 0.0
      %1804 = vmatpush2.msra.mxu0 0.0
      %1805 = vmatprep.subr.mxu0 0.0
      %1806 = vmatpush2.msra.mxu0 0.0
      %1807 = vmatprep.subr.mxu0 0.0
      %1808 = vmatpush2.msra.mxu0 0.0
      %1809 = vmatprep.subr.mxu0 0.0
      %1810 = vmatpush2.msra.mxu0 0.0
      %1811 = vmatprep.subr.mxu0 0.0
      %1812 = vmatpush2.msra.mxu0 0.0
      %1813 = vmatprep.subr.mxu0 0.0
      %1814 = vmatpush2.msra.mxu0 0.0
      %1815 = vmatprep.mubr.f32.mxu0 0.0
      %1816 = vmatmul.mubr.f32.gmra.mxu0 %v1689
      %v1817 = vpop.f32.mrf.mxu0
      %v1818 = vadd.f32 0.0, %v1817
      %v1819 = vpop.f32.mrf.mxu0
      %1820 = vmatprep.mubr.f32.mxu0 0.0
      %1821 = vmatmul.mubr.f32.gmra.mxu0 %v1692
      %v1822 = vpop.f32.mrf.mxu0
      %v1823 = vadd.f32 0.0, %v1822
      %v1824 = vpop.f32.mrf.mxu0
      %1825 = vmatprep.mubr.f32.mxu0 0.0
      %1826 = vmatmul.mubr.f32.gmra.mxu0 %v1695
      %v1827 = vpop.f32.mrf.mxu0
      %v1828 = vadd.f32 0.0, %v1827
      %v1829 = vpop.f32.mrf.mxu0
      %1830 = vmatprep.mubr.f32.mxu0 0.0
      %1831 = vmatmul.mubr.f32.gmra.mxu0 %v1698
      %v1832 = vpop.f32.mrf.mxu0
      %v1833 = vadd.f32 0.0, %v1832
      %v1834 = vpop.f32.mrf.mxu0
      %1835 = vmatprep.mubr.f32.mxu0 0.0
      %1836 = vmatmul.mubr.f32.gmra.mxu0 %v1701
      %v1837 = vpop.f32.mrf.mxu0
      %v1838 = vadd.f32 0.0, %v1837
      %v1839 = vpop.f32.mrf.mxu0
      %1840 = vmatprep.mubr.f32.mxu0 0.0
      %1841 = vmatmul.mubr.f32.gmra.mxu0 %v1704
      %v1842 = vpop.f32.mrf.mxu0
      %v1843 = vadd.f32 0.0, %v1842
      %v1844 = vpop.f32.mrf.mxu0
      %1845 = vmatprep.mubr.f32.mxu0 0.0
      %1846 = vmatmul.mubr.f32.gmra.mxu0 %v1707
      %v1847 = vpop.f32.mrf.mxu0
      %v1848 = vadd.f32 0.0, %v1847
      %v1849 = vpop.f32.mrf.mxu0
      %1850 = vmatprep.mubr.f32.mxu0 0.0
      %1851 = vmatmul.mubr.f32.gmra.mxu0 %v1710
      %v1852 = vpop.f32.mrf.mxu0
      %v1853 = vadd.f32 0.0, %v1852
      %v1854 = vpop.f32.mrf.mxu0
      %1855 = vmatprep.mubr.f32.mxu0 0.0
      %1856 = vmatmul.mubr.f32.gmra.mxu0 %v1713
      %v1857 = vpop.f32.mrf.mxu0
      %v1858 = vadd.f32 0.0, %v1857
      %v1859 = vpop.f32.mrf.mxu0
      %1860 = vmatprep.mubr.f32.mxu0 0.0
      %1861 = vmatmul.mubr.f32.gmra.mxu0 %v1716
      %v1862 = vpop.f32.mrf.mxu0
      %v1863 = vadd.f32 0.0, %v1862
      %v1864 = vpop.f32.mrf.mxu0
      %1865 = vmatprep.mubr.f32.mxu0 0.0
      %1866 = vmatmul.mubr.f32.gmra.mxu0 %v1719
      %v1867 = vpop.f32.mrf.mxu0
      %v1868 = vadd.f32 0.0, %v1867
      %v1869 = vpop.f32.mrf.mxu0
      %1870 = vmatprep.mubr.f32.mxu0 0.0
      %1871 = vmatmul.mubr.f32.gmra.mxu0 %v1722
      %v1872 = vpop.f32.mrf.mxu0
      %v1873 = vadd.f32 0.0, %v1872
      %v1874 = vpop.f32.mrf.mxu0
      %1875 = vmatprep.mubr.f32.mxu0 0.0
      %1876 = vmatmul.mubr.f32.gmra.mxu0 %v1725
      %v1877 = vpop.f32.mrf.mxu0
      %v1878 = vadd.f32 0.0, %v1877
      %v1879 = vpop.f32.mrf.mxu0
      %1880 = vmatprep.mubr.f32.mxu0 0.0
      %1881 = vmatmul.mubr.f32.gmra.mxu0 %v1728
      %v1882 = vpop.f32.mrf.mxu0
      %v1883 = vadd.f32 0.0, %v1882
      %v1884 = vpop.f32.mrf.mxu0
      %1885 = vmatprep.mubr.f32.mxu0 0.0
      %1886 = vmatmul.mubr.f32.gmra.mxu0 %v1731
      %v1887 = vpop.f32.mrf.mxu0
      %v1888 = vadd.f32 0.0, %v1887
      %v1889 = vpop.f32.mrf.mxu0
      %1890 = vmatprep.mubr.f32.mxu0 0.0
      %1891 = vmatmul.mubr.f32.gmra.mxu0 %v1734
      %v1892 = vpop.f32.mrf.mxu0
      %v1893 = vadd.f32 0.0, %v1892
      %v1894 = vpop.f32.mrf.mxu0
      %1895 = vmatprep.mubr.f32.mxu0 0.0
      %1896 = vmatmul.mubr.f32.gmra.mxu0 %v1737
      %v1897 = vpop.f32.mrf.mxu0
      %v1898 = vadd.f32 0.0, %v1897
      %v1899 = vpop.f32.mrf.mxu0
      %1900 = vmatprep.mubr.f32.mxu0 0.0
      %1901 = vmatmul.mubr.f32.gmra.mxu0 %v1740
      %v1902 = vpop.f32.mrf.mxu0
      %v1903 = vadd.f32 0.0, %v1902
      %v1904 = vpop.f32.mrf.mxu0
      %1905 = vmatprep.mubr.f32.mxu0 0.0
      %1906 = vmatmul.mubr.f32.gmra.mxu0 %v1743
      %v1907 = vpop.f32.mrf.mxu0
      %v1908 = vadd.f32 0.0, %v1907
      %v1909 = vpop.f32.mrf.mxu0
      %1910 = vmatprep.mubr.f32.mxu0 0.0
      %1911 = vmatmul.mubr.f32.gmra.mxu0 %v1746
      %v1912 = vpop.f32.mrf.mxu0
      %v1913 = vadd.f32 0.0, %v1912
      %v1914 = vpop.f32.mrf.mxu0
      %1915 = vdwg.mxu0
      %v1916 = vadd.f32 %v1646, %v1818
      %v1917 = vadd.f32 %v1647, %v1823
      %v1918 = vadd.f32 %v1648, %v1828
      %v1919 = vadd.f32 %v1649, %v1833
      %v1920 = vadd.f32 %v1650, %v1838
      %v1921 = vadd.f32 %v1651, %v1843
      %v1922 = vadd.f32 %v1652, %v1848
      %v1923 = vadd.f32 %v1653, %v1853
      %v1924 = vadd.f32 %v1654, %v1858
      %v1925 = vadd.f32 %v1655, %v1863
      %v1926 = vadd.f32 %v1656, %v1868
      %v1927 = vadd.f32 %v1657, %v1873
      %v1928 = vadd.f32 %v1658, %v1878
      %v1929 = vadd.f32 %v1659, %v1883
      %v1930 = vadd.f32 %v1660, %v1888
      %v1931 = vadd.f32 %v1661, %v1893
      %v1932 = vadd.f32 %v1662, %v1898
      %v1933 = vadd.f32 %v1663, %v1903
      %v1934 = vadd.f32 %v1664, %v1908
      %v1935 = vadd.f32 %v1665, %v1913
      %v1936 = vld [vmem:[%s1395 + $0x2] sm:$0xff]
      %v1937 = vld [vmem:[%s1395 + $0xa] sm:$0xff]
      %v1938 = vld [vmem:[%s1395 + $0x1a] sm:$0xff]
      %v1939 = vld [vmem:[%s1395 + $0x22] sm:$0xff]
      %v1940 = vld [vmem:[%s1395 + $0x32] sm:$0xff]
      %v1941 = vld [vmem:[%s1395 + $0x3a] sm:$0xff]
      %v1942 = vld [vmem:[%s1395 + $0x4a] sm:$0xff]
      %v1943 = vld [vmem:[%s1395 + $0x52] sm:$0xff]
      %v1944 = vld [vmem:[%s1395 + $0x62] sm:$0xff]
      %v1945 = vld [vmem:[%s1395 + $0x6a] sm:$0xff]
      %v1946 = vld [vmem:[%s1395 + $0x7a] sm:$0xff]
      %v1947 = vld [vmem:[%s1395 + $0x82] sm:$0xff]
      %v1948 = vld [vmem:[%s1395 + $0x92] sm:$0xff]
      %v1949 = vld [vmem:[%s1395 + $0x9a] sm:$0xff]
      %v1950 = vld [vmem:[%s1395 + $0xaa] sm:$0xff]
      %v1951 = vld [vmem:[%s1395 + $0xb2] sm:$0xff]
      %v1952 = vld [vmem:[%s1395 + $0xc2] sm:$0xff]
      %v1953 = vld [vmem:[%s1395 + $0xca] sm:$0xff]
      %v1954 = vld [vmem:[%s1395 + $0xda] sm:$0xff]
      %v1955 = vld [vmem:[%s1395 + $0xe2] sm:$0xff]
      %s1956 = scalar_lea.vmem %s3, 20
      %v1957 = vld [vmem:[%s1956] sm:$0xf]
      %v1959 = vsel %vm519, %v1936, 0
      %v1962 = vsel %vm519, %v1937, 0
      %v1965 = vsel %vm519, %v1938, 0
      %v1968 = vsel %vm519, %v1939, 0
      %v1971 = vsel %vm519, %v1940, 0
      %v1974 = vsel %vm519, %v1941, 0
      %v1977 = vsel %vm519, %v1942, 0
      %v1980 = vsel %vm519, %v1943, 0
      %v1983 = vsel %vm519, %v1944, 0
      %v1986 = vsel %vm519, %v1945, 0
      %v1989 = vsel %vm519, %v1946, 0
      %v1992 = vsel %vm519, %v1947, 0
      %v1995 = vsel %vm519, %v1948, 0
      %v1998 = vsel %vm519, %v1949, 0
      %v2001 = vsel %vm519, %v1950, 0
      %v2004 = vsel %vm519, %v1951, 0
      %v2007 = vsel %vm519, %v1952, 0
      %v2010 = vsel %vm519, %v1953, 0
      %v2013 = vsel %vm519, %v1954, 0
      %v2016 = vsel %vm519, %v1955, 0
      %v2019 = vsel %vm666, %v1957, 0
      %2021 = vmatprep.subr.mxu0 0.0
      %2022 = vmatpush1.msra.mxu0 0.0
      %2023 = vmatprep.subr.mxu0 0.0
      %2024 = vmatpush1.msra.mxu0 0.0
      %2025 = vmatprep.subr.mxu0 0.0
      %2026 = vmatpush1.msra.mxu0 0.0
      %2027 = vmatprep.subr.mxu0 0.0
      %2028 = vmatpush1.msra.mxu0 0.0
      %2029 = vmatprep.subr.mxu0 0.0
      %2030 = vmatpush1.msra.mxu0 0.0
      %2031 = vmatprep.subr.mxu0 0.0
      %2032 = vmatpush1.msra.mxu0 0.0
      %2033 = vmatprep.subr.mxu0 0.0
      %2034 = vmatpush1.msra.mxu0 0.0
      %2035 = vmatprep.subr.mxu0 0.0
      %2036 = vmatpush1.msra.mxu0 0.0
      %2037 = vmatprep.subr.mxu0 0.0
      %2038 = vmatpush1.msra.mxu0 0.0
      %2039 = vmatprep.subr.mxu0 0.0
      %2040 = vmatpush1.msra.mxu0 0.0
      %2041 = vmatprep.subr.mxu0 0.0
      %2042 = vmatpush1.msra.mxu0 0.0
      %2043 = vmatprep.subr.mxu0 0.0
      %2044 = vmatpush1.msra.mxu0 0.0
      %2045 = vmatprep.subr.mxu0 0.0
      %2046 = vmatpush1.msra.mxu0 0.0
      %2047 = vmatprep.subr.mxu0 0.0
      %2048 = vmatpush1.msra.mxu0 0.0
      %2049 = vmatprep.subr.mxu0 0.0
      %2050 = vmatpush1.msra.mxu0 0.0
      %2051 = vmatprep.subr.mxu0 0.0
      %2052 = vmatpush1.msra.mxu0 %v2019
      %2053 = vmatprep.subr.mxu0 0.0
      %2054 = vmatpush2.msra.mxu0 0.0
      %2055 = vmatprep.subr.mxu0 0.0
      %2056 = vmatpush2.msra.mxu0 0.0
      %2057 = vmatprep.subr.mxu0 0.0
      %2058 = vmatpush2.msra.mxu0 0.0
      %2059 = vmatprep.subr.mxu0 0.0
      %2060 = vmatpush2.msra.mxu0 0.0
      %2061 = vmatprep.subr.mxu0 0.0
      %2062 = vmatpush2.msra.mxu0 0.0
      %2063 = vmatprep.subr.mxu0 0.0
      %2064 = vmatpush2.msra.mxu0 0.0
      %2065 = vmatprep.subr.mxu0 0.0
      %2066 = vmatpush2.msra.mxu0 0.0
      %2067 = vmatprep.subr.mxu0 0.0
      %2068 = vmatpush2.msra.mxu0 0.0
      %2069 = vmatprep.subr.mxu0 0.0
      %2070 = vmatpush2.msra.mxu0 0.0
      %2071 = vmatprep.subr.mxu0 0.0
      %2072 = vmatpush2.msra.mxu0 0.0
      %2073 = vmatprep.subr.mxu0 0.0
      %2074 = vmatpush2.msra.mxu0 0.0
      %2075 = vmatprep.subr.mxu0 0.0
      %2076 = vmatpush2.msra.mxu0 0.0
      %2077 = vmatprep.subr.mxu0 0.0
      %2078 = vmatpush2.msra.mxu0 0.0
      %2079 = vmatprep.subr.mxu0 0.0
      %2080 = vmatpush2.msra.mxu0 0.0
      %2081 = vmatprep.subr.mxu0 0.0
      %2082 = vmatpush2.msra.mxu0 0.0
      %2083 = vmatprep.subr.mxu0 0.0
      %2084 = vmatpush2.msra.mxu0 0.0
      %2085 = vmatprep.mubr.f32.mxu0 0.0
      %2086 = vmatmul.mubr.f32.gmra.mxu0 %v1959
      %v2087 = vpop.f32.mrf.mxu0
      %v2088 = vadd.f32 0.0, %v2087
      %v2089 = vpop.f32.mrf.mxu0
      %2090 = vmatprep.mubr.f32.mxu0 0.0
      %2091 = vmatmul.mubr.f32.gmra.mxu0 %v1962
      %v2092 = vpop.f32.mrf.mxu0
      %v2093 = vadd.f32 0.0, %v2092
      %v2094 = vpop.f32.mrf.mxu0
      %2095 = vmatprep.mubr.f32.mxu0 0.0
      %2096 = vmatmul.mubr.f32.gmra.mxu0 %v1965
      %v2097 = vpop.f32.mrf.mxu0
      %v2098 = vadd.f32 0.0, %v2097
      %v2099 = vpop.f32.mrf.mxu0
      %2100 = vmatprep.mubr.f32.mxu0 0.0
      %2101 = vmatmul.mubr.f32.gmra.mxu0 %v1968
      %v2102 = vpop.f32.mrf.mxu0
      %v2103 = vadd.f32 0.0, %v2102
      %v2104 = vpop.f32.mrf.mxu0
      %2105 = vmatprep.mubr.f32.mxu0 0.0
      %2106 = vmatmul.mubr.f32.gmra.mxu0 %v1971
      %v2107 = vpop.f32.mrf.mxu0
      %v2108 = vadd.f32 0.0, %v2107
      %v2109 = vpop.f32.mrf.mxu0
      %2110 = vmatprep.mubr.f32.mxu0 0.0
      %2111 = vmatmul.mubr.f32.gmra.mxu0 %v1974
      %v2112 = vpop.f32.mrf.mxu0
      %v2113 = vadd.f32 0.0, %v2112
      %v2114 = vpop.f32.mrf.mxu0
      %2115 = vmatprep.mubr.f32.mxu0 0.0
      %2116 = vmatmul.mubr.f32.gmra.mxu0 %v1977
      %v2117 = vpop.f32.mrf.mxu0
      %v2118 = vadd.f32 0.0, %v2117
      %v2119 = vpop.f32.mrf.mxu0
      %2120 = vmatprep.mubr.f32.mxu0 0.0
      %2121 = vmatmul.mubr.f32.gmra.mxu0 %v1980
      %v2122 = vpop.f32.mrf.mxu0
      %v2123 = vadd.f32 0.0, %v2122
      %v2124 = vpop.f32.mrf.mxu0
      %2125 = vmatprep.mubr.f32.mxu0 0.0
      %2126 = vmatmul.mubr.f32.gmra.mxu0 %v1983
      %v2127 = vpop.f32.mrf.mxu0
      %v2128 = vadd.f32 0.0, %v2127
      %v2129 = vpop.f32.mrf.mxu0
      %2130 = vmatprep.mubr.f32.mxu0 0.0
      %2131 = vmatmul.mubr.f32.gmra.mxu0 %v1986
      %v2132 = vpop.f32.mrf.mxu0
      %v2133 = vadd.f32 0.0, %v2132
      %v2134 = vpop.f32.mrf.mxu0
      %2135 = vmatprep.mubr.f32.mxu0 0.0
      %2136 = vmatmul.mubr.f32.gmra.mxu0 %v1989
      %v2137 = vpop.f32.mrf.mxu0
      %v2138 = vadd.f32 0.0, %v2137
      %v2139 = vpop.f32.mrf.mxu0
      %2140 = vmatprep.mubr.f32.mxu0 0.0
      %2141 = vmatmul.mubr.f32.gmra.mxu0 %v1992
      %v2142 = vpop.f32.mrf.mxu0
      %v2143 = vadd.f32 0.0, %v2142
      %v2144 = vpop.f32.mrf.mxu0
      %2145 = vmatprep.mubr.f32.mxu0 0.0
      %2146 = vmatmul.mubr.f32.gmra.mxu0 %v1995
      %v2147 = vpop.f32.mrf.mxu0
      %v2148 = vadd.f32 0.0, %v2147
      %v2149 = vpop.f32.mrf.mxu0
      %2150 = vmatprep.mubr.f32.mxu0 0.0
      %2151 = vmatmul.mubr.f32.gmra.mxu0 %v1998
      %v2152 = vpop.f32.mrf.mxu0
      %v2153 = vadd.f32 0.0, %v2152
      %v2154 = vpop.f32.mrf.mxu0
      %2155 = vmatprep.mubr.f32.mxu0 0.0
      %2156 = vmatmul.mubr.f32.gmra.mxu0 %v2001
      %v2157 = vpop.f32.mrf.mxu0
      %v2158 = vadd.f32 0.0, %v2157
      %v2159 = vpop.f32.mrf.mxu0
      %2160 = vmatprep.mubr.f32.mxu0 0.0
      %2161 = vmatmul.mubr.f32.gmra.mxu0 %v2004
      %v2162 = vpop.f32.mrf.mxu0
      %v2163 = vadd.f32 0.0, %v2162
      %v2164 = vpop.f32.mrf.mxu0
      %2165 = vmatprep.mubr.f32.mxu0 0.0
      %2166 = vmatmul.mubr.f32.gmra.mxu0 %v2007
      %v2167 = vpop.f32.mrf.mxu0
      %v2168 = vadd.f32 0.0, %v2167
      %v2169 = vpop.f32.mrf.mxu0
      %2170 = vmatprep.mubr.f32.mxu0 0.0
      %2171 = vmatmul.mubr.f32.gmra.mxu0 %v2010
      %v2172 = vpop.f32.mrf.mxu0
      %v2173 = vadd.f32 0.0, %v2172
      %v2174 = vpop.f32.mrf.mxu0
      %2175 = vmatprep.mubr.f32.mxu0 0.0
      %2176 = vmatmul.mubr.f32.gmra.mxu0 %v2013
      %v2177 = vpop.f32.mrf.mxu0
      %v2178 = vadd.f32 0.0, %v2177
      %v2179 = vpop.f32.mrf.mxu0
      %2180 = vmatprep.mubr.f32.mxu0 0.0
      %2181 = vmatmul.mubr.f32.gmra.mxu0 %v2016
      %v2182 = vpop.f32.mrf.mxu0
      %v2183 = vadd.f32 0.0, %v2182
      %v2184 = vpop.f32.mrf.mxu0
      %2185 = vdwg.mxu0
      %v2186 = vadd.f32 %v1916, %v2088
      %v2187 = vadd.f32 %v1917, %v2093
      %v2188 = vadd.f32 %v1918, %v2098
      %v2189 = vadd.f32 %v1919, %v2103
      %v2190 = vadd.f32 %v1920, %v2108
      %v2191 = vadd.f32 %v1921, %v2113
      %v2192 = vadd.f32 %v1922, %v2118
      %v2193 = vadd.f32 %v1923, %v2123
      %v2194 = vadd.f32 %v1924, %v2128
      %v2195 = vadd.f32 %v1925, %v2133
      %v2196 = vadd.f32 %v1926, %v2138
      %v2197 = vadd.f32 %v1927, %v2143
      %v2198 = vadd.f32 %v1928, %v2148
      %v2199 = vadd.f32 %v1929, %v2153
      %v2200 = vadd.f32 %v1930, %v2158
      %v2201 = vadd.f32 %v1931, %v2163
      %v2202 = vadd.f32 %v1932, %v2168
      %v2203 = vadd.f32 %v1933, %v2173
      %v2204 = vadd.f32 %v1934, %v2178
      %v2205 = vadd.f32 %v1935, %v2183
      %v2206 = vld [vmem:[%s518] sm:$0xff]
      %v2207 = vld [vmem:[%s518 + $0x8] sm:$0xff]
      %v2208 = vld [vmem:[%s518 + $0x18] sm:$0xff]
      %v2209 = vld [vmem:[%s518 + $0x20] sm:$0xff]
      %v2210 = vld [vmem:[%s518 + $0x30] sm:$0xff]
      %v2211 = vld [vmem:[%s518 + $0x38] sm:$0xff]
      %v2212 = vld [vmem:[%s518 + $0x48] sm:$0xff]
      %v2213 = vld [vmem:[%s518 + $0x50] sm:$0xff]
      %v2214 = vld [vmem:[%s518 + $0x60] sm:$0xff]
      %v2215 = vld [vmem:[%s518 + $0x68] sm:$0xff]
      %v2216 = vld [vmem:[%s518 + $0x78] sm:$0xff]
      %v2217 = vld [vmem:[%s518 + $0x80] sm:$0xff]
      %v2218 = vld [vmem:[%s518 + $0x90] sm:$0xff]
      %v2219 = vld [vmem:[%s518 + $0x98] sm:$0xff]
      %v2220 = vld [vmem:[%s518 + $0xa8] sm:$0xff]
      %v2221 = vld [vmem:[%s518 + $0xb0] sm:$0xff]
      %v2222 = vld [vmem:[%s518 + $0xc0] sm:$0xff]
      %v2223 = vld [vmem:[%s518 + $0xc8] sm:$0xff]
      %v2224 = vld [vmem:[%s518 + $0xd8] sm:$0xff]
      %v2225 = vld [vmem:[%s518 + $0xe0] sm:$0xff]
      %s2226 = scalar_lea.vmem %s3, 24
      %v2227 = vld [vmem:[%s2226] sm:$0xf]
      %v2229 = vsel %vm519, %v2206, 0
      %v2232 = vsel %vm519, %v2207, 0
      %v2235 = vsel %vm519, %v2208, 0
      %v2238 = vsel %vm519, %v2209, 0
      %v2241 = vsel %vm519, %v2210, 0
      %v2244 = vsel %vm519, %v2211, 0
      %v2247 = vsel %vm519, %v2212, 0
      %v2250 = vsel %vm519, %v2213, 0
      %v2253 = vsel %vm519, %v2214, 0
      %v2256 = vsel %vm519, %v2215, 0
      %v2259 = vsel %vm519, %v2216, 0
      %v2262 = vsel %vm519, %v2217, 0
      %v2265 = vsel %vm519, %v2218, 0
      %v2268 = vsel %vm519, %v2219, 0
      %v2271 = vsel %vm519, %v2220, 0
      %v2274 = vsel %vm519, %v2221, 0
      %v2277 = vsel %vm519, %v2222, 0
      %v2280 = vsel %vm519, %v2223, 0
      %v2283 = vsel %vm519, %v2224, 0
      %v2286 = vsel %vm519, %v2225, 0
      %v2289 = vsel %vm666, %v2227, 0
      %2291 = vmatprep.subr.mxu0 0.0
      %2292 = vmatpush1.msra.mxu0 0.0
      %2293 = vmatprep.subr.mxu0 0.0
      %2294 = vmatpush1.msra.mxu0 0.0
      %2295 = vmatprep.subr.mxu0 0.0
      %2296 = vmatpush1.msra.mxu0 0.0
      %2297 = vmatprep.subr.mxu0 0.0
      %2298 = vmatpush1.msra.mxu0 0.0
      %2299 = vmatprep.subr.mxu0 0.0
      %2300 = vmatpush1.msra.mxu0 0.0
      %2301 = vmatprep.subr.mxu0 0.0
      %2302 = vmatpush1.msra.mxu0 0.0
      %2303 = vmatprep.subr.mxu0 0.0
      %2304 = vmatpush1.msra.mxu0 0.0
      %2305 = vmatprep.subr.mxu0 0.0
      %2306 = vmatpush1.msra.mxu0 0.0
      %2307 = vmatprep.subr.mxu0 0.0
      %2308 = vmatpush1.msra.mxu0 0.0
      %2309 = vmatprep.subr.mxu0 0.0
      %2310 = vmatpush1.msra.mxu0 0.0
      %2311 = vmatprep.subr.mxu0 0.0
      %2312 = vmatpush1.msra.mxu0 0.0
      %2313 = vmatprep.subr.mxu0 0.0
      %2314 = vmatpush1.msra.mxu0 0.0
      %2315 = vmatprep.subr.mxu0 0.0
      %2316 = vmatpush1.msra.mxu0 0.0
      %2317 = vmatprep.subr.mxu0 0.0
      %2318 = vmatpush1.msra.mxu0 0.0
      %2319 = vmatprep.subr.mxu0 0.0
      %2320 = vmatpush1.msra.mxu0 0.0
      %2321 = vmatprep.subr.mxu0 0.0
      %2322 = vmatpush1.msra.mxu0 %v2289
      %2323 = vmatprep.subr.mxu0 0.0
      %2324 = vmatpush2.msra.mxu0 0.0
      %2325 = vmatprep.subr.mxu0 0.0
      %2326 = vmatpush2.msra.mxu0 0.0
      %2327 = vmatprep.subr.mxu0 0.0
      %2328 = vmatpush2.msra.mxu0 0.0
      %2329 = vmatprep.subr.mxu0 0.0
      %2330 = vmatpush2.msra.mxu0 0.0
      %2331 = vmatprep.subr.mxu0 0.0
      %2332 = vmatpush2.msra.mxu0 0.0
      %2333 = vmatprep.subr.mxu0 0.0
      %2334 = vmatpush2.msra.mxu0 0.0
      %2335 = vmatprep.subr.mxu0 0.0
      %2336 = vmatpush2.msra.mxu0 0.0
      %2337 = vmatprep.subr.mxu0 0.0
      %2338 = vmatpush2.msra.mxu0 0.0
      %2339 = vmatprep.subr.mxu0 0.0
      %2340 = vmatpush2.msra.mxu0 0.0
      %2341 = vmatprep.subr.mxu0 0.0
      %2342 = vmatpush2.msra.mxu0 0.0
      %2343 = vmatprep.subr.mxu0 0.0
      %2344 = vmatpush2.msra.mxu0 0.0
      %2345 = vmatprep.subr.mxu0 0.0
      %2346 = vmatpush2.msra.mxu0 0.0
      %2347 = vmatprep.subr.mxu0 0.0
      %2348 = vmatpush2.msra.mxu0 0.0
      %2349 = vmatprep.subr.mxu0 0.0
      %2350 = vmatpush2.msra.mxu0 0.0
      %2351 = vmatprep.subr.mxu0 0.0
      %2352 = vmatpush2.msra.mxu0 0.0
      %2353 = vmatprep.subr.mxu0 0.0
      %2354 = vmatpush2.msra.mxu0 0.0
      %2355 = vmatprep.mubr.f32.mxu0 0.0
      %2356 = vmatmul.mubr.f32.gmra.mxu0 %v2229
      %v2357 = vpop.f32.mrf.mxu0
      %v2358 = vadd.f32 0.0, %v2357
      %v2359 = vpop.f32.mrf.mxu0
      %2360 = vmatprep.mubr.f32.mxu0 0.0
      %2361 = vmatmul.mubr.f32.gmra.mxu0 %v2232
      %v2362 = vpop.f32.mrf.mxu0
      %v2363 = vadd.f32 0.0, %v2362
      %v2364 = vpop.f32.mrf.mxu0
      %2365 = vmatprep.mubr.f32.mxu0 0.0
      %2366 = vmatmul.mubr.f32.gmra.mxu0 %v2235
      %v2367 = vpop.f32.mrf.mxu0
      %v2368 = vadd.f32 0.0, %v2367
      %v2369 = vpop.f32.mrf.mxu0
      %2370 = vmatprep.mubr.f32.mxu0 0.0
      %2371 = vmatmul.mubr.f32.gmra.mxu0 %v2238
      %v2372 = vpop.f32.mrf.mxu0
      %v2373 = vadd.f32 0.0, %v2372
      %v2374 = vpop.f32.mrf.mxu0
      %2375 = vmatprep.mubr.f32.mxu0 0.0
      %2376 = vmatmul.mubr.f32.gmra.mxu0 %v2241
      %v2377 = vpop.f32.mrf.mxu0
      %v2378 = vadd.f32 0.0, %v2377
      %v2379 = vpop.f32.mrf.mxu0
      %2380 = vmatprep.mubr.f32.mxu0 0.0
      %2381 = vmatmul.mubr.f32.gmra.mxu0 %v2244
      %v2382 = vpop.f32.mrf.mxu0
      %v2383 = vadd.f32 0.0, %v2382
      %v2384 = vpop.f32.mrf.mxu0
      %2385 = vmatprep.mubr.f32.mxu0 0.0
      %2386 = vmatmul.mubr.f32.gmra.mxu0 %v2247
      %v2387 = vpop.f32.mrf.mxu0
      %v2388 = vadd.f32 0.0, %v2387
      %v2389 = vpop.f32.mrf.mxu0
      %2390 = vmatprep.mubr.f32.mxu0 0.0
      %2391 = vmatmul.mubr.f32.gmra.mxu0 %v2250
      %v2392 = vpop.f32.mrf.mxu0
      %v2393 = vadd.f32 0.0, %v2392
      %v2394 = vpop.f32.mrf.mxu0
      %2395 = vmatprep.mubr.f32.mxu0 0.0
      %2396 = vmatmul.mubr.f32.gmra.mxu0 %v2253
      %v2397 = vpop.f32.mrf.mxu0
      %v2398 = vadd.f32 0.0, %v2397
      %v2399 = vpop.f32.mrf.mxu0
      %2400 = vmatprep.mubr.f32.mxu0 0.0
      %2401 = vmatmul.mubr.f32.gmra.mxu0 %v2256
      %v2402 = vpop.f32.mrf.mxu0
      %v2403 = vadd.f32 0.0, %v2402
      %v2404 = vpop.f32.mrf.mxu0
      %2405 = vmatprep.mubr.f32.mxu0 0.0
      %2406 = vmatmul.mubr.f32.gmra.mxu0 %v2259
      %v2407 = vpop.f32.mrf.mxu0
      %v2408 = vadd.f32 0.0, %v2407
      %v2409 = vpop.f32.mrf.mxu0
      %2410 = vmatprep.mubr.f32.mxu0 0.0
      %2411 = vmatmul.mubr.f32.gmra.mxu0 %v2262
      %v2412 = vpop.f32.mrf.mxu0
      %v2413 = vadd.f32 0.0, %v2412
      %v2414 = vpop.f32.mrf.mxu0
      %2415 = vmatprep.mubr.f32.mxu0 0.0
      %2416 = vmatmul.mubr.f32.gmra.mxu0 %v2265
      %v2417 = vpop.f32.mrf.mxu0
      %v2418 = vadd.f32 0.0, %v2417
      %v2419 = vpop.f32.mrf.mxu0
      %2420 = vmatprep.mubr.f32.mxu0 0.0
      %2421 = vmatmul.mubr.f32.gmra.mxu0 %v2268
      %v2422 = vpop.f32.mrf.mxu0
      %v2423 = vadd.f32 0.0, %v2422
      %v2424 = vpop.f32.mrf.mxu0
      %2425 = vmatprep.mubr.f32.mxu0 0.0
      %2426 = vmatmul.mubr.f32.gmra.mxu0 %v2271
      %v2427 = vpop.f32.mrf.mxu0
      %v2428 = vadd.f32 0.0, %v2427
      %v2429 = vpop.f32.mrf.mxu0
      %2430 = vmatprep.mubr.f32.mxu0 0.0
      %2431 = vmatmul.mubr.f32.gmra.mxu0 %v2274
      %v2432 = vpop.f32.mrf.mxu0
      %v2433 = vadd.f32 0.0, %v2432
      %v2434 = vpop.f32.mrf.mxu0
      %2435 = vmatprep.mubr.f32.mxu0 0.0
      %2436 = vmatmul.mubr.f32.gmra.mxu0 %v2277
      %v2437 = vpop.f32.mrf.mxu0
      %v2438 = vadd.f32 0.0, %v2437
      %v2439 = vpop.f32.mrf.mxu0
      %2440 = vmatprep.mubr.f32.mxu0 0.0
      %2441 = vmatmul.mubr.f32.gmra.mxu0 %v2280
      %v2442 = vpop.f32.mrf.mxu0
      %v2443 = vadd.f32 0.0, %v2442
      %v2444 = vpop.f32.mrf.mxu0
      %2445 = vmatprep.mubr.f32.mxu0 0.0
      %2446 = vmatmul.mubr.f32.gmra.mxu0 %v2283
      %v2447 = vpop.f32.mrf.mxu0
      %v2448 = vadd.f32 0.0, %v2447
      %v2449 = vpop.f32.mrf.mxu0
      %2450 = vmatprep.mubr.f32.mxu0 0.0
      %2451 = vmatmul.mubr.f32.gmra.mxu0 %v2286
      %v2452 = vpop.f32.mrf.mxu0
      %v2453 = vadd.f32 0.0, %v2452
      %v2454 = vpop.f32.mrf.mxu0
      %2455 = vdwg.mxu0
      %v2456 = vadd.f32 %v2186, %v2358
      %v2457 = vadd.f32 %v2187, %v2363
      %v2458 = vadd.f32 %v2188, %v2368
      %v2459 = vadd.f32 %v2189, %v2373
      %v2460 = vadd.f32 %v2190, %v2378
      %v2461 = vadd.f32 %v2191, %v2383
      %v2462 = vadd.f32 %v2192, %v2388
      %v2463 = vadd.f32 %v2193, %v2393
      %v2464 = vadd.f32 %v2194, %v2398
      %v2465 = vadd.f32 %v2195, %v2403
      %v2466 = vadd.f32 %v2196, %v2408
      %v2467 = vadd.f32 %v2197, %v2413
      %v2468 = vadd.f32 %v2198, %v2418
      %v2469 = vadd.f32 %v2199, %v2423
      %v2470 = vadd.f32 %v2200, %v2428
      %v2471 = vadd.f32 %v2201, %v2433
      %v2472 = vadd.f32 %v2202, %v2438
      %v2473 = vadd.f32 %v2203, %v2443
      %v2474 = vadd.f32 %v2204, %v2448
      %v2475 = vadd.f32 %v2205, %v2453
      %v2476 = vld [vmem:[%s518 + $0x1] sm:$0xff]
      %v2477 = vld [vmem:[%s518 + $0x9] sm:$0xff]
      %v2478 = vld [vmem:[%s518 + $0x19] sm:$0xff]
      %v2479 = vld [vmem:[%s518 + $0x21] sm:$0xff]
      %v2480 = vld [vmem:[%s518 + $0x31] sm:$0xff]
      %v2481 = vld [vmem:[%s518 + $0x39] sm:$0xff]
      %v2482 = vld [vmem:[%s518 + $0x49] sm:$0xff]
      %v2483 = vld [vmem:[%s518 + $0x51] sm:$0xff]
      %v2484 = vld [vmem:[%s518 + $0x61] sm:$0xff]
      %v2485 = vld [vmem:[%s518 + $0x69] sm:$0xff]
      %v2486 = vld [vmem:[%s518 + $0x79] sm:$0xff]
      %v2487 = vld [vmem:[%s518 + $0x81] sm:$0xff]
      %v2488 = vld [vmem:[%s518 + $0x91] sm:$0xff]
      %v2489 = vld [vmem:[%s518 + $0x99] sm:$0xff]
      %v2490 = vld [vmem:[%s518 + $0xa9] sm:$0xff]
      %v2491 = vld [vmem:[%s518 + $0xb1] sm:$0xff]
      %v2492 = vld [vmem:[%s518 + $0xc1] sm:$0xff]
      %v2493 = vld [vmem:[%s518 + $0xc9] sm:$0xff]
      %v2494 = vld [vmem:[%s518 + $0xd9] sm:$0xff]
      %v2495 = vld [vmem:[%s518 + $0xe1] sm:$0xff]
      %s2496 = scalar_lea.vmem %s3, 28
      %v2497 = vld [vmem:[%s2496] sm:$0xf]
      %v2499 = vsel %vm519, %v2476, 0
      %v2502 = vsel %vm519, %v2477, 0
      %v2505 = vsel %vm519, %v2478, 0
      %v2508 = vsel %vm519, %v2479, 0
      %v2511 = vsel %vm519, %v2480, 0
      %v2514 = vsel %vm519, %v2481, 0
      %v2517 = vsel %vm519, %v2482, 0
      %v2520 = vsel %vm519, %v2483, 0
      %v2523 = vsel %vm519, %v2484, 0
      %v2526 = vsel %vm519, %v2485, 0
      %v2529 = vsel %vm519, %v2486, 0
      %v2532 = vsel %vm519, %v2487, 0
      %v2535 = vsel %vm519, %v2488, 0
      %v2538 = vsel %vm519, %v2489, 0
      %v2541 = vsel %vm519, %v2490, 0
      %v2544 = vsel %vm519, %v2491, 0
      %v2547 = vsel %vm519, %v2492, 0
      %v2550 = vsel %vm519, %v2493, 0
      %v2553 = vsel %vm519, %v2494, 0
      %v2556 = vsel %vm519, %v2495, 0
      %v2559 = vsel %vm666, %v2497, 0
      %2561 = vmatprep.subr.mxu0 0.0
      %2562 = vmatpush1.msra.mxu0 0.0
      %2563 = vmatprep.subr.mxu0 0.0
      %2564 = vmatpush1.msra.mxu0 0.0
      %2565 = vmatprep.subr.mxu0 0.0
      %2566 = vmatpush1.msra.mxu0 0.0
      %2567 = vmatprep.subr.mxu0 0.0
      %2568 = vmatpush1.msra.mxu0 0.0
      %2569 = vmatprep.subr.mxu0 0.0
      %2570 = vmatpush1.msra.mxu0 0.0
      %2571 = vmatprep.subr.mxu0 0.0
      %2572 = vmatpush1.msra.mxu0 0.0
      %2573 = vmatprep.subr.mxu0 0.0
      %2574 = vmatpush1.msra.mxu0 0.0
      %2575 = vmatprep.subr.mxu0 0.0
      %2576 = vmatpush1.msra.mxu0 0.0
      %2577 = vmatprep.subr.mxu0 0.0
      %2578 = vmatpush1.msra.mxu0 0.0
      %2579 = vmatprep.subr.mxu0 0.0
      %2580 = vmatpush1.msra.mxu0 0.0
      %2581 = vmatprep.subr.mxu0 0.0
      %2582 = vmatpush1.msra.mxu0 0.0
      %2583 = vmatprep.subr.mxu0 0.0
      %2584 = vmatpush1.msra.mxu0 0.0
      %2585 = vmatprep.subr.mxu0 0.0
      %2586 = vmatpush1.msra.mxu0 0.0
      %2587 = vmatprep.subr.mxu0 0.0
      %2588 = vmatpush1.msra.mxu0 0.0
      %2589 = vmatprep.subr.mxu0 0.0
      %2590 = vmatpush1.msra.mxu0 0.0
      %2591 = vmatprep.subr.mxu0 0.0
      %2592 = vmatpush1.msra.mxu0 %v2559
      %2593 = vmatprep.subr.mxu0 0.0
      %2594 = vmatpush2.msra.mxu0 0.0
      %2595 = vmatprep.subr.mxu0 0.0
      %2596 = vmatpush2.msra.mxu0 0.0
      %2597 = vmatprep.subr.mxu0 0.0
      %2598 = vmatpush2.msra.mxu0 0.0
      %2599 = vmatprep.subr.mxu0 0.0
      %2600 = vmatpush2.msra.mxu0 0.0
      %2601 = vmatprep.subr.mxu0 0.0
      %2602 = vmatpush2.msra.mxu0 0.0
      %2603 = vmatprep.subr.mxu0 0.0
      %2604 = vmatpush2.msra.mxu0 0.0
      %2605 = vmatprep.subr.mxu0 0.0
      %2606 = vmatpush2.msra.mxu0 0.0
      %2607 = vmatprep.subr.mxu0 0.0
      %2608 = vmatpush2.msra.mxu0 0.0
      %2609 = vmatprep.subr.mxu0 0.0
      %2610 = vmatpush2.msra.mxu0 0.0
      %2611 = vmatprep.subr.mxu0 0.0
      %2612 = vmatpush2.msra.mxu0 0.0
      %2613 = vmatprep.subr.mxu0 0.0
      %2614 = vmatpush2.msra.mxu0 0.0
      %2615 = vmatprep.subr.mxu0 0.0
      %2616 = vmatpush2.msra.mxu0 0.0
      %2617 = vmatprep.subr.mxu0 0.0
      %2618 = vmatpush2.msra.mxu0 0.0
      %2619 = vmatprep.subr.mxu0 0.0
      %2620 = vmatpush2.msra.mxu0 0.0
      %2621 = vmatprep.subr.mxu0 0.0
      %2622 = vmatpush2.msra.mxu0 0.0
      %2623 = vmatprep.subr.mxu0 0.0
      %2624 = vmatpush2.msra.mxu0 0.0
      %2625 = vmatprep.mubr.f32.mxu0 0.0
      %2626 = vmatmul.mubr.f32.gmra.mxu0 %v2499
      %v2627 = vpop.f32.mrf.mxu0
      %v2628 = vadd.f32 0.0, %v2627
      %v2629 = vpop.f32.mrf.mxu0
      %2630 = vmatprep.mubr.f32.mxu0 0.0
      %2631 = vmatmul.mubr.f32.gmra.mxu0 %v2502
      %v2632 = vpop.f32.mrf.mxu0
      %v2633 = vadd.f32 0.0, %v2632
      %v2634 = vpop.f32.mrf.mxu0
      %2635 = vmatprep.mubr.f32.mxu0 0.0
      %2636 = vmatmul.mubr.f32.gmra.mxu0 %v2505
      %v2637 = vpop.f32.mrf.mxu0
      %v2638 = vadd.f32 0.0, %v2637
      %v2639 = vpop.f32.mrf.mxu0
      %2640 = vmatprep.mubr.f32.mxu0 0.0
      %2641 = vmatmul.mubr.f32.gmra.mxu0 %v2508
      %v2642 = vpop.f32.mrf.mxu0
      %v2643 = vadd.f32 0.0, %v2642
      %v2644 = vpop.f32.mrf.mxu0
      %2645 = vmatprep.mubr.f32.mxu0 0.0
      %2646 = vmatmul.mubr.f32.gmra.mxu0 %v2511
      %v2647 = vpop.f32.mrf.mxu0
      %v2648 = vadd.f32 0.0, %v2647
      %v2649 = vpop.f32.mrf.mxu0
      %2650 = vmatprep.mubr.f32.mxu0 0.0
      %2651 = vmatmul.mubr.f32.gmra.mxu0 %v2514
      %v2652 = vpop.f32.mrf.mxu0
      %v2653 = vadd.f32 0.0, %v2652
      %v2654 = vpop.f32.mrf.mxu0
      %2655 = vmatprep.mubr.f32.mxu0 0.0
      %2656 = vmatmul.mubr.f32.gmra.mxu0 %v2517
      %v2657 = vpop.f32.mrf.mxu0
      %v2658 = vadd.f32 0.0, %v2657
      %v2659 = vpop.f32.mrf.mxu0
      %2660 = vmatprep.mubr.f32.mxu0 0.0
      %2661 = vmatmul.mubr.f32.gmra.mxu0 %v2520
      %v2662 = vpop.f32.mrf.mxu0
      %v2663 = vadd.f32 0.0, %v2662
      %v2664 = vpop.f32.mrf.mxu0
      %2665 = vmatprep.mubr.f32.mxu0 0.0
      %2666 = vmatmul.mubr.f32.gmra.mxu0 %v2523
      %v2667 = vpop.f32.mrf.mxu0
      %v2668 = vadd.f32 0.0, %v2667
      %v2669 = vpop.f32.mrf.mxu0
      %2670 = vmatprep.mubr.f32.mxu0 0.0
      %2671 = vmatmul.mubr.f32.gmra.mxu0 %v2526
      %v2672 = vpop.f32.mrf.mxu0
      %v2673 = vadd.f32 0.0, %v2672
      %v2674 = vpop.f32.mrf.mxu0
      %2675 = vmatprep.mubr.f32.mxu0 0.0
      %2676 = vmatmul.mubr.f32.gmra.mxu0 %v2529
      %v2677 = vpop.f32.mrf.mxu0
      %v2678 = vadd.f32 0.0, %v2677
      %v2679 = vpop.f32.mrf.mxu0
      %2680 = vmatprep.mubr.f32.mxu0 0.0
      %2681 = vmatmul.mubr.f32.gmra.mxu0 %v2532
      %v2682 = vpop.f32.mrf.mxu0
      %v2683 = vadd.f32 0.0, %v2682
      %v2684 = vpop.f32.mrf.mxu0
      %2685 = vmatprep.mubr.f32.mxu0 0.0
      %2686 = vmatmul.mubr.f32.gmra.mxu0 %v2535
      %v2687 = vpop.f32.mrf.mxu0
      %v2688 = vadd.f32 0.0, %v2687
      %v2689 = vpop.f32.mrf.mxu0
      %2690 = vmatprep.mubr.f32.mxu0 0.0
      %2691 = vmatmul.mubr.f32.gmra.mxu0 %v2538
      %v2692 = vpop.f32.mrf.mxu0
      %v2693 = vadd.f32 0.0, %v2692
      %v2694 = vpop.f32.mrf.mxu0
      %2695 = vmatprep.mubr.f32.mxu0 0.0
      %2696 = vmatmul.mubr.f32.gmra.mxu0 %v2541
      %v2697 = vpop.f32.mrf.mxu0
      %v2698 = vadd.f32 0.0, %v2697
      %v2699 = vpop.f32.mrf.mxu0
      %2700 = vmatprep.mubr.f32.mxu0 0.0
      %2701 = vmatmul.mubr.f32.gmra.mxu0 %v2544
      %v2702 = vpop.f32.mrf.mxu0
      %v2703 = vadd.f32 0.0, %v2702
      %v2704 = vpop.f32.mrf.mxu0
      %2705 = vmatprep.mubr.f32.mxu0 0.0
      %2706 = vmatmul.mubr.f32.gmra.mxu0 %v2547
      %v2707 = vpop.f32.mrf.mxu0
      %v2708 = vadd.f32 0.0, %v2707
      %v2709 = vpop.f32.mrf.mxu0
      %2710 = vmatprep.mubr.f32.mxu0 0.0
      %2711 = vmatmul.mubr.f32.gmra.mxu0 %v2550
      %v2712 = vpop.f32.mrf.mxu0
      %v2713 = vadd.f32 0.0, %v2712
      %v2714 = vpop.f32.mrf.mxu0
      %2715 = vmatprep.mubr.f32.mxu0 0.0
      %2716 = vmatmul.mubr.f32.gmra.mxu0 %v2553
      %v2717 = vpop.f32.mrf.mxu0
      %v2718 = vadd.f32 0.0, %v2717
      %v2719 = vpop.f32.mrf.mxu0
      %2720 = vmatprep.mubr.f32.mxu0 0.0
      %2721 = vmatmul.mubr.f32.gmra.mxu0 %v2556
      %v2722 = vpop.f32.mrf.mxu0
      %v2723 = vadd.f32 0.0, %v2722
      %v2724 = vpop.f32.mrf.mxu0
      %2725 = vdwg.mxu0
      %v2726 = vadd.f32 %v2456, %v2628
      %v2727 = vadd.f32 %v2457, %v2633
      %v2728 = vadd.f32 %v2458, %v2638
      %v2729 = vadd.f32 %v2459, %v2643
      %v2730 = vadd.f32 %v2460, %v2648
      %v2731 = vadd.f32 %v2461, %v2653
      %v2732 = vadd.f32 %v2462, %v2658
      %v2733 = vadd.f32 %v2463, %v2663
      %v2734 = vadd.f32 %v2464, %v2668
      %v2735 = vadd.f32 %v2465, %v2673
      %v2736 = vadd.f32 %v2466, %v2678
      %v2737 = vadd.f32 %v2467, %v2683
      %v2738 = vadd.f32 %v2468, %v2688
      %v2739 = vadd.f32 %v2469, %v2693
      %v2740 = vadd.f32 %v2470, %v2698
      %v2741 = vadd.f32 %v2471, %v2703
      %v2742 = vadd.f32 %v2472, %v2708
      %v2743 = vadd.f32 %v2473, %v2713
      %v2744 = vadd.f32 %v2474, %v2718
      %v2745 = vadd.f32 %v2475, %v2723
      %v2746 = vld [vmem:[%s518 + $0x2] sm:$0xff]
      %v2747 = vld [vmem:[%s518 + $0xa] sm:$0xff]
      %v2748 = vld [vmem:[%s518 + $0x1a] sm:$0xff]
      %v2749 = vld [vmem:[%s518 + $0x22] sm:$0xff]
      %v2750 = vld [vmem:[%s518 + $0x32] sm:$0xff]
      %v2751 = vld [vmem:[%s518 + $0x3a] sm:$0xff]
      %v2752 = vld [vmem:[%s518 + $0x4a] sm:$0xff]
      %v2753 = vld [vmem:[%s518 + $0x52] sm:$0xff]
      %v2754 = vld [vmem:[%s518 + $0x62] sm:$0xff]
      %v2755 = vld [vmem:[%s518 + $0x6a] sm:$0xff]
      %v2756 = vld [vmem:[%s518 + $0x7a] sm:$0xff]
      %v2757 = vld [vmem:[%s518 + $0x82] sm:$0xff]
      %v2758 = vld [vmem:[%s518 + $0x92] sm:$0xff]
      %v2759 = vld [vmem:[%s518 + $0x9a] sm:$0xff]
      %v2760 = vld [vmem:[%s518 + $0xaa] sm:$0xff]
      %v2761 = vld [vmem:[%s518 + $0xb2] sm:$0xff]
      %v2762 = vld [vmem:[%s518 + $0xc2] sm:$0xff]
      %v2763 = vld [vmem:[%s518 + $0xca] sm:$0xff]
      %v2764 = vld [vmem:[%s518 + $0xda] sm:$0xff]
      %v2765 = vld [vmem:[%s518 + $0xe2] sm:$0xff]
      %s2766 = scalar_lea.vmem %s3, 32
      %v2767 = vld [vmem:[%s2766] sm:$0xf]
      %v2769 = vsel %vm519, %v2746, 0
      %v2772 = vsel %vm519, %v2747, 0
      %v2775 = vsel %vm519, %v2748, 0
      %v2778 = vsel %vm519, %v2749, 0
      %v2781 = vsel %vm519, %v2750, 0
      %v2784 = vsel %vm519, %v2751, 0
      %v2787 = vsel %vm519, %v2752, 0
      %v2790 = vsel %vm519, %v2753, 0
      %v2793 = vsel %vm519, %v2754, 0
      %v2796 = vsel %vm519, %v2755, 0
      %v2799 = vsel %vm519, %v2756, 0
      %v2802 = vsel %vm519, %v2757, 0
      %v2805 = vsel %vm519, %v2758, 0
      %v2808 = vsel %vm519, %v2759, 0
      %v2811 = vsel %vm519, %v2760, 0
      %v2814 = vsel %vm519, %v2761, 0
      %v2817 = vsel %vm519, %v2762, 0
      %v2820 = vsel %vm519, %v2763, 0
      %v2823 = vsel %vm519, %v2764, 0
      %v2826 = vsel %vm519, %v2765, 0
      %v2829 = vsel %vm666, %v2767, 0
      %2831 = vmatprep.subr.mxu0 0.0
      %2832 = vmatpush1.msra.mxu0 0.0
      %2833 = vmatprep.subr.mxu0 0.0
      %2834 = vmatpush1.msra.mxu0 0.0
      %2835 = vmatprep.subr.mxu0 0.0
      %2836 = vmatpush1.msra.mxu0 0.0
      %2837 = vmatprep.subr.mxu0 0.0
      %2838 = vmatpush1.msra.mxu0 0.0
      %2839 = vmatprep.subr.mxu0 0.0
      %2840 = vmatpush1.msra.mxu0 0.0
      %2841 = vmatprep.subr.mxu0 0.0
      %2842 = vmatpush1.msra.mxu0 0.0
      %2843 = vmatprep.subr.mxu0 0.0
      %2844 = vmatpush1.msra.mxu0 0.0
      %2845 = vmatprep.subr.mxu0 0.0
      %2846 = vmatpush1.msra.mxu0 0.0
      %2847 = vmatprep.subr.mxu0 0.0
      %2848 = vmatpush1.msra.mxu0 0.0
      %2849 = vmatprep.subr.mxu0 0.0
      %2850 = vmatpush1.msra.mxu0 0.0
      %2851 = vmatprep.subr.mxu0 0.0
      %2852 = vmatpush1.msra.mxu0 0.0
      %2853 = vmatprep.subr.mxu0 0.0
      %2854 = vmatpush1.msra.mxu0 0.0
      %2855 = vmatprep.subr.mxu0 0.0
      %2856 = vmatpush1.msra.mxu0 0.0
      %2857 = vmatprep.subr.mxu0 0.0
      %2858 = vmatpush1.msra.mxu0 0.0
      %2859 = vmatprep.subr.mxu0 0.0
      %2860 = vmatpush1.msra.mxu0 0.0
      %2861 = vmatprep.subr.mxu0 0.0
      %2862 = vmatpush1.msra.mxu0 %v2829
      %2863 = vmatprep.subr.mxu0 0.0
      %2864 = vmatpush2.msra.mxu0 0.0
      %2865 = vmatprep.subr.mxu0 0.0
      %2866 = vmatpush2.msra.mxu0 0.0
      %2867 = vmatprep.subr.mxu0 0.0
      %2868 = vmatpush2.msra.mxu0 0.0
      %2869 = vmatprep.subr.mxu0 0.0
      %2870 = vmatpush2.msra.mxu0 0.0
      %2871 = vmatprep.subr.mxu0 0.0
      %2872 = vmatpush2.msra.mxu0 0.0
      %2873 = vmatprep.subr.mxu0 0.0
      %2874 = vmatpush2.msra.mxu0 0.0
      %2875 = vmatprep.subr.mxu0 0.0
      %2876 = vmatpush2.msra.mxu0 0.0
      %2877 = vmatprep.subr.mxu0 0.0
      %2878 = vmatpush2.msra.mxu0 0.0
      %2879 = vmatprep.subr.mxu0 0.0
      %2880 = vmatpush2.msra.mxu0 0.0
      %2881 = vmatprep.subr.mxu0 0.0
      %2882 = vmatpush2.msra.mxu0 0.0
      %2883 = vmatprep.subr.mxu0 0.0
      %2884 = vmatpush2.msra.mxu0 0.0
      %2885 = vmatprep.subr.mxu0 0.0
      %2886 = vmatpush2.msra.mxu0 0.0
      %2887 = vmatprep.subr.mxu0 0.0
      %2888 = vmatpush2.msra.mxu0 0.0
      %2889 = vmatprep.subr.mxu0 0.0
      %2890 = vmatpush2.msra.mxu0 0.0
      %2891 = vmatprep.subr.mxu0 0.0
      %2892 = vmatpush2.msra.mxu0 0.0
      %2893 = vmatprep.subr.mxu0 0.0
      %2894 = vmatpush2.msra.mxu0 0.0
      %2895 = vmatprep.mubr.f32.mxu0 0.0
      %2896 = vmatmul.mubr.f32.gmra.mxu0 %v2769
      %v2897 = vpop.f32.mrf.mxu0
      %v2898 = vadd.f32 0.0, %v2897
      %v2899 = vpop.f32.mrf.mxu0
      %2900 = vmatprep.mubr.f32.mxu0 0.0
      %2901 = vmatmul.mubr.f32.gmra.mxu0 %v2772
      %v2902 = vpop.f32.mrf.mxu0
      %v2903 = vadd.f32 0.0, %v2902
      %v2904 = vpop.f32.mrf.mxu0
      %2905 = vmatprep.mubr.f32.mxu0 0.0
      %2906 = vmatmul.mubr.f32.gmra.mxu0 %v2775
      %v2907 = vpop.f32.mrf.mxu0
      %v2908 = vadd.f32 0.0, %v2907
      %v2909 = vpop.f32.mrf.mxu0
      %2910 = vmatprep.mubr.f32.mxu0 0.0
      %2911 = vmatmul.mubr.f32.gmra.mxu0 %v2778
      %v2912 = vpop.f32.mrf.mxu0
      %v2913 = vadd.f32 0.0, %v2912
      %v2914 = vpop.f32.mrf.mxu0
      %2915 = vmatprep.mubr.f32.mxu0 0.0
      %2916 = vmatmul.mubr.f32.gmra.mxu0 %v2781
      %v2917 = vpop.f32.mrf.mxu0
      %v2918 = vadd.f32 0.0, %v2917
      %v2919 = vpop.f32.mrf.mxu0
      %2920 = vmatprep.mubr.f32.mxu0 0.0
      %2921 = vmatmul.mubr.f32.gmra.mxu0 %v2784
      %v2922 = vpop.f32.mrf.mxu0
      %v2923 = vadd.f32 0.0, %v2922
      %v2924 = vpop.f32.mrf.mxu0
      %2925 = vmatprep.mubr.f32.mxu0 0.0
      %2926 = vmatmul.mubr.f32.gmra.mxu0 %v2787
      %v2927 = vpop.f32.mrf.mxu0
      %v2928 = vadd.f32 0.0, %v2927
      %v2929 = vpop.f32.mrf.mxu0
      %2930 = vmatprep.mubr.f32.mxu0 0.0
      %2931 = vmatmul.mubr.f32.gmra.mxu0 %v2790
      %v2932 = vpop.f32.mrf.mxu0
      %v2933 = vadd.f32 0.0, %v2932
      %v2934 = vpop.f32.mrf.mxu0
      %2935 = vmatprep.mubr.f32.mxu0 0.0
      %2936 = vmatmul.mubr.f32.gmra.mxu0 %v2793
      %v2937 = vpop.f32.mrf.mxu0
      %v2938 = vadd.f32 0.0, %v2937
      %v2939 = vpop.f32.mrf.mxu0
      %2940 = vmatprep.mubr.f32.mxu0 0.0
      %2941 = vmatmul.mubr.f32.gmra.mxu0 %v2796
      %v2942 = vpop.f32.mrf.mxu0
      %v2943 = vadd.f32 0.0, %v2942
      %v2944 = vpop.f32.mrf.mxu0
      %2945 = vmatprep.mubr.f32.mxu0 0.0
      %2946 = vmatmul.mubr.f32.gmra.mxu0 %v2799
      %v2947 = vpop.f32.mrf.mxu0
      %v2948 = vadd.f32 0.0, %v2947
      %v2949 = vpop.f32.mrf.mxu0
      %2950 = vmatprep.mubr.f32.mxu0 0.0
      %2951 = vmatmul.mubr.f32.gmra.mxu0 %v2802
      %v2952 = vpop.f32.mrf.mxu0
      %v2953 = vadd.f32 0.0, %v2952
      %v2954 = vpop.f32.mrf.mxu0
      %2955 = vmatprep.mubr.f32.mxu0 0.0
      %2956 = vmatmul.mubr.f32.gmra.mxu0 %v2805
      %v2957 = vpop.f32.mrf.mxu0
      %v2958 = vadd.f32 0.0, %v2957
      %v2959 = vpop.f32.mrf.mxu0
      %2960 = vmatprep.mubr.f32.mxu0 0.0
      %2961 = vmatmul.mubr.f32.gmra.mxu0 %v2808
      %v2962 = vpop.f32.mrf.mxu0
      %v2963 = vadd.f32 0.0, %v2962
      %v2964 = vpop.f32.mrf.mxu0
      %2965 = vmatprep.mubr.f32.mxu0 0.0
      %2966 = vmatmul.mubr.f32.gmra.mxu0 %v2811
      %v2967 = vpop.f32.mrf.mxu0
      %v2968 = vadd.f32 0.0, %v2967
      %v2969 = vpop.f32.mrf.mxu0
      %2970 = vmatprep.mubr.f32.mxu0 0.0
      %2971 = vmatmul.mubr.f32.gmra.mxu0 %v2814
      %v2972 = vpop.f32.mrf.mxu0
      %v2973 = vadd.f32 0.0, %v2972
      %v2974 = vpop.f32.mrf.mxu0
      %2975 = vmatprep.mubr.f32.mxu0 0.0
      %2976 = vmatmul.mubr.f32.gmra.mxu0 %v2817
      %v2977 = vpop.f32.mrf.mxu0
      %v2978 = vadd.f32 0.0, %v2977
      %v2979 = vpop.f32.mrf.mxu0
      %2980 = vmatprep.mubr.f32.mxu0 0.0
      %2981 = vmatmul.mubr.f32.gmra.mxu0 %v2820
      %v2982 = vpop.f32.mrf.mxu0
      %v2983 = vadd.f32 0.0, %v2982
      %v2984 = vpop.f32.mrf.mxu0
      %2985 = vmatprep.mubr.f32.mxu0 0.0
      %2986 = vmatmul.mubr.f32.gmra.mxu0 %v2823
      %v2987 = vpop.f32.mrf.mxu0
      %v2988 = vadd.f32 0.0, %v2987
      %v2989 = vpop.f32.mrf.mxu0
      %2990 = vmatprep.mubr.f32.mxu0 0.0
      %2991 = vmatmul.mubr.f32.gmra.mxu0 %v2826
      %v2992 = vpop.f32.mrf.mxu0
      %v2993 = vadd.f32 0.0, %v2992
      %v2994 = vpop.f32.mrf.mxu0
      %2995 = vdwg.mxu0
      %v2996 = vadd.f32 %v2726, %v2898
      %v2997 = vadd.f32 %v2727, %v2903
      %v2998 = vadd.f32 %v2728, %v2908
      %v2999 = vadd.f32 %v2729, %v2913
      %v3000 = vadd.f32 %v2730, %v2918
      %v3001 = vadd.f32 %v2731, %v2923
      %v3002 = vadd.f32 %v2732, %v2928
      %v3003 = vadd.f32 %v2733, %v2933
      %v3004 = vadd.f32 %v2734, %v2938
      %v3005 = vadd.f32 %v2735, %v2943
      %v3006 = vadd.f32 %v2736, %v2948
      %v3007 = vadd.f32 %v2737, %v2953
      %v3008 = vadd.f32 %v2738, %v2958
      %v3009 = vadd.f32 %v2739, %v2963
      %v3010 = vadd.f32 %v2740, %v2968
      %v3011 = vadd.f32 %v2741, %v2973
      %v3012 = vadd.f32 %v2742, %v2978
      %v3013 = vadd.f32 %v2743, %v2983
      %v3014 = vadd.f32 %v2744, %v2988
      %v3015 = vadd.f32 %v2745, %v2993
      %v3016 = vmax.f32 %v2996, 0.0
      %v3017 = vmax.f32 %v2997, 0.0
      %v3018 = vmax.f32 %v2998, 0.0
      %v3019 = vmax.f32 %v2999, 0.0
      %v3020 = vmax.f32 %v3000, 0.0
      %v3021 = vmax.f32 %v3001, 0.0
      %v3022 = vmax.f32 %v3002, 0.0
      %v3023 = vmax.f32 %v3003, 0.0
      %v3024 = vmax.f32 %v3004, 0.0
      %v3025 = vmax.f32 %v3005, 0.0
      %v3026 = vmax.f32 %v3006, 0.0
      %v3027 = vmax.f32 %v3007, 0.0
      %v3028 = vmax.f32 %v3008, 0.0
      %v3029 = vmax.f32 %v3009, 0.0
      %v3030 = vmax.f32 %v3010, 0.0
      %v3031 = vmax.f32 %v3011, 0.0
      %v3032 = vmax.f32 %v3012, 0.0
      %v3033 = vmax.f32 %v3013, 0.0
      %v3034 = vmax.f32 %v3014, 0.0
      %v3035 = vmax.f32 %v3015, 0.0
      %3036 = vst.msk [vmem:[#allocation3 + $0x1] sm:$0xff] %vm519, %v3016
      %3037 = vst.msk [vmem:[#allocation3 + $0x9] sm:$0xff] %vm519, %v3017
      %3038 = vst.msk [vmem:[#allocation3 + $0x19] sm:$0xff] %vm519, %v3018
      %3039 = vst.msk [vmem:[#allocation3 + $0x21] sm:$0xff] %vm519, %v3019
      %3040 = vst.msk [vmem:[#allocation3 + $0x31] sm:$0xff] %vm519, %v3020
      %3041 = vst.msk [vmem:[#allocation3 + $0x39] sm:$0xff] %vm519, %v3021
      %3042 = vst.msk [vmem:[#allocation3 + $0x49] sm:$0xff] %vm519, %v3022
      %3043 = vst.msk [vmem:[#allocation3 + $0x51] sm:$0xff] %vm519, %v3023
      %3044 = vst.msk [vmem:[#allocation3 + $0x61] sm:$0xff] %vm519, %v3024
      %3045 = vst.msk [vmem:[#allocation3 + $0x69] sm:$0xff] %vm519, %v3025
      %3046 = vst.msk [vmem:[#allocation3 + $0x79] sm:$0xff] %vm519, %v3026
      %3047 = vst.msk [vmem:[#allocation3 + $0x81] sm:$0xff] %vm519, %v3027
      %3048 = vst.msk [vmem:[#allocation3 + $0x91] sm:$0xff] %vm519, %v3028
      %3049 = vst.msk [vmem:[#allocation3 + $0x99] sm:$0xff] %vm519, %v3029
      %3050 = vst.msk [vmem:[#allocation3 + $0xa9] sm:$0xff] %vm519, %v3030
      %3051 = vst.msk [vmem:[#allocation3 + $0xb1] sm:$0xff] %vm519, %v3031
      %3052 = vst.msk [vmem:[#allocation3 + $0xc1] sm:$0xff] %vm519, %v3032
      %3053 = vst.msk [vmem:[#allocation3 + $0xc9] sm:$0xff] %vm519, %v3033
      %3054 = vst.msk [vmem:[#allocation3 + $0xd9] sm:$0xff] %vm519, %v3034
      %3055 = vst.msk [vmem:[#allocation3 + $0xe1] sm:$0xff] %vm519, %v3035
      // Predicated region
      $region65: #{tpu_custom_call.1} parent=47 // pred_check
        %p3056 = pneg %p548
      $region66: #{tpu_custom_call.1} parent=47 // pred_check_branch
        %3058 = sbr.rel (%p3056) target = $region68
      $region67: #{tpu_custom_call.1} parent=47 // pred_region
        %3059 = vst.msk [vmem:[#allocation3] sm:$0xff] %vm519, 0.0
        %3060 = vst.msk [vmem:[#allocation3 + $0x8] sm:$0xff] %vm519, 0.0
        %vm3061 = vcmask 25600
        %3062 = vst.msk [vmem:[#allocation3 + $0x10] sm:$0x3] %vm3061, 0.0
      $region68: #{tpu_custom_call.1} parent=47 // pred_fallthru
        _
      // Predicated region
      $region69: #{tpu_custom_call.1} parent=47 // pred_check
        %p3063 = pneg %p569
      $region70: #{tpu_custom_call.1} parent=47 // pred_check_branch
        %3065 = sbr.rel (%p3063) target = $region72
      $region71: #{tpu_custom_call.1} parent=47 // pred_region
        %s3066 = scalar_lea.vmem [#allocation3], 216
        %3067 = vst.msk [vmem:[%s3066] sm:$0xff] %vm519, 0.0
        %3068 = vst.msk [vmem:[%s3066 + $0x8] sm:$0xff] %vm519, 0.0
        %vm3069 = vcmask 25600
        %3070 = vst.msk [vmem:[%s3066 + $0x10] sm:$0x3] %vm3069, 0.0
      $region72: #{tpu_custom_call.1} parent=47 // pred_fallthru
        _
      %v3071 = vld [vmem:[%s6] sm:$0x1]
      %v3073 = vlaneseq
      %v3074 = vshrl.u32 %v3073, 7
      %v3075 = vsub.s32 0, %v3074
      %v3076 = vrot.slane %v3071, %v3075
      %v3078 = vld [vmem:[#allocation3] sm:$0xff]
      %v3079 = vld [vmem:[#allocation3 + $0x8] sm:$0xff]
      %v3080 = vld [vmem:[#allocation3 + $0x18] sm:$0xff]
      %v3081 = vld [vmem:[#allocation3 + $0x20] sm:$0xff]
      %v3082 = vld [vmem:[#allocation3 + $0x30] sm:$0xff]
      %v3083 = vld [vmem:[#allocation3 + $0x38] sm:$0xff]
      %v3084 = vld [vmem:[#allocation3 + $0x48] sm:$0xff]
      %v3085 = vld [vmem:[#allocation3 + $0x50] sm:$0xff]
      %v3086 = vld [vmem:[#allocation3 + $0x60] sm:$0xff]
      %v3087 = vld [vmem:[#allocation3 + $0x68] sm:$0xff]
      %v3088 = vld [vmem:[#allocation3 + $0x78] sm:$0xff]
      %v3089 = vld [vmem:[#allocation3 + $0x80] sm:$0xff]
      %v3090 = vld [vmem:[#allocation3 + $0x90] sm:$0xff]
      %v3091 = vld [vmem:[#allocation3 + $0x98] sm:$0xff]
      %v3092 = vld [vmem:[#allocation3 + $0xa8] sm:$0xff]
      %v3093 = vld [vmem:[#allocation3 + $0xb0] sm:$0xff]
      %v3094 = vld [vmem:[%s5] sm:$0xf]
      %v3096 = vsel %vm519, %v3078, 0
      %v3099 = vsel %vm519, %v3079, 0
      %v3102 = vsel %vm519, %v3080, 0
      %v3105 = vsel %vm519, %v3081, 0
      %v3108 = vsel %vm519, %v3082, 0
      %v3111 = vsel %vm519, %v3083, 0
      %v3114 = vsel %vm519, %v3084, 0
      %v3117 = vsel %vm519, %v3085, 0
      %v3120 = vsel %vm519, %v3086, 0
      %v3123 = vsel %vm519, %v3087, 0
      %v3126 = vsel %vm519, %v3088, 0
      %v3129 = vsel %vm519, %v3089, 0
      %v3132 = vsel %vm519, %v3090, 0
      %v3135 = vsel %vm519, %v3091, 0
      %v3138 = vsel %vm519, %v3092, 0
      %v3141 = vsel %vm519, %v3093, 0
      %v3144 = vsel %vm666, %v3094, 0
      %3146 = vmatprep.subr.mxu0 0.0
      %3147 = vmatpush1.msra.mxu0 0.0
      %3148 = vmatprep.subr.mxu0 0.0
      %3149 = vmatpush1.msra.mxu0 0.0
      %3150 = vmatprep.subr.mxu0 0.0
      %3151 = vmatpush1.msra.mxu0 0.0
      %3152 = vmatprep.subr.mxu0 0.0
      %3153 = vmatpush1.msra.mxu0 0.0
      %3154 = vmatprep.subr.mxu0 0.0
      %3155 = vmatpush1.msra.mxu0 0.0
      %3156 = vmatprep.subr.mxu0 0.0
      %3157 = vmatpush1.msra.mxu0 0.0
      %3158 = vmatprep.subr.mxu0 0.0
      %3159 = vmatpush1.msra.mxu0 0.0
      %3160 = vmatprep.subr.mxu0 0.0
      %3161 = vmatpush1.msra.mxu0 0.0
      %3162 = vmatprep.subr.mxu0 0.0
      %3163 = vmatpush1.msra.mxu0 0.0
      %3164 = vmatprep.subr.mxu0 0.0
      %3165 = vmatpush1.msra.mxu0 0.0
      %3166 = vmatprep.subr.mxu0 0.0
      %3167 = vmatpush1.msra.mxu0 0.0
      %3168 = vmatprep.subr.mxu0 0.0
      %3169 = vmatpush1.msra.mxu0 0.0
      %3170 = vmatprep.subr.mxu0 0.0
      %3171 = vmatpush1.msra.mxu0 0.0
      %3172 = vmatprep.subr.mxu0 0.0
      %3173 = vmatpush1.msra.mxu0 0.0
      %3174 = vmatprep.subr.mxu0 0.0
      %3175 = vmatpush1.msra.mxu0 0.0
      %3176 = vmatprep.subr.mxu0 0.0
      %3177 = vmatpush1.msra.mxu0 %v3144
      %3178 = vmatprep.subr.mxu0 0.0
      %3179 = vmatpush2.msra.mxu0 0.0
      %3180 = vmatprep.subr.mxu0 0.0
      %3181 = vmatpush2.msra.mxu0 0.0
      %3182 = vmatprep.subr.mxu0 0.0
      %3183 = vmatpush2.msra.mxu0 0.0
      %3184 = vmatprep.subr.mxu0 0.0
      %3185 = vmatpush2.msra.mxu0 0.0
      %3186 = vmatprep.subr.mxu0 0.0
      %3187 = vmatpush2.msra.mxu0 0.0
      %3188 = vmatprep.subr.mxu0 0.0
      %3189 = vmatpush2.msra.mxu0 0.0
      %3190 = vmatprep.subr.mxu0 0.0
      %3191 = vmatpush2.msra.mxu0 0.0
      %3192 = vmatprep.subr.mxu0 0.0
      %3193 = vmatpush2.msra.mxu0 0.0
      %3194 = vmatprep.subr.mxu0 0.0
      %3195 = vmatpush2.msra.mxu0 0.0
      %3196 = vmatprep.subr.mxu0 0.0
      %3197 = vmatpush2.msra.mxu0 0.0
      %3198 = vmatprep.subr.mxu0 0.0
      %3199 = vmatpush2.msra.mxu0 0.0
      %3200 = vmatprep.subr.mxu0 0.0
      %3201 = vmatpush2.msra.mxu0 0.0
      %3202 = vmatprep.subr.mxu0 0.0
      %3203 = vmatpush2.msra.mxu0 0.0
      %3204 = vmatprep.subr.mxu0 0.0
      %3205 = vmatpush2.msra.mxu0 0.0
      %3206 = vmatprep.subr.mxu0 0.0
      %3207 = vmatpush2.msra.mxu0 0.0
      %3208 = vmatprep.subr.mxu0 0.0
      %3209 = vmatpush2.msra.mxu0 0.0
      %3210 = vmatprep.mubr.f32.mxu0 0.0
      %3211 = vmatmul.mubr.f32.gmra.mxu0 %v3096
      %v3212 = vpop.f32.mrf.mxu0
      %v3213 = vadd.f32 0.0, %v3212
      %v3214 = vpop.f32.mrf.mxu0
      %3215 = vmatprep.mubr.f32.mxu0 0.0
      %3216 = vmatmul.mubr.f32.gmra.mxu0 %v3099
      %v3217 = vpop.f32.mrf.mxu0
      %v3218 = vadd.f32 0.0, %v3217
      %v3219 = vpop.f32.mrf.mxu0
      %3220 = vmatprep.mubr.f32.mxu0 0.0
      %3221 = vmatmul.mubr.f32.gmra.mxu0 %v3102
      %v3222 = vpop.f32.mrf.mxu0
      %v3223 = vadd.f32 0.0, %v3222
      %v3224 = vpop.f32.mrf.mxu0
      %3225 = vmatprep.mubr.f32.mxu0 0.0
      %3226 = vmatmul.mubr.f32.gmra.mxu0 %v3105
      %v3227 = vpop.f32.mrf.mxu0
      %v3228 = vadd.f32 0.0, %v3227
      %v3229 = vpop.f32.mrf.mxu0
      %3230 = vmatprep.mubr.f32.mxu0 0.0
      %3231 = vmatmul.mubr.f32.gmra.mxu0 %v3108
      %v3232 = vpop.f32.mrf.mxu0
      %v3233 = vadd.f32 0.0, %v3232
      %v3234 = vpop.f32.mrf.mxu0
      %3235 = vmatprep.mubr.f32.mxu0 0.0
      %3236 = vmatmul.mubr.f32.gmra.mxu0 %v3111
      %v3237 = vpop.f32.mrf.mxu0
      %v3238 = vadd.f32 0.0, %v3237
      %v3239 = vpop.f32.mrf.mxu0
      %3240 = vmatprep.mubr.f32.mxu0 0.0
      %3241 = vmatmul.mubr.f32.gmra.mxu0 %v3114
      %v3242 = vpop.f32.mrf.mxu0
      %v3243 = vadd.f32 0.0, %v3242
      %v3244 = vpop.f32.mrf.mxu0
      %3245 = vmatprep.mubr.f32.mxu0 0.0
      %3246 = vmatmul.mubr.f32.gmra.mxu0 %v3117
      %v3247 = vpop.f32.mrf.mxu0
      %v3248 = vadd.f32 0.0, %v3247
      %v3249 = vpop.f32.mrf.mxu0
      %3250 = vmatprep.mubr.f32.mxu0 0.0
      %3251 = vmatmul.mubr.f32.gmra.mxu0 %v3120
      %v3252 = vpop.f32.mrf.mxu0
      %v3253 = vadd.f32 0.0, %v3252
      %v3254 = vpop.f32.mrf.mxu0
      %3255 = vmatprep.mubr.f32.mxu0 0.0
      %3256 = vmatmul.mubr.f32.gmra.mxu0 %v3123
      %v3257 = vpop.f32.mrf.mxu0
      %v3258 = vadd.f32 0.0, %v3257
      %v3259 = vpop.f32.mrf.mxu0
      %3260 = vmatprep.mubr.f32.mxu0 0.0
      %3261 = vmatmul.mubr.f32.gmra.mxu0 %v3126
      %v3262 = vpop.f32.mrf.mxu0
      %v3263 = vadd.f32 0.0, %v3262
      %v3264 = vpop.f32.mrf.mxu0
      %3265 = vmatprep.mubr.f32.mxu0 0.0
      %3266 = vmatmul.mubr.f32.gmra.mxu0 %v3129
      %v3267 = vpop.f32.mrf.mxu0
      %v3268 = vadd.f32 0.0, %v3267
      %v3269 = vpop.f32.mrf.mxu0
      %3270 = vmatprep.mubr.f32.mxu0 0.0
      %3271 = vmatmul.mubr.f32.gmra.mxu0 %v3132
      %v3272 = vpop.f32.mrf.mxu0
      %v3273 = vadd.f32 0.0, %v3272
      %v3274 = vpop.f32.mrf.mxu0
      %3275 = vmatprep.mubr.f32.mxu0 0.0
      %3276 = vmatmul.mubr.f32.gmra.mxu0 %v3135
      %v3277 = vpop.f32.mrf.mxu0
      %v3278 = vadd.f32 0.0, %v3277
      %v3279 = vpop.f32.mrf.mxu0
      %3280 = vmatprep.mubr.f32.mxu0 0.0
      %3281 = vmatmul.mubr.f32.gmra.mxu0 %v3138
      %v3282 = vpop.f32.mrf.mxu0
      %v3283 = vadd.f32 0.0, %v3282
      %v3284 = vpop.f32.mrf.mxu0
      %3285 = vmatprep.mubr.f32.mxu0 0.0
      %3286 = vmatmul.mubr.f32.gmra.mxu0 %v3141
      %v3287 = vpop.f32.mrf.mxu0
      %v3288 = vadd.f32 0.0, %v3287
      %v3289 = vpop.f32.mrf.mxu0
      %3290 = vdwg.mxu0
      %v3291 = vadd.f32 %v3076, %v3213
      %v3292 = vadd.f32 %v3076, %v3218
      %v3293 = vadd.f32 %v3076, %v3223
      %v3294 = vadd.f32 %v3076, %v3228
      %v3295 = vadd.f32 %v3076, %v3233
      %v3296 = vadd.f32 %v3076, %v3238
      %v3297 = vadd.f32 %v3076, %v3243
      %v3298 = vadd.f32 %v3076, %v3248
      %v3299 = vadd.f32 %v3076, %v3253
      %v3300 = vadd.f32 %v3076, %v3258
      %v3301 = vadd.f32 %v3076, %v3263
      %v3302 = vadd.f32 %v3076, %v3268
      %v3303 = vadd.f32 %v3076, %v3273
      %v3304 = vadd.f32 %v3076, %v3278
      %v3305 = vadd.f32 %v3076, %v3283
      %v3306 = vadd.f32 %v3076, %v3288
      %v3307 = vld [vmem:[#allocation3 + $0x1] sm:$0xff]
      %v3308 = vld [vmem:[#allocation3 + $0x9] sm:$0xff]
      %v3309 = vld [vmem:[#allocation3 + $0x19] sm:$0xff]
      %v3310 = vld [vmem:[#allocation3 + $0x21] sm:$0xff]
      %v3311 = vld [vmem:[#allocation3 + $0x31] sm:$0xff]
      %v3312 = vld [vmem:[#allocation3 + $0x39] sm:$0xff]
      %v3313 = vld [vmem:[#allocation3 + $0x49] sm:$0xff]
      %v3314 = vld [vmem:[#allocation3 + $0x51] sm:$0xff]
      %v3315 = vld [vmem:[#allocation3 + $0x61] sm:$0xff]
      %v3316 = vld [vmem:[#allocation3 + $0x69] sm:$0xff]
      %v3317 = vld [vmem:[#allocation3 + $0x79] sm:$0xff]
      %v3318 = vld [vmem:[#allocation3 + $0x81] sm:$0xff]
      %v3319 = vld [vmem:[#allocation3 + $0x91] sm:$0xff]
      %v3320 = vld [vmem:[#allocation3 + $0x99] sm:$0xff]
      %v3321 = vld [vmem:[#allocation3 + $0xa9] sm:$0xff]
      %v3322 = vld [vmem:[#allocation3 + $0xb1] sm:$0xff]
      %s3323 = scalar_lea.vmem %s5, 4
      %v3324 = vld [vmem:[%s3323] sm:$0xf]
      %v3326 = vsel %vm519, %v3307, 0
      %v3329 = vsel %vm519, %v3308, 0
      %v3332 = vsel %vm519, %v3309, 0
      %v3335 = vsel %vm519, %v3310, 0
      %v3338 = vsel %vm519, %v3311, 0
      %v3341 = vsel %vm519, %v3312, 0
      %v3344 = vsel %vm519, %v3313, 0
      %v3347 = vsel %vm519, %v3314, 0
      %v3350 = vsel %vm519, %v3315, 0
      %v3353 = vsel %vm519, %v3316, 0
      %v3356 = vsel %vm519, %v3317, 0
      %v3359 = vsel %vm519, %v3318, 0
      %v3362 = vsel %vm519, %v3319, 0
      %v3365 = vsel %vm519, %v3320, 0
      %v3368 = vsel %vm519, %v3321, 0
      %v3371 = vsel %vm519, %v3322, 0
      %v3374 = vsel %vm666, %v3324, 0
      %3376 = vmatprep.subr.mxu0 0.0
      %3377 = vmatpush1.msra.mxu0 0.0
      %3378 = vmatprep.subr.mxu0 0.0
      %3379 = vmatpush1.msra.mxu0 0.0
      %3380 = vmatprep.subr.mxu0 0.0
      %3381 = vmatpush1.msra.mxu0 0.0
      %3382 = vmatprep.subr.mxu0 0.0
      %3383 = vmatpush1.msra.mxu0 0.0
      %3384 = vmatprep.subr.mxu0 0.0
      %3385 = vmatpush1.msra.mxu0 0.0
      %3386 = vmatprep.subr.mxu0 0.0
      %3387 = vmatpush1.msra.mxu0 0.0
      %3388 = vmatprep.subr.mxu0 0.0
      %3389 = vmatpush1.msra.mxu0 0.0
      %3390 = vmatprep.subr.mxu0 0.0
      %3391 = vmatpush1.msra.mxu0 0.0
      %3392 = vmatprep.subr.mxu0 0.0
      %3393 = vmatpush1.msra.mxu0 0.0
      %3394 = vmatprep.subr.mxu0 0.0
      %3395 = vmatpush1.msra.mxu0 0.0
      %3396 = vmatprep.subr.mxu0 0.0
      %3397 = vmatpush1.msra.mxu0 0.0
      %3398 = vmatprep.subr.mxu0 0.0
      %3399 = vmatpush1.msra.mxu0 0.0
      %3400 = vmatprep.subr.mxu0 0.0
      %3401 = vmatpush1.msra.mxu0 0.0
      %3402 = vmatprep.subr.mxu0 0.0
      %3403 = vmatpush1.msra.mxu0 0.0
      %3404 = vmatprep.subr.mxu0 0.0
      %3405 = vmatpush1.msra.mxu0 0.0
      %3406 = vmatprep.subr.mxu0 0.0
      %3407 = vmatpush1.msra.mxu0 %v3374
      %3408 = vmatprep.subr.mxu0 0.0
      %3409 = vmatpush2.msra.mxu0 0.0
      %3410 = vmatprep.subr.mxu0 0.0
      %3411 = vmatpush2.msra.mxu0 0.0
      %3412 = vmatprep.subr.mxu0 0.0
      %3413 = vmatpush2.msra.mxu0 0.0
      %3414 = vmatprep.subr.mxu0 0.0
      %3415 = vmatpush2.msra.mxu0 0.0
      %3416 = vmatprep.subr.mxu0 0.0
      %3417 = vmatpush2.msra.mxu0 0.0
      %3418 = vmatprep.subr.mxu0 0.0
      %3419 = vmatpush2.msra.mxu0 0.0
      %3420 = vmatprep.subr.mxu0 0.0
      %3421 = vmatpush2.msra.mxu0 0.0
      %3422 = vmatprep.subr.mxu0 0.0
      %3423 = vmatpush2.msra.mxu0 0.0
      %3424 = vmatprep.subr.mxu0 0.0
      %3425 = vmatpush2.msra.mxu0 0.0
      %3426 = vmatprep.subr.mxu0 0.0
      %3427 = vmatpush2.msra.mxu0 0.0
      %3428 = vmatprep.subr.mxu0 0.0
      %3429 = vmatpush2.msra.mxu0 0.0
      %3430 = vmatprep.subr.mxu0 0.0
      %3431 = vmatpush2.msra.mxu0 0.0
      %3432 = vmatprep.subr.mxu0 0.0
      %3433 = vmatpush2.msra.mxu0 0.0
      %3434 = vmatprep.subr.mxu0 0.0
      %3435 = vmatpush2.msra.mxu0 0.0
      %3436 = vmatprep.subr.mxu0 0.0
      %3437 = vmatpush2.msra.mxu0 0.0
      %3438 = vmatprep.subr.mxu0 0.0
      %3439 = vmatpush2.msra.mxu0 0.0
      %3440 = vmatprep.mubr.f32.mxu0 0.0
      %3441 = vmatmul.mubr.f32.gmra.mxu0 %v3326
      %v3442 = vpop.f32.mrf.mxu0
      %v3443 = vadd.f32 0.0, %v3442
      %v3444 = vpop.f32.mrf.mxu0
      %3445 = vmatprep.mubr.f32.mxu0 0.0
      %3446 = vmatmul.mubr.f32.gmra.mxu0 %v3329
      %v3447 = vpop.f32.mrf.mxu0
      %v3448 = vadd.f32 0.0, %v3447
      %v3449 = vpop.f32.mrf.mxu0
      %3450 = vmatprep.mubr.f32.mxu0 0.0
      %3451 = vmatmul.mubr.f32.gmra.mxu0 %v3332
      %v3452 = vpop.f32.mrf.mxu0
      %v3453 = vadd.f32 0.0, %v3452
      %v3454 = vpop.f32.mrf.mxu0
      %3455 = vmatprep.mubr.f32.mxu0 0.0
      %3456 = vmatmul.mubr.f32.gmra.mxu0 %v3335
      %v3457 = vpop.f32.mrf.mxu0
      %v3458 = vadd.f32 0.0, %v3457
      %v3459 = vpop.f32.mrf.mxu0
      %3460 = vmatprep.mubr.f32.mxu0 0.0
      %3461 = vmatmul.mubr.f32.gmra.mxu0 %v3338
      %v3462 = vpop.f32.mrf.mxu0
      %v3463 = vadd.f32 0.0, %v3462
      %v3464 = vpop.f32.mrf.mxu0
      %3465 = vmatprep.mubr.f32.mxu0 0.0
      %3466 = vmatmul.mubr.f32.gmra.mxu0 %v3341
      %v3467 = vpop.f32.mrf.mxu0
      %v3468 = vadd.f32 0.0, %v3467
      %v3469 = vpop.f32.mrf.mxu0
      %3470 = vmatprep.mubr.f32.mxu0 0.0
      %3471 = vmatmul.mubr.f32.gmra.mxu0 %v3344
      %v3472 = vpop.f32.mrf.mxu0
      %v3473 = vadd.f32 0.0, %v3472
      %v3474 = vpop.f32.mrf.mxu0
      %3475 = vmatprep.mubr.f32.mxu0 0.0
      %3476 = vmatmul.mubr.f32.gmra.mxu0 %v3347
      %v3477 = vpop.f32.mrf.mxu0
      %v3478 = vadd.f32 0.0, %v3477
      %v3479 = vpop.f32.mrf.mxu0
      %3480 = vmatprep.mubr.f32.mxu0 0.0
      %3481 = vmatmul.mubr.f32.gmra.mxu0 %v3350
      %v3482 = vpop.f32.mrf.mxu0
      %v3483 = vadd.f32 0.0, %v3482
      %v3484 = vpop.f32.mrf.mxu0
      %3485 = vmatprep.mubr.f32.mxu0 0.0
      %3486 = vmatmul.mubr.f32.gmra.mxu0 %v3353
      %v3487 = vpop.f32.mrf.mxu0
      %v3488 = vadd.f32 0.0, %v3487
      %v3489 = vpop.f32.mrf.mxu0
      %3490 = vmatprep.mubr.f32.mxu0 0.0
      %3491 = vmatmul.mubr.f32.gmra.mxu0 %v3356
      %v3492 = vpop.f32.mrf.mxu0
      %v3493 = vadd.f32 0.0, %v3492
      %v3494 = vpop.f32.mrf.mxu0
      %3495 = vmatprep.mubr.f32.mxu0 0.0
      %3496 = vmatmul.mubr.f32.gmra.mxu0 %v3359
      %v3497 = vpop.f32.mrf.mxu0
      %v3498 = vadd.f32 0.0, %v3497
      %v3499 = vpop.f32.mrf.mxu0
      %3500 = vmatprep.mubr.f32.mxu0 0.0
      %3501 = vmatmul.mubr.f32.gmra.mxu0 %v3362
      %v3502 = vpop.f32.mrf.mxu0
      %v3503 = vadd.f32 0.0, %v3502
      %v3504 = vpop.f32.mrf.mxu0
      %3505 = vmatprep.mubr.f32.mxu0 0.0
      %3506 = vmatmul.mubr.f32.gmra.mxu0 %v3365
      %v3507 = vpop.f32.mrf.mxu0
      %v3508 = vadd.f32 0.0, %v3507
      %v3509 = vpop.f32.mrf.mxu0
      %3510 = vmatprep.mubr.f32.mxu0 0.0
      %3511 = vmatmul.mubr.f32.gmra.mxu0 %v3368
      %v3512 = vpop.f32.mrf.mxu0
      %v3513 = vadd.f32 0.0, %v3512
      %v3514 = vpop.f32.mrf.mxu0
      %3515 = vmatprep.mubr.f32.mxu0 0.0
      %3516 = vmatmul.mubr.f32.gmra.mxu0 %v3371
      %v3517 = vpop.f32.mrf.mxu0
      %v3518 = vadd.f32 0.0, %v3517
      %v3519 = vpop.f32.mrf.mxu0
      %3520 = vdwg.mxu0
      %v3521 = vadd.f32 %v3291, %v3443
      %v3522 = vadd.f32 %v3292, %v3448
      %v3523 = vadd.f32 %v3293, %v3453
      %v3524 = vadd.f32 %v3294, %v3458
      %v3525 = vadd.f32 %v3295, %v3463
      %v3526 = vadd.f32 %v3296, %v3468
      %v3527 = vadd.f32 %v3297, %v3473
      %v3528 = vadd.f32 %v3298, %v3478
      %v3529 = vadd.f32 %v3299, %v3483
      %v3530 = vadd.f32 %v3300, %v3488
      %v3531 = vadd.f32 %v3301, %v3493
      %v3532 = vadd.f32 %v3302, %v3498
      %v3533 = vadd.f32 %v3303, %v3503
      %v3534 = vadd.f32 %v3304, %v3508
      %v3535 = vadd.f32 %v3305, %v3513
      %v3536 = vadd.f32 %v3306, %v3518
      %v3537 = vld [vmem:[#allocation3 + $0x2] sm:$0xff]
      %v3538 = vld [vmem:[#allocation3 + $0xa] sm:$0xff]
      %v3539 = vld [vmem:[#allocation3 + $0x1a] sm:$0xff]
      %v3540 = vld [vmem:[#allocation3 + $0x22] sm:$0xff]
      %v3541 = vld [vmem:[#allocation3 + $0x32] sm:$0xff]
      %v3542 = vld [vmem:[#allocation3 + $0x3a] sm:$0xff]
      %v3543 = vld [vmem:[#allocation3 + $0x4a] sm:$0xff]
      %v3544 = vld [vmem:[#allocation3 + $0x52] sm:$0xff]
      %v3545 = vld [vmem:[#allocation3 + $0x62] sm:$0xff]
      %v3546 = vld [vmem:[#allocation3 + $0x6a] sm:$0xff]
      %v3547 = vld [vmem:[#allocation3 + $0x7a] sm:$0xff]
      %v3548 = vld [vmem:[#allocation3 + $0x82] sm:$0xff]
      %v3549 = vld [vmem:[#allocation3 + $0x92] sm:$0xff]
      %v3550 = vld [vmem:[#allocation3 + $0x9a] sm:$0xff]
      %v3551 = vld [vmem:[#allocation3 + $0xaa] sm:$0xff]
      %v3552 = vld [vmem:[#allocation3 + $0xb2] sm:$0xff]
      %s3553 = scalar_lea.vmem %s5, 8
      %v3554 = vld [vmem:[%s3553] sm:$0xf]
      %v3556 = vsel %vm519, %v3537, 0
      %v3559 = vsel %vm519, %v3538, 0
      %v3562 = vsel %vm519, %v3539, 0
      %v3565 = vsel %vm519, %v3540, 0
      %v3568 = vsel %vm519, %v3541, 0
      %v3571 = vsel %vm519, %v3542, 0
      %v3574 = vsel %vm519, %v3543, 0
      %v3577 = vsel %vm519, %v3544, 0
      %v3580 = vsel %vm519, %v3545, 0
      %v3583 = vsel %vm519, %v3546, 0
      %v3586 = vsel %vm519, %v3547, 0
      %v3589 = vsel %vm519, %v3548, 0
      %v3592 = vsel %vm519, %v3549, 0
      %v3595 = vsel %vm519, %v3550, 0
      %v3598 = vsel %vm519, %v3551, 0
      %v3601 = vsel %vm519, %v3552, 0
      %v3604 = vsel %vm666, %v3554, 0
      %3606 = vmatprep.subr.mxu0 0.0
      %3607 = vmatpush1.msra.mxu0 0.0
      %3608 = vmatprep.subr.mxu0 0.0
      %3609 = vmatpush1.msra.mxu0 0.0
      %3610 = vmatprep.subr.mxu0 0.0
      %3611 = vmatpush1.msra.mxu0 0.0
      %3612 = vmatprep.subr.mxu0 0.0
      %3613 = vmatpush1.msra.mxu0 0.0
      %3614 = vmatprep.subr.mxu0 0.0
      %3615 = vmatpush1.msra.mxu0 0.0
      %3616 = vmatprep.subr.mxu0 0.0
      %3617 = vmatpush1.msra.mxu0 0.0
      %3618 = vmatprep.subr.mxu0 0.0
      %3619 = vmatpush1.msra.mxu0 0.0
      %3620 = vmatprep.subr.mxu0 0.0
      %3621 = vmatpush1.msra.mxu0 0.0
      %3622 = vmatprep.subr.mxu0 0.0
      %3623 = vmatpush1.msra.mxu0 0.0
      %3624 = vmatprep.subr.mxu0 0.0
      %3625 = vmatpush1.msra.mxu0 0.0
      %3626 = vmatprep.subr.mxu0 0.0
      %3627 = vmatpush1.msra.mxu0 0.0
      %3628 = vmatprep.subr.mxu0 0.0
      %3629 = vmatpush1.msra.mxu0 0.0
      %3630 = vmatprep.subr.mxu0 0.0
      %3631 = vmatpush1.msra.mxu0 0.0
      %3632 = vmatprep.subr.mxu0 0.0
      %3633 = vmatpush1.msra.mxu0 0.0
      %3634 = vmatprep.subr.mxu0 0.0
      %3635 = vmatpush1.msra.mxu0 0.0
      %3636 = vmatprep.subr.mxu0 0.0
      %3637 = vmatpush1.msra.mxu0 %v3604
      %3638 = vmatprep.subr.mxu0 0.0
      %3639 = vmatpush2.msra.mxu0 0.0
      %3640 = vmatprep.subr.mxu0 0.0
      %3641 = vmatpush2.msra.mxu0 0.0
      %3642 = vmatprep.subr.mxu0 0.0
      %3643 = vmatpush2.msra.mxu0 0.0
      %3644 = vmatprep.subr.mxu0 0.0
      %3645 = vmatpush2.msra.mxu0 0.0
      %3646 = vmatprep.subr.mxu0 0.0
      %3647 = vmatpush2.msra.mxu0 0.0
      %3648 = vmatprep.subr.mxu0 0.0
      %3649 = vmatpush2.msra.mxu0 0.0
      %3650 = vmatprep.subr.mxu0 0.0
      %3651 = vmatpush2.msra.mxu0 0.0
      %3652 = vmatprep.subr.mxu0 0.0
      %3653 = vmatpush2.msra.mxu0 0.0
      %3654 = vmatprep.subr.mxu0 0.0
      %3655 = vmatpush2.msra.mxu0 0.0
      %3656 = vmatprep.subr.mxu0 0.0
      %3657 = vmatpush2.msra.mxu0 0.0
      %3658 = vmatprep.subr.mxu0 0.0
      %3659 = vmatpush2.msra.mxu0 0.0
      %3660 = vmatprep.subr.mxu0 0.0
      %3661 = vmatpush2.msra.mxu0 0.0
      %3662 = vmatprep.subr.mxu0 0.0
      %3663 = vmatpush2.msra.mxu0 0.0
      %3664 = vmatprep.subr.mxu0 0.0
      %3665 = vmatpush2.msra.mxu0 0.0
      %3666 = vmatprep.subr.mxu0 0.0
      %3667 = vmatpush2.msra.mxu0 0.0
      %3668 = vmatprep.subr.mxu0 0.0
      %3669 = vmatpush2.msra.mxu0 0.0
      %3670 = vmatprep.mubr.f32.mxu0 0.0
      %3671 = vmatmul.mubr.f32.gmra.mxu0 %v3556
      %v3672 = vpop.f32.mrf.mxu0
      %v3673 = vadd.f32 0.0, %v3672
      %v3674 = vpop.f32.mrf.mxu0
      %3675 = vmatprep.mubr.f32.mxu0 0.0
      %3676 = vmatmul.mubr.f32.gmra.mxu0 %v3559
      %v3677 = vpop.f32.mrf.mxu0
      %v3678 = vadd.f32 0.0, %v3677
      %v3679 = vpop.f32.mrf.mxu0
      %3680 = vmatprep.mubr.f32.mxu0 0.0
      %3681 = vmatmul.mubr.f32.gmra.mxu0 %v3562
      %v3682 = vpop.f32.mrf.mxu0
      %v3683 = vadd.f32 0.0, %v3682
      %v3684 = vpop.f32.mrf.mxu0
      %3685 = vmatprep.mubr.f32.mxu0 0.0
      %3686 = vmatmul.mubr.f32.gmra.mxu0 %v3565
      %v3687 = vpop.f32.mrf.mxu0
      %v3688 = vadd.f32 0.0, %v3687
      %v3689 = vpop.f32.mrf.mxu0
      %3690 = vmatprep.mubr.f32.mxu0 0.0
      %3691 = vmatmul.mubr.f32.gmra.mxu0 %v3568
      %v3692 = vpop.f32.mrf.mxu0
      %v3693 = vadd.f32 0.0, %v3692
      %v3694 = vpop.f32.mrf.mxu0
      %3695 = vmatprep.mubr.f32.mxu0 0.0
      %3696 = vmatmul.mubr.f32.gmra.mxu0 %v3571
      %v3697 = vpop.f32.mrf.mxu0
      %v3698 = vadd.f32 0.0, %v3697
      %v3699 = vpop.f32.mrf.mxu0
      %3700 = vmatprep.mubr.f32.mxu0 0.0
      %3701 = vmatmul.mubr.f32.gmra.mxu0 %v3574
      %v3702 = vpop.f32.mrf.mxu0
      %v3703 = vadd.f32 0.0, %v3702
      %v3704 = vpop.f32.mrf.mxu0
      %3705 = vmatprep.mubr.f32.mxu0 0.0
      %3706 = vmatmul.mubr.f32.gmra.mxu0 %v3577
      %v3707 = vpop.f32.mrf.mxu0
      %v3708 = vadd.f32 0.0, %v3707
      %v3709 = vpop.f32.mrf.mxu0
      %3710 = vmatprep.mubr.f32.mxu0 0.0
      %3711 = vmatmul.mubr.f32.gmra.mxu0 %v3580
      %v3712 = vpop.f32.mrf.mxu0
      %v3713 = vadd.f32 0.0, %v3712
      %v3714 = vpop.f32.mrf.mxu0
      %3715 = vmatprep.mubr.f32.mxu0 0.0
      %3716 = vmatmul.mubr.f32.gmra.mxu0 %v3583
      %v3717 = vpop.f32.mrf.mxu0
      %v3718 = vadd.f32 0.0, %v3717
      %v3719 = vpop.f32.mrf.mxu0
      %3720 = vmatprep.mubr.f32.mxu0 0.0
      %3721 = vmatmul.mubr.f32.gmra.mxu0 %v3586
      %v3722 = vpop.f32.mrf.mxu0
      %v3723 = vadd.f32 0.0, %v3722
      %v3724 = vpop.f32.mrf.mxu0
      %3725 = vmatprep.mubr.f32.mxu0 0.0
      %3726 = vmatmul.mubr.f32.gmra.mxu0 %v3589
      %v3727 = vpop.f32.mrf.mxu0
      %v3728 = vadd.f32 0.0, %v3727
      %v3729 = vpop.f32.mrf.mxu0
      %3730 = vmatprep.mubr.f32.mxu0 0.0
      %3731 = vmatmul.mubr.f32.gmra.mxu0 %v3592
      %v3732 = vpop.f32.mrf.mxu0
      %v3733 = vadd.f32 0.0, %v3732
      %v3734 = vpop.f32.mrf.mxu0
      %3735 = vmatprep.mubr.f32.mxu0 0.0
      %3736 = vmatmul.mubr.f32.gmra.mxu0 %v3595
      %v3737 = vpop.f32.mrf.mxu0
      %v3738 = vadd.f32 0.0, %v3737
      %v3739 = vpop.f32.mrf.mxu0
      %3740 = vmatprep.mubr.f32.mxu0 0.0
      %3741 = vmatmul.mubr.f32.gmra.mxu0 %v3598
      %v3742 = vpop.f32.mrf.mxu0
      %v3743 = vadd.f32 0.0, %v3742
      %v3744 = vpop.f32.mrf.mxu0
      %3745 = vmatprep.mubr.f32.mxu0 0.0
      %3746 = vmatmul.mubr.f32.gmra.mxu0 %v3601
      %v3747 = vpop.f32.mrf.mxu0
      %v3748 = vadd.f32 0.0, %v3747
      %v3749 = vpop.f32.mrf.mxu0
      %3750 = vdwg.mxu0
      %v3751 = vadd.f32 %v3521, %v3673
      %v3752 = vadd.f32 %v3522, %v3678
      %v3753 = vadd.f32 %v3523, %v3683
      %v3754 = vadd.f32 %v3524, %v3688
      %v3755 = vadd.f32 %v3525, %v3693
      %v3756 = vadd.f32 %v3526, %v3698
      %v3757 = vadd.f32 %v3527, %v3703
      %v3758 = vadd.f32 %v3528, %v3708
      %v3759 = vadd.f32 %v3529, %v3713
      %v3760 = vadd.f32 %v3530, %v3718
      %v3761 = vadd.f32 %v3531, %v3723
      %v3762 = vadd.f32 %v3532, %v3728
      %v3763 = vadd.f32 %v3533, %v3733
      %v3764 = vadd.f32 %v3534, %v3738
      %v3765 = vadd.f32 %v3535, %v3743
      %v3766 = vadd.f32 %v3536, %v3748
      %s3767 = scalar_lea.vmem [#allocation3], 24
      %v3768 = vld [vmem:[%s3767] sm:$0xff]
      %v3769 = vld [vmem:[%s3767 + $0x8] sm:$0xff]
      %v3770 = vld [vmem:[%s3767 + $0x18] sm:$0xff]
      %v3771 = vld [vmem:[%s3767 + $0x20] sm:$0xff]
      %v3772 = vld [vmem:[%s3767 + $0x30] sm:$0xff]
      %v3773 = vld [vmem:[%s3767 + $0x38] sm:$0xff]
      %v3774 = vld [vmem:[%s3767 + $0x48] sm:$0xff]
      %v3775 = vld [vmem:[%s3767 + $0x50] sm:$0xff]
      %v3776 = vld [vmem:[%s3767 + $0x60] sm:$0xff]
      %v3777 = vld [vmem:[%s3767 + $0x68] sm:$0xff]
      %v3778 = vld [vmem:[%s3767 + $0x78] sm:$0xff]
      %v3779 = vld [vmem:[%s3767 + $0x80] sm:$0xff]
      %v3780 = vld [vmem:[%s3767 + $0x90] sm:$0xff]
      %v3781 = vld [vmem:[%s3767 + $0x98] sm:$0xff]
      %v3782 = vld [vmem:[%s3767 + $0xa8] sm:$0xff]
      %v3783 = vld [vmem:[%s3767 + $0xb0] sm:$0xff]
      %s3784 = scalar_lea.vmem %s5, 12
      %v3785 = vld [vmem:[%s3784] sm:$0xf]
      %v3787 = vsel %vm519, %v3768, 0
      %v3790 = vsel %vm519, %v3769, 0
      %v3793 = vsel %vm519, %v3770, 0
      %v3796 = vsel %vm519, %v3771, 0
      %v3799 = vsel %vm519, %v3772, 0
      %v3802 = vsel %vm519, %v3773, 0
      %v3805 = vsel %vm519, %v3774, 0
      %v3808 = vsel %vm519, %v3775, 0
      %v3811 = vsel %vm519, %v3776, 0
      %v3814 = vsel %vm519, %v3777, 0
      %v3817 = vsel %vm519, %v3778, 0
      %v3820 = vsel %vm519, %v3779, 0
      %v3823 = vsel %vm519, %v3780, 0
      %v3826 = vsel %vm519, %v3781, 0
      %v3829 = vsel %vm519, %v3782, 0
      %v3832 = vsel %vm519, %v3783, 0
      %v3835 = vsel %vm666, %v3785, 0
      %3837 = vmatprep.subr.mxu0 0.0
      %3838 = vmatpush1.msra.mxu0 0.0
      %3839 = vmatprep.subr.mxu0 0.0
      %3840 = vmatpush1.msra.mxu0 0.0
      %3841 = vmatprep.subr.mxu0 0.0
      %3842 = vmatpush1.msra.mxu0 0.0
      %3843 = vmatprep.subr.mxu0 0.0
      %3844 = vmatpush1.msra.mxu0 0.0
      %3845 = vmatprep.subr.mxu0 0.0
      %3846 = vmatpush1.msra.mxu0 0.0
      %3847 = vmatprep.subr.mxu0 0.0
      %3848 = vmatpush1.msra.mxu0 0.0
      %3849 = vmatprep.subr.mxu0 0.0
      %3850 = vmatpush1.msra.mxu0 0.0
      %3851 = vmatprep.subr.mxu0 0.0
      %3852 = vmatpush1.msra.mxu0 0.0
      %3853 = vmatprep.subr.mxu0 0.0
      %3854 = vmatpush1.msra.mxu0 0.0
      %3855 = vmatprep.subr.mxu0 0.0
      %3856 = vmatpush1.msra.mxu0 0.0
      %3857 = vmatprep.subr.mxu0 0.0
      %3858 = vmatpush1.msra.mxu0 0.0
      %3859 = vmatprep.subr.mxu0 0.0
      %3860 = vmatpush1.msra.mxu0 0.0
      %3861 = vmatprep.subr.mxu0 0.0
      %3862 = vmatpush1.msra.mxu0 0.0
      %3863 = vmatprep.subr.mxu0 0.0
      %3864 = vmatpush1.msra.mxu0 0.0
      %3865 = vmatprep.subr.mxu0 0.0
      %3866 = vmatpush1.msra.mxu0 0.0
      %3867 = vmatprep.subr.mxu0 0.0
      %3868 = vmatpush1.msra.mxu0 %v3835
      %3869 = vmatprep.subr.mxu0 0.0
      %3870 = vmatpush2.msra.mxu0 0.0
      %3871 = vmatprep.subr.mxu0 0.0
      %3872 = vmatpush2.msra.mxu0 0.0
      %3873 = vmatprep.subr.mxu0 0.0
      %3874 = vmatpush2.msra.mxu0 0.0
      %3875 = vmatprep.subr.mxu0 0.0
      %3876 = vmatpush2.msra.mxu0 0.0
      %3877 = vmatprep.subr.mxu0 0.0
      %3878 = vmatpush2.msra.mxu0 0.0
      %3879 = vmatprep.subr.mxu0 0.0
      %3880 = vmatpush2.msra.mxu0 0.0
      %3881 = vmatprep.subr.mxu0 0.0
      %3882 = vmatpush2.msra.mxu0 0.0
      %3883 = vmatprep.subr.mxu0 0.0
      %3884 = vmatpush2.msra.mxu0 0.0
      %3885 = vmatprep.subr.mxu0 0.0
      %3886 = vmatpush2.msra.mxu0 0.0
      %3887 = vmatprep.subr.mxu0 0.0
      %3888 = vmatpush2.msra.mxu0 0.0
      %3889 = vmatprep.subr.mxu0 0.0
      %3890 = vmatpush2.msra.mxu0 0.0
      %3891 = vmatprep.subr.mxu0 0.0
      %3892 = vmatpush2.msra.mxu0 0.0
      %3893 = vmatprep.subr.mxu0 0.0
      %3894 = vmatpush2.msra.mxu0 0.0
      %3895 = vmatprep.subr.mxu0 0.0
      %3896 = vmatpush2.msra.mxu0 0.0
      %3897 = vmatprep.subr.mxu0 0.0
      %3898 = vmatpush2.msra.mxu0 0.0
      %3899 = vmatprep.subr.mxu0 0.0
      %3900 = vmatpush2.msra.mxu0 0.0
      %3901 = vmatprep.mubr.f32.mxu0 0.0
      %3902 = vmatmul.mubr.f32.gmra.mxu0 %v3787
      %v3903 = vpop.f32.mrf.mxu0
      %v3904 = vadd.f32 0.0, %v3903
      %v3905 = vpop.f32.mrf.mxu0
      %3906 = vmatprep.mubr.f32.mxu0 0.0
      %3907 = vmatmul.mubr.f32.gmra.mxu0 %v3790
      %v3908 = vpop.f32.mrf.mxu0
      %v3909 = vadd.f32 0.0, %v3908
      %v3910 = vpop.f32.mrf.mxu0
      %3911 = vmatprep.mubr.f32.mxu0 0.0
      %3912 = vmatmul.mubr.f32.gmra.mxu0 %v3793
      %v3913 = vpop.f32.mrf.mxu0
      %v3914 = vadd.f32 0.0, %v3913
      %v3915 = vpop.f32.mrf.mxu0
      %3916 = vmatprep.mubr.f32.mxu0 0.0
      %3917 = vmatmul.mubr.f32.gmra.mxu0 %v3796
      %v3918 = vpop.f32.mrf.mxu0
      %v3919 = vadd.f32 0.0, %v3918
      %v3920 = vpop.f32.mrf.mxu0
      %3921 = vmatprep.mubr.f32.mxu0 0.0
      %3922 = vmatmul.mubr.f32.gmra.mxu0 %v3799
      %v3923 = vpop.f32.mrf.mxu0
      %v3924 = vadd.f32 0.0, %v3923
      %v3925 = vpop.f32.mrf.mxu0
      %3926 = vmatprep.mubr.f32.mxu0 0.0
      %3927 = vmatmul.mubr.f32.gmra.mxu0 %v3802
      %v3928 = vpop.f32.mrf.mxu0
      %v3929 = vadd.f32 0.0, %v3928
      %v3930 = vpop.f32.mrf.mxu0
      %3931 = vmatprep.mubr.f32.mxu0 0.0
      %3932 = vmatmul.mubr.f32.gmra.mxu0 %v3805
      %v3933 = vpop.f32.mrf.mxu0
      %v3934 = vadd.f32 0.0, %v3933
      %v3935 = vpop.f32.mrf.mxu0
      %3936 = vmatprep.mubr.f32.mxu0 0.0
      %3937 = vmatmul.mubr.f32.gmra.mxu0 %v3808
      %v3938 = vpop.f32.mrf.mxu0
      %v3939 = vadd.f32 0.0, %v3938
      %v3940 = vpop.f32.mrf.mxu0
      %3941 = vmatprep.mubr.f32.mxu0 0.0
      %3942 = vmatmul.mubr.f32.gmra.mxu0 %v3811
      %v3943 = vpop.f32.mrf.mxu0
      %v3944 = vadd.f32 0.0, %v3943
      %v3945 = vpop.f32.mrf.mxu0
      %3946 = vmatprep.mubr.f32.mxu0 0.0
      %3947 = vmatmul.mubr.f32.gmra.mxu0 %v3814
      %v3948 = vpop.f32.mrf.mxu0
      %v3949 = vadd.f32 0.0, %v3948
      %v3950 = vpop.f32.mrf.mxu0
      %3951 = vmatprep.mubr.f32.mxu0 0.0
      %3952 = vmatmul.mubr.f32.gmra.mxu0 %v3817
      %v3953 = vpop.f32.mrf.mxu0
      %v3954 = vadd.f32 0.0, %v3953
      %v3955 = vpop.f32.mrf.mxu0
      %3956 = vmatprep.mubr.f32.mxu0 0.0
      %3957 = vmatmul.mubr.f32.gmra.mxu0 %v3820
      %v3958 = vpop.f32.mrf.mxu0
      %v3959 = vadd.f32 0.0, %v3958
      %v3960 = vpop.f32.mrf.mxu0
      %3961 = vmatprep.mubr.f32.mxu0 0.0
      %3962 = vmatmul.mubr.f32.gmra.mxu0 %v3823
      %v3963 = vpop.f32.mrf.mxu0
      %v3964 = vadd.f32 0.0, %v3963
      %v3965 = vpop.f32.mrf.mxu0
      %3966 = vmatprep.mubr.f32.mxu0 0.0
      %3967 = vmatmul.mubr.f32.gmra.mxu0 %v3826
      %v3968 = vpop.f32.mrf.mxu0
      %v3969 = vadd.f32 0.0, %v3968
      %v3970 = vpop.f32.mrf.mxu0
      %3971 = vmatprep.mubr.f32.mxu0 0.0
      %3972 = vmatmul.mubr.f32.gmra.mxu0 %v3829
      %v3973 = vpop.f32.mrf.mxu0
      %v3974 = vadd.f32 0.0, %v3973
      %v3975 = vpop.f32.mrf.mxu0
      %3976 = vmatprep.mubr.f32.mxu0 0.0
      %3977 = vmatmul.mubr.f32.gmra.mxu0 %v3832
      %v3978 = vpop.f32.mrf.mxu0
      %v3979 = vadd.f32 0.0, %v3978
      %v3980 = vpop.f32.mrf.mxu0
      %3981 = vdwg.mxu0
      %v3982 = vadd.f32 %v3751, %v3904
      %v3983 = vadd.f32 %v3752, %v3909
      %v3984 = vadd.f32 %v3753, %v3914
      %v3985 = vadd.f32 %v3754, %v3919
      %v3986 = vadd.f32 %v3755, %v3924
      %v3987 = vadd.f32 %v3756, %v3929
      %v3988 = vadd.f32 %v3757, %v3934
      %v3989 = vadd.f32 %v3758, %v3939
      %v3990 = vadd.f32 %v3759, %v3944
      %v3991 = vadd.f32 %v3760, %v3949
      %v3992 = vadd.f32 %v3761, %v3954
      %v3993 = vadd.f32 %v3762, %v3959
      %v3994 = vadd.f32 %v3763, %v3964
      %v3995 = vadd.f32 %v3764, %v3969
      %v3996 = vadd.f32 %v3765, %v3974
      %v3997 = vadd.f32 %v3766, %v3979
      %v3998 = vld [vmem:[%s3767 + $0x1] sm:$0xff]
      %v3999 = vld [vmem:[%s3767 + $0x9] sm:$0xff]
      %v4000 = vld [vmem:[%s3767 + $0x19] sm:$0xff]
      %v4001 = vld [vmem:[%s3767 + $0x21] sm:$0xff]
      %v4002 = vld [vmem:[%s3767 + $0x31] sm:$0xff]
      %v4003 = vld [vmem:[%s3767 + $0x39] sm:$0xff]
      %v4004 = vld [vmem:[%s3767 + $0x49] sm:$0xff]
      %v4005 = vld [vmem:[%s3767 + $0x51] sm:$0xff]
      %v4006 = vld [vmem:[%s3767 + $0x61] sm:$0xff]
      %v4007 = vld [vmem:[%s3767 + $0x69] sm:$0xff]
      %v4008 = vld [vmem:[%s3767 + $0x79] sm:$0xff]
      %v4009 = vld [vmem:[%s3767 + $0x81] sm:$0xff]
      %v4010 = vld [vmem:[%s3767 + $0x91] sm:$0xff]
      %v4011 = vld [vmem:[%s3767 + $0x99] sm:$0xff]
      %v4012 = vld [vmem:[%s3767 + $0xa9] sm:$0xff]
      %v4013 = vld [vmem:[%s3767 + $0xb1] sm:$0xff]
      %s4014 = scalar_lea.vmem %s5, 16
      %v4015 = vld [vmem:[%s4014] sm:$0xf]
      %v4017 = vsel %vm519, %v3998, 0
      %v4020 = vsel %vm519, %v3999, 0
      %v4023 = vsel %vm519, %v4000, 0
      %v4026 = vsel %vm519, %v4001, 0
      %v4029 = vsel %vm519, %v4002, 0
      %v4032 = vsel %vm519, %v4003, 0
      %v4035 = vsel %vm519, %v4004, 0
      %v4038 = vsel %vm519, %v4005, 0
      %v4041 = vsel %vm519, %v4006, 0
      %v4044 = vsel %vm519, %v4007, 0
      %v4047 = vsel %vm519, %v4008, 0
      %v4050 = vsel %vm519, %v4009, 0
      %v4053 = vsel %vm519, %v4010, 0
      %v4056 = vsel %vm519, %v4011, 0
      %v4059 = vsel %vm519, %v4012, 0
      %v4062 = vsel %vm519, %v4013, 0
      %v4065 = vsel %vm666, %v4015, 0
      %4067 = vmatprep.subr.mxu0 0.0
      %4068 = vmatpush1.msra.mxu0 0.0
      %4069 = vmatprep.subr.mxu0 0.0
      %4070 = vmatpush1.msra.mxu0 0.0
      %4071 = vmatprep.subr.mxu0 0.0
      %4072 = vmatpush1.msra.mxu0 0.0
      %4073 = vmatprep.subr.mxu0 0.0
      %4074 = vmatpush1.msra.mxu0 0.0
      %4075 = vmatprep.subr.mxu0 0.0
      %4076 = vmatpush1.msra.mxu0 0.0
      %4077 = vmatprep.subr.mxu0 0.0
      %4078 = vmatpush1.msra.mxu0 0.0
      %4079 = vmatprep.subr.mxu0 0.0
      %4080 = vmatpush1.msra.mxu0 0.0
      %4081 = vmatprep.subr.mxu0 0.0
      %4082 = vmatpush1.msra.mxu0 0.0
      %4083 = vmatprep.subr.mxu0 0.0
      %4084 = vmatpush1.msra.mxu0 0.0
      %4085 = vmatprep.subr.mxu0 0.0
      %4086 = vmatpush1.msra.mxu0 0.0
      %4087 = vmatprep.subr.mxu0 0.0
      %4088 = vmatpush1.msra.mxu0 0.0
      %4089 = vmatprep.subr.mxu0 0.0
      %4090 = vmatpush1.msra.mxu0 0.0
      %4091 = vmatprep.subr.mxu0 0.0
      %4092 = vmatpush1.msra.mxu0 0.0
      %4093 = vmatprep.subr.mxu0 0.0
      %4094 = vmatpush1.msra.mxu0 0.0
      %4095 = vmatprep.subr.mxu0 0.0
      %4096 = vmatpush1.msra.mxu0 0.0
      %4097 = vmatprep.subr.mxu0 0.0
      %4098 = vmatpush1.msra.mxu0 %v4065
      %4099 = vmatprep.subr.mxu0 0.0
      %4100 = vmatpush2.msra.mxu0 0.0
      %4101 = vmatprep.subr.mxu0 0.0
      %4102 = vmatpush2.msra.mxu0 0.0
      %4103 = vmatprep.subr.mxu0 0.0
      %4104 = vmatpush2.msra.mxu0 0.0
      %4105 = vmatprep.subr.mxu0 0.0
      %4106 = vmatpush2.msra.mxu0 0.0
      %4107 = vmatprep.subr.mxu0 0.0
      %4108 = vmatpush2.msra.mxu0 0.0
      %4109 = vmatprep.subr.mxu0 0.0
      %4110 = vmatpush2.msra.mxu0 0.0
      %4111 = vmatprep.subr.mxu0 0.0
      %4112 = vmatpush2.msra.mxu0 0.0
      %4113 = vmatprep.subr.mxu0 0.0
      %4114 = vmatpush2.msra.mxu0 0.0
      %4115 = vmatprep.subr.mxu0 0.0
      %4116 = vmatpush2.msra.mxu0 0.0
      %4117 = vmatprep.subr.mxu0 0.0
      %4118 = vmatpush2.msra.mxu0 0.0
      %4119 = vmatprep.subr.mxu0 0.0
      %4120 = vmatpush2.msra.mxu0 0.0
      %4121 = vmatprep.subr.mxu0 0.0
      %4122 = vmatpush2.msra.mxu0 0.0
      %4123 = vmatprep.subr.mxu0 0.0
      %4124 = vmatpush2.msra.mxu0 0.0
      %4125 = vmatprep.subr.mxu0 0.0
      %4126 = vmatpush2.msra.mxu0 0.0
      %4127 = vmatprep.subr.mxu0 0.0
      %4128 = vmatpush2.msra.mxu0 0.0
      %4129 = vmatprep.subr.mxu0 0.0
      %4130 = vmatpush2.msra.mxu0 0.0
      %4131 = vmatprep.mubr.f32.mxu0 0.0
      %4132 = vmatmul.mubr.f32.gmra.mxu0 %v4017
      %v4133 = vpop.f32.mrf.mxu0
      %v4134 = vadd.f32 0.0, %v4133
      %v4135 = vpop.f32.mrf.mxu0
      %4136 = vmatprep.mubr.f32.mxu0 0.0
      %4137 = vmatmul.mubr.f32.gmra.mxu0 %v4020
      %v4138 = vpop.f32.mrf.mxu0
      %v4139 = vadd.f32 0.0, %v4138
      %v4140 = vpop.f32.mrf.mxu0
      %4141 = vmatprep.mubr.f32.mxu0 0.0
      %4142 = vmatmul.mubr.f32.gmra.mxu0 %v4023
      %v4143 = vpop.f32.mrf.mxu0
      %v4144 = vadd.f32 0.0, %v4143
      %v4145 = vpop.f32.mrf.mxu0
      %4146 = vmatprep.mubr.f32.mxu0 0.0
      %4147 = vmatmul.mubr.f32.gmra.mxu0 %v4026
      %v4148 = vpop.f32.mrf.mxu0
      %v4149 = vadd.f32 0.0, %v4148
      %v4150 = vpop.f32.mrf.mxu0
      %4151 = vmatprep.mubr.f32.mxu0 0.0
      %4152 = vmatmul.mubr.f32.gmra.mxu0 %v4029
      %v4153 = vpop.f32.mrf.mxu0
      %v4154 = vadd.f32 0.0, %v4153
      %v4155 = vpop.f32.mrf.mxu0
      %4156 = vmatprep.mubr.f32.mxu0 0.0
      %4157 = vmatmul.mubr.f32.gmra.mxu0 %v4032
      %v4158 = vpop.f32.mrf.mxu0
      %v4159 = vadd.f32 0.0, %v4158
      %v4160 = vpop.f32.mrf.mxu0
      %4161 = vmatprep.mubr.f32.mxu0 0.0
      %4162 = vmatmul.mubr.f32.gmra.mxu0 %v4035
      %v4163 = vpop.f32.mrf.mxu0
      %v4164 = vadd.f32 0.0, %v4163
      %v4165 = vpop.f32.mrf.mxu0
      %4166 = vmatprep.mubr.f32.mxu0 0.0
      %4167 = vmatmul.mubr.f32.gmra.mxu0 %v4038
      %v4168 = vpop.f32.mrf.mxu0
      %v4169 = vadd.f32 0.0, %v4168
      %v4170 = vpop.f32.mrf.mxu0
      %4171 = vmatprep.mubr.f32.mxu0 0.0
      %4172 = vmatmul.mubr.f32.gmra.mxu0 %v4041
      %v4173 = vpop.f32.mrf.mxu0
      %v4174 = vadd.f32 0.0, %v4173
      %v4175 = vpop.f32.mrf.mxu0
      %4176 = vmatprep.mubr.f32.mxu0 0.0
      %4177 = vmatmul.mubr.f32.gmra.mxu0 %v4044
      %v4178 = vpop.f32.mrf.mxu0
      %v4179 = vadd.f32 0.0, %v4178
      %v4180 = vpop.f32.mrf.mxu0
      %4181 = vmatprep.mubr.f32.mxu0 0.0
      %4182 = vmatmul.mubr.f32.gmra.mxu0 %v4047
      %v4183 = vpop.f32.mrf.mxu0
      %v4184 = vadd.f32 0.0, %v4183
      %v4185 = vpop.f32.mrf.mxu0
      %4186 = vmatprep.mubr.f32.mxu0 0.0
      %4187 = vmatmul.mubr.f32.gmra.mxu0 %v4050
      %v4188 = vpop.f32.mrf.mxu0
      %v4189 = vadd.f32 0.0, %v4188
      %v4190 = vpop.f32.mrf.mxu0
      %4191 = vmatprep.mubr.f32.mxu0 0.0
      %4192 = vmatmul.mubr.f32.gmra.mxu0 %v4053
      %v4193 = vpop.f32.mrf.mxu0
      %v4194 = vadd.f32 0.0, %v4193
      %v4195 = vpop.f32.mrf.mxu0
      %4196 = vmatprep.mubr.f32.mxu0 0.0
      %4197 = vmatmul.mubr.f32.gmra.mxu0 %v4056
      %v4198 = vpop.f32.mrf.mxu0
      %v4199 = vadd.f32 0.0, %v4198
      %v4200 = vpop.f32.mrf.mxu0
      %4201 = vmatprep.mubr.f32.mxu0 0.0
      %4202 = vmatmul.mubr.f32.gmra.mxu0 %v4059
      %v4203 = vpop.f32.mrf.mxu0
      %v4204 = vadd.f32 0.0, %v4203
      %v4205 = vpop.f32.mrf.mxu0
      %4206 = vmatprep.mubr.f32.mxu0 0.0
      %4207 = vmatmul.mubr.f32.gmra.mxu0 %v4062
      %v4208 = vpop.f32.mrf.mxu0
      %v4209 = vadd.f32 0.0, %v4208
      %v4210 = vpop.f32.mrf.mxu0
      %4211 = vdwg.mxu0
      %v4212 = vadd.f32 %v3982, %v4134
      %v4213 = vadd.f32 %v3983, %v4139
      %v4214 = vadd.f32 %v3984, %v4144
      %v4215 = vadd.f32 %v3985, %v4149
      %v4216 = vadd.f32 %v3986, %v4154
      %v4217 = vadd.f32 %v3987, %v4159
      %v4218 = vadd.f32 %v3988, %v4164
      %v4219 = vadd.f32 %v3989, %v4169
      %v4220 = vadd.f32 %v3990, %v4174
      %v4221 = vadd.f32 %v3991, %v4179
      %v4222 = vadd.f32 %v3992, %v4184
      %v4223 = vadd.f32 %v3993, %v4189
      %v4224 = vadd.f32 %v3994, %v4194
      %v4225 = vadd.f32 %v3995, %v4199
      %v4226 = vadd.f32 %v3996, %v4204
      %v4227 = vadd.f32 %v3997, %v4209
      %v4228 = vld [vmem:[%s3767 + $0x2] sm:$0xff]
      %v4229 = vld [vmem:[%s3767 + $0xa] sm:$0xff]
      %v4230 = vld [vmem:[%s3767 + $0x1a] sm:$0xff]
      %v4231 = vld [vmem:[%s3767 + $0x22] sm:$0xff]
      %v4232 = vld [vmem:[%s3767 + $0x32] sm:$0xff]
      %v4233 = vld [vmem:[%s3767 + $0x3a] sm:$0xff]
      %v4234 = vld [vmem:[%s3767 + $0x4a] sm:$0xff]
      %v4235 = vld [vmem:[%s3767 + $0x52] sm:$0xff]
      %v4236 = vld [vmem:[%s3767 + $0x62] sm:$0xff]
      %v4237 = vld [vmem:[%s3767 + $0x6a] sm:$0xff]
      %v4238 = vld [vmem:[%s3767 + $0x7a] sm:$0xff]
      %v4239 = vld [vmem:[%s3767 + $0x82] sm:$0xff]
      %v4240 = vld [vmem:[%s3767 + $0x92] sm:$0xff]
      %v4241 = vld [vmem:[%s3767 + $0x9a] sm:$0xff]
      %v4242 = vld [vmem:[%s3767 + $0xaa] sm:$0xff]
      %v4243 = vld [vmem:[%s3767 + $0xb2] sm:$0xff]
      %s4244 = scalar_lea.vmem %s5, 20
      %v4245 = vld [vmem:[%s4244] sm:$0xf]
      %v4247 = vsel %vm519, %v4228, 0
      %v4250 = vsel %vm519, %v4229, 0
      %v4253 = vsel %vm519, %v4230, 0
      %v4256 = vsel %vm519, %v4231, 0
      %v4259 = vsel %vm519, %v4232, 0
      %v4262 = vsel %vm519, %v4233, 0
      %v4265 = vsel %vm519, %v4234, 0
      %v4268 = vsel %vm519, %v4235, 0
      %v4271 = vsel %vm519, %v4236, 0
      %v4274 = vsel %vm519, %v4237, 0
      %v4277 = vsel %vm519, %v4238, 0
      %v4280 = vsel %vm519, %v4239, 0
      %v4283 = vsel %vm519, %v4240, 0
      %v4286 = vsel %vm519, %v4241, 0
      %v4289 = vsel %vm519, %v4242, 0
      %v4292 = vsel %vm519, %v4243, 0
      %v4295 = vsel %vm666, %v4245, 0
      %4297 = vmatprep.subr.mxu0 0.0
      %4298 = vmatpush1.msra.mxu0 0.0
      %4299 = vmatprep.subr.mxu0 0.0
      %4300 = vmatpush1.msra.mxu0 0.0
      %4301 = vmatprep.subr.mxu0 0.0
      %4302 = vmatpush1.msra.mxu0 0.0
      %4303 = vmatprep.subr.mxu0 0.0
      %4304 = vmatpush1.msra.mxu0 0.0
      %4305 = vmatprep.subr.mxu0 0.0
      %4306 = vmatpush1.msra.mxu0 0.0
      %4307 = vmatprep.subr.mxu0 0.0
      %4308 = vmatpush1.msra.mxu0 0.0
      %4309 = vmatprep.subr.mxu0 0.0
      %4310 = vmatpush1.msra.mxu0 0.0
      %4311 = vmatprep.subr.mxu0 0.0
      %4312 = vmatpush1.msra.mxu0 0.0
      %4313 = vmatprep.subr.mxu0 0.0
      %4314 = vmatpush1.msra.mxu0 0.0
      %4315 = vmatprep.subr.mxu0 0.0
      %4316 = vmatpush1.msra.mxu0 0.0
      %4317 = vmatprep.subr.mxu0 0.0
      %4318 = vmatpush1.msra.mxu0 0.0
      %4319 = vmatprep.subr.mxu0 0.0
      %4320 = vmatpush1.msra.mxu0 0.0
      %4321 = vmatprep.subr.mxu0 0.0
      %4322 = vmatpush1.msra.mxu0 0.0
      %4323 = vmatprep.subr.mxu0 0.0
      %4324 = vmatpush1.msra.mxu0 0.0
      %4325 = vmatprep.subr.mxu0 0.0
      %4326 = vmatpush1.msra.mxu0 0.0
      %4327 = vmatprep.subr.mxu0 0.0
      %4328 = vmatpush1.msra.mxu0 %v4295
      %4329 = vmatprep.subr.mxu0 0.0
      %4330 = vmatpush2.msra.mxu0 0.0
      %4331 = vmatprep.subr.mxu0 0.0
      %4332 = vmatpush2.msra.mxu0 0.0
      %4333 = vmatprep.subr.mxu0 0.0
      %4334 = vmatpush2.msra.mxu0 0.0
      %4335 = vmatprep.subr.mxu0 0.0
      %4336 = vmatpush2.msra.mxu0 0.0
      %4337 = vmatprep.subr.mxu0 0.0
      %4338 = vmatpush2.msra.mxu0 0.0
      %4339 = vmatprep.subr.mxu0 0.0
      %4340 = vmatpush2.msra.mxu0 0.0
      %4341 = vmatprep.subr.mxu0 0.0
      %4342 = vmatpush2.msra.mxu0 0.0
      %4343 = vmatprep.subr.mxu0 0.0
      %4344 = vmatpush2.msra.mxu0 0.0
      %4345 = vmatprep.subr.mxu0 0.0
      %4346 = vmatpush2.msra.mxu0 0.0
      %4347 = vmatprep.subr.mxu0 0.0
      %4348 = vmatpush2.msra.mxu0 0.0
      %4349 = vmatprep.subr.mxu0 0.0
      %4350 = vmatpush2.msra.mxu0 0.0
      %4351 = vmatprep.subr.mxu0 0.0
      %4352 = vmatpush2.msra.mxu0 0.0
      %4353 = vmatprep.subr.mxu0 0.0
      %4354 = vmatpush2.msra.mxu0 0.0
      %4355 = vmatprep.subr.mxu0 0.0
      %4356 = vmatpush2.msra.mxu0 0.0
      %4357 = vmatprep.subr.mxu0 0.0
      %4358 = vmatpush2.msra.mxu0 0.0
      %4359 = vmatprep.subr.mxu0 0.0
      %4360 = vmatpush2.msra.mxu0 0.0
      %4361 = vmatprep.mubr.f32.mxu0 0.0
      %4362 = vmatmul.mubr.f32.gmra.mxu0 %v4247
      %v4363 = vpop.f32.mrf.mxu0
      %v4364 = vadd.f32 0.0, %v4363
      %v4365 = vpop.f32.mrf.mxu0
      %4366 = vmatprep.mubr.f32.mxu0 0.0
      %4367 = vmatmul.mubr.f32.gmra.mxu0 %v4250
      %v4368 = vpop.f32.mrf.mxu0
      %v4369 = vadd.f32 0.0, %v4368
      %v4370 = vpop.f32.mrf.mxu0
      %4371 = vmatprep.mubr.f32.mxu0 0.0
      %4372 = vmatmul.mubr.f32.gmra.mxu0 %v4253
      %v4373 = vpop.f32.mrf.mxu0
      %v4374 = vadd.f32 0.0, %v4373
      %v4375 = vpop.f32.mrf.mxu0
      %4376 = vmatprep.mubr.f32.mxu0 0.0
      %4377 = vmatmul.mubr.f32.gmra.mxu0 %v4256
      %v4378 = vpop.f32.mrf.mxu0
      %v4379 = vadd.f32 0.0, %v4378
      %v4380 = vpop.f32.mrf.mxu0
      %4381 = vmatprep.mubr.f32.mxu0 0.0
      %4382 = vmatmul.mubr.f32.gmra.mxu0 %v4259
      %v4383 = vpop.f32.mrf.mxu0
      %v4384 = vadd.f32 0.0, %v4383
      %v4385 = vpop.f32.mrf.mxu0
      %4386 = vmatprep.mubr.f32.mxu0 0.0
      %4387 = vmatmul.mubr.f32.gmra.mxu0 %v4262
      %v4388 = vpop.f32.mrf.mxu0
      %v4389 = vadd.f32 0.0, %v4388
      %v4390 = vpop.f32.mrf.mxu0
      %4391 = vmatprep.mubr.f32.mxu0 0.0
      %4392 = vmatmul.mubr.f32.gmra.mxu0 %v4265
      %v4393 = vpop.f32.mrf.mxu0
      %v4394 = vadd.f32 0.0, %v4393
      %v4395 = vpop.f32.mrf.mxu0
      %4396 = vmatprep.mubr.f32.mxu0 0.0
      %4397 = vmatmul.mubr.f32.gmra.mxu0 %v4268
      %v4398 = vpop.f32.mrf.mxu0
      %v4399 = vadd.f32 0.0, %v4398
      %v4400 = vpop.f32.mrf.mxu0
      %4401 = vmatprep.mubr.f32.mxu0 0.0
      %4402 = vmatmul.mubr.f32.gmra.mxu0 %v4271
      %v4403 = vpop.f32.mrf.mxu0
      %v4404 = vadd.f32 0.0, %v4403
      %v4405 = vpop.f32.mrf.mxu0
      %4406 = vmatprep.mubr.f32.mxu0 0.0
      %4407 = vmatmul.mubr.f32.gmra.mxu0 %v4274
      %v4408 = vpop.f32.mrf.mxu0
      %v4409 = vadd.f32 0.0, %v4408
      %v4410 = vpop.f32.mrf.mxu0
      %4411 = vmatprep.mubr.f32.mxu0 0.0
      %4412 = vmatmul.mubr.f32.gmra.mxu0 %v4277
      %v4413 = vpop.f32.mrf.mxu0
      %v4414 = vadd.f32 0.0, %v4413
      %v4415 = vpop.f32.mrf.mxu0
      %4416 = vmatprep.mubr.f32.mxu0 0.0
      %4417 = vmatmul.mubr.f32.gmra.mxu0 %v4280
      %v4418 = vpop.f32.mrf.mxu0
      %v4419 = vadd.f32 0.0, %v4418
      %v4420 = vpop.f32.mrf.mxu0
      %4421 = vmatprep.mubr.f32.mxu0 0.0
      %4422 = vmatmul.mubr.f32.gmra.mxu0 %v4283
      %v4423 = vpop.f32.mrf.mxu0
      %v4424 = vadd.f32 0.0, %v4423
      %v4425 = vpop.f32.mrf.mxu0
      %4426 = vmatprep.mubr.f32.mxu0 0.0
      %4427 = vmatmul.mubr.f32.gmra.mxu0 %v4286
      %v4428 = vpop.f32.mrf.mxu0
      %v4429 = vadd.f32 0.0, %v4428
      %v4430 = vpop.f32.mrf.mxu0
      %4431 = vmatprep.mubr.f32.mxu0 0.0
      %4432 = vmatmul.mubr.f32.gmra.mxu0 %v4289
      %v4433 = vpop.f32.mrf.mxu0
      %v4434 = vadd.f32 0.0, %v4433
      %v4435 = vpop.f32.mrf.mxu0
      %4436 = vmatprep.mubr.f32.mxu0 0.0
      %4437 = vmatmul.mubr.f32.gmra.mxu0 %v4292
      %v4438 = vpop.f32.mrf.mxu0
      %v4439 = vadd.f32 0.0, %v4438
      %v4440 = vpop.f32.mrf.mxu0
      %4441 = vdwg.mxu0
      %v4442 = vadd.f32 %v4212, %v4364
      %v4443 = vadd.f32 %v4213, %v4369
      %v4444 = vadd.f32 %v4214, %v4374
      %v4445 = vadd.f32 %v4215, %v4379
      %v4446 = vadd.f32 %v4216, %v4384
      %v4447 = vadd.f32 %v4217, %v4389
      %v4448 = vadd.f32 %v4218, %v4394
      %v4449 = vadd.f32 %v4219, %v4399
      %v4450 = vadd.f32 %v4220, %v4404
      %v4451 = vadd.f32 %v4221, %v4409
      %v4452 = vadd.f32 %v4222, %v4414
      %v4453 = vadd.f32 %v4223, %v4419
      %v4454 = vadd.f32 %v4224, %v4424
      %v4455 = vadd.f32 %v4225, %v4429
      %v4456 = vadd.f32 %v4226, %v4434
      %v4457 = vadd.f32 %v4227, %v4439
      %s4458 = scalar_lea.vmem [#allocation3], 48
      %v4459 = vld [vmem:[%s4458] sm:$0xff]
      %v4460 = vld [vmem:[%s4458 + $0x8] sm:$0xff]
      %v4461 = vld [vmem:[%s4458 + $0x18] sm:$0xff]
      %v4462 = vld [vmem:[%s4458 + $0x20] sm:$0xff]
      %v4463 = vld [vmem:[%s4458 + $0x30] sm:$0xff]
      %v4464 = vld [vmem:[%s4458 + $0x38] sm:$0xff]
      %v4465 = vld [vmem:[%s4458 + $0x48] sm:$0xff]
      %v4466 = vld [vmem:[%s4458 + $0x50] sm:$0xff]
      %v4467 = vld [vmem:[%s4458 + $0x60] sm:$0xff]
      %v4468 = vld [vmem:[%s4458 + $0x68] sm:$0xff]
      %v4469 = vld [vmem:[%s4458 + $0x78] sm:$0xff]
      %v4470 = vld [vmem:[%s4458 + $0x80] sm:$0xff]
      %v4471 = vld [vmem:[%s4458 + $0x90] sm:$0xff]
      %v4472 = vld [vmem:[%s4458 + $0x98] sm:$0xff]
      %v4473 = vld [vmem:[%s4458 + $0xa8] sm:$0xff]
      %v4474 = vld [vmem:[%s4458 + $0xb0] sm:$0xff]
      %s4475 = scalar_lea.vmem %s5, 24
      %v4476 = vld [vmem:[%s4475] sm:$0xf]
      %v4478 = vsel %vm519, %v4459, 0
      %v4481 = vsel %vm519, %v4460, 0
      %v4484 = vsel %vm519, %v4461, 0
      %v4487 = vsel %vm519, %v4462, 0
      %v4490 = vsel %vm519, %v4463, 0
      %v4493 = vsel %vm519, %v4464, 0
      %v4496 = vsel %vm519, %v4465, 0
      %v4499 = vsel %vm519, %v4466, 0
      %v4502 = vsel %vm519, %v4467, 0
      %v4505 = vsel %vm519, %v4468, 0
      %v4508 = vsel %vm519, %v4469, 0
      %v4511 = vsel %vm519, %v4470, 0
      %v4514 = vsel %vm519, %v4471, 0
      %v4517 = vsel %vm519, %v4472, 0
      %v4520 = vsel %vm519, %v4473, 0
      %v4523 = vsel %vm519, %v4474, 0
      %v4526 = vsel %vm666, %v4476, 0
      %4528 = vmatprep.subr.mxu0 0.0
      %4529 = vmatpush1.msra.mxu0 0.0
      %4530 = vmatprep.subr.mxu0 0.0
      %4531 = vmatpush1.msra.mxu0 0.0
      %4532 = vmatprep.subr.mxu0 0.0
      %4533 = vmatpush1.msra.mxu0 0.0
      %4534 = vmatprep.subr.mxu0 0.0
      %4535 = vmatpush1.msra.mxu0 0.0
      %4536 = vmatprep.subr.mxu0 0.0
      %4537 = vmatpush1.msra.mxu0 0.0
      %4538 = vmatprep.subr.mxu0 0.0
      %4539 = vmatpush1.msra.mxu0 0.0
      %4540 = vmatprep.subr.mxu0 0.0
      %4541 = vmatpush1.msra.mxu0 0.0
      %4542 = vmatprep.subr.mxu0 0.0
      %4543 = vmatpush1.msra.mxu0 0.0
      %4544 = vmatprep.subr.mxu0 0.0
      %4545 = vmatpush1.msra.mxu0 0.0
      %4546 = vmatprep.subr.mxu0 0.0
      %4547 = vmatpush1.msra.mxu0 0.0
      %4548 = vmatprep.subr.mxu0 0.0
      %4549 = vmatpush1.msra.mxu0 0.0
      %4550 = vmatprep.subr.mxu0 0.0
      %4551 = vmatpush1.msra.mxu0 0.0
      %4552 = vmatprep.subr.mxu0 0.0
      %4553 = vmatpush1.msra.mxu0 0.0
      %4554 = vmatprep.subr.mxu0 0.0
      %4555 = vmatpush1.msra.mxu0 0.0
      %4556 = vmatprep.subr.mxu0 0.0
      %4557 = vmatpush1.msra.mxu0 0.0
      %4558 = vmatprep.subr.mxu0 0.0
      %4559 = vmatpush1.msra.mxu0 %v4526
      %4560 = vmatprep.subr.mxu0 0.0
      %4561 = vmatpush2.msra.mxu0 0.0
      %4562 = vmatprep.subr.mxu0 0.0
      %4563 = vmatpush2.msra.mxu0 0.0
      %4564 = vmatprep.subr.mxu0 0.0
      %4565 = vmatpush2.msra.mxu0 0.0
      %4566 = vmatprep.subr.mxu0 0.0
      %4567 = vmatpush2.msra.mxu0 0.0
      %4568 = vmatprep.subr.mxu0 0.0
      %4569 = vmatpush2.msra.mxu0 0.0
      %4570 = vmatprep.subr.mxu0 0.0
      %4571 = vmatpush2.msra.mxu0 0.0
      %4572 = vmatprep.subr.mxu0 0.0
      %4573 = vmatpush2.msra.mxu0 0.0
      %4574 = vmatprep.subr.mxu0 0.0
      %4575 = vmatpush2.msra.mxu0 0.0
      %4576 = vmatprep.subr.mxu0 0.0
      %4577 = vmatpush2.msra.mxu0 0.0
      %4578 = vmatprep.subr.mxu0 0.0
      %4579 = vmatpush2.msra.mxu0 0.0
      %4580 = vmatprep.subr.mxu0 0.0
      %4581 = vmatpush2.msra.mxu0 0.0
      %4582 = vmatprep.subr.mxu0 0.0
      %4583 = vmatpush2.msra.mxu0 0.0
      %4584 = vmatprep.subr.mxu0 0.0
      %4585 = vmatpush2.msra.mxu0 0.0
      %4586 = vmatprep.subr.mxu0 0.0
      %4587 = vmatpush2.msra.mxu0 0.0
      %4588 = vmatprep.subr.mxu0 0.0
      %4589 = vmatpush2.msra.mxu0 0.0
      %4590 = vmatprep.subr.mxu0 0.0
      %4591 = vmatpush2.msra.mxu0 0.0
      %4592 = vmatprep.mubr.f32.mxu0 0.0
      %4593 = vmatmul.mubr.f32.gmra.mxu0 %v4478
      %v4594 = vpop.f32.mrf.mxu0
      %v4595 = vadd.f32 0.0, %v4594
      %v4596 = vpop.f32.mrf.mxu0
      %4597 = vmatprep.mubr.f32.mxu0 0.0
      %4598 = vmatmul.mubr.f32.gmra.mxu0 %v4481
      %v4599 = vpop.f32.mrf.mxu0
      %v4600 = vadd.f32 0.0, %v4599
      %v4601 = vpop.f32.mrf.mxu0
      %4602 = vmatprep.mubr.f32.mxu0 0.0
      %4603 = vmatmul.mubr.f32.gmra.mxu0 %v4484
      %v4604 = vpop.f32.mrf.mxu0
      %v4605 = vadd.f32 0.0, %v4604
      %v4606 = vpop.f32.mrf.mxu0
      %4607 = vmatprep.mubr.f32.mxu0 0.0
      %4608 = vmatmul.mubr.f32.gmra.mxu0 %v4487
      %v4609 = vpop.f32.mrf.mxu0
      %v4610 = vadd.f32 0.0, %v4609
      %v4611 = vpop.f32.mrf.mxu0
      %4612 = vmatprep.mubr.f32.mxu0 0.0
      %4613 = vmatmul.mubr.f32.gmra.mxu0 %v4490
      %v4614 = vpop.f32.mrf.mxu0
      %v4615 = vadd.f32 0.0, %v4614
      %v4616 = vpop.f32.mrf.mxu0
      %4617 = vmatprep.mubr.f32.mxu0 0.0
      %4618 = vmatmul.mubr.f32.gmra.mxu0 %v4493
      %v4619 = vpop.f32.mrf.mxu0
      %v4620 = vadd.f32 0.0, %v4619
      %v4621 = vpop.f32.mrf.mxu0
      %4622 = vmatprep.mubr.f32.mxu0 0.0
      %4623 = vmatmul.mubr.f32.gmra.mxu0 %v4496
      %v4624 = vpop.f32.mrf.mxu0
      %v4625 = vadd.f32 0.0, %v4624
      %v4626 = vpop.f32.mrf.mxu0
      %4627 = vmatprep.mubr.f32.mxu0 0.0
      %4628 = vmatmul.mubr.f32.gmra.mxu0 %v4499
      %v4629 = vpop.f32.mrf.mxu0
      %v4630 = vadd.f32 0.0, %v4629
      %v4631 = vpop.f32.mrf.mxu0
      %4632 = vmatprep.mubr.f32.mxu0 0.0
      %4633 = vmatmul.mubr.f32.gmra.mxu0 %v4502
      %v4634 = vpop.f32.mrf.mxu0
      %v4635 = vadd.f32 0.0, %v4634
      %v4636 = vpop.f32.mrf.mxu0
      %4637 = vmatprep.mubr.f32.mxu0 0.0
      %4638 = vmatmul.mubr.f32.gmra.mxu0 %v4505
      %v4639 = vpop.f32.mrf.mxu0
      %v4640 = vadd.f32 0.0, %v4639
      %v4641 = vpop.f32.mrf.mxu0
      %4642 = vmatprep.mubr.f32.mxu0 0.0
      %4643 = vmatmul.mubr.f32.gmra.mxu0 %v4508
      %v4644 = vpop.f32.mrf.mxu0
      %v4645 = vadd.f32 0.0, %v4644
      %v4646 = vpop.f32.mrf.mxu0
      %4647 = vmatprep.mubr.f32.mxu0 0.0
      %4648 = vmatmul.mubr.f32.gmra.mxu0 %v4511
      %v4649 = vpop.f32.mrf.mxu0
      %v4650 = vadd.f32 0.0, %v4649
      %v4651 = vpop.f32.mrf.mxu0
      %4652 = vmatprep.mubr.f32.mxu0 0.0
      %4653 = vmatmul.mubr.f32.gmra.mxu0 %v4514
      %v4654 = vpop.f32.mrf.mxu0
      %v4655 = vadd.f32 0.0, %v4654
      %v4656 = vpop.f32.mrf.mxu0
      %4657 = vmatprep.mubr.f32.mxu0 0.0
      %4658 = vmatmul.mubr.f32.gmra.mxu0 %v4517
      %v4659 = vpop.f32.mrf.mxu0
      %v4660 = vadd.f32 0.0, %v4659
      %v4661 = vpop.f32.mrf.mxu0
      %4662 = vmatprep.mubr.f32.mxu0 0.0
      %4663 = vmatmul.mubr.f32.gmra.mxu0 %v4520
      %v4664 = vpop.f32.mrf.mxu0
      %v4665 = vadd.f32 0.0, %v4664
      %v4666 = vpop.f32.mrf.mxu0
      %4667 = vmatprep.mubr.f32.mxu0 0.0
      %4668 = vmatmul.mubr.f32.gmra.mxu0 %v4523
      %v4669 = vpop.f32.mrf.mxu0
      %v4670 = vadd.f32 0.0, %v4669
      %v4671 = vpop.f32.mrf.mxu0
      %4672 = vdwg.mxu0
      %v4673 = vadd.f32 %v4442, %v4595
      %v4674 = vadd.f32 %v4443, %v4600
      %v4675 = vadd.f32 %v4444, %v4605
      %v4676 = vadd.f32 %v4445, %v4610
      %v4677 = vadd.f32 %v4446, %v4615
      %v4678 = vadd.f32 %v4447, %v4620
      %v4679 = vadd.f32 %v4448, %v4625
      %v4680 = vadd.f32 %v4449, %v4630
      %v4681 = vadd.f32 %v4450, %v4635
      %v4682 = vadd.f32 %v4451, %v4640
      %v4683 = vadd.f32 %v4452, %v4645
      %v4684 = vadd.f32 %v4453, %v4650
      %v4685 = vadd.f32 %v4454, %v4655
      %v4686 = vadd.f32 %v4455, %v4660
      %v4687 = vadd.f32 %v4456, %v4665
      %v4688 = vadd.f32 %v4457, %v4670
      %v4689 = vld [vmem:[%s4458 + $0x1] sm:$0xff]
      %v4690 = vld [vmem:[%s4458 + $0x9] sm:$0xff]
      %v4691 = vld [vmem:[%s4458 + $0x19] sm:$0xff]
      %v4692 = vld [vmem:[%s4458 + $0x21] sm:$0xff]
      %v4693 = vld [vmem:[%s4458 + $0x31] sm:$0xff]
      %v4694 = vld [vmem:[%s4458 + $0x39] sm:$0xff]
      %v4695 = vld [vmem:[%s4458 + $0x49] sm:$0xff]
      %v4696 = vld [vmem:[%s4458 + $0x51] sm:$0xff]
      %v4697 = vld [vmem:[%s4458 + $0x61] sm:$0xff]
      %v4698 = vld [vmem:[%s4458 + $0x69] sm:$0xff]
      %v4699 = vld [vmem:[%s4458 + $0x79] sm:$0xff]
      %v4700 = vld [vmem:[%s4458 + $0x81] sm:$0xff]
      %v4701 = vld [vmem:[%s4458 + $0x91] sm:$0xff]
      %v4702 = vld [vmem:[%s4458 + $0x99] sm:$0xff]
      %v4703 = vld [vmem:[%s4458 + $0xa9] sm:$0xff]
      %v4704 = vld [vmem:[%s4458 + $0xb1] sm:$0xff]
      %s4705 = scalar_lea.vmem %s5, 28
      %v4706 = vld [vmem:[%s4705] sm:$0xf]
      %v4708 = vsel %vm519, %v4689, 0
      %v4711 = vsel %vm519, %v4690, 0
      %v4714 = vsel %vm519, %v4691, 0
      %v4717 = vsel %vm519, %v4692, 0
      %v4720 = vsel %vm519, %v4693, 0
      %v4723 = vsel %vm519, %v4694, 0
      %v4726 = vsel %vm519, %v4695, 0
      %v4729 = vsel %vm519, %v4696, 0
      %v4732 = vsel %vm519, %v4697, 0
      %v4735 = vsel %vm519, %v4698, 0
      %v4738 = vsel %vm519, %v4699, 0
      %v4741 = vsel %vm519, %v4700, 0
      %v4744 = vsel %vm519, %v4701, 0
      %v4747 = vsel %vm519, %v4702, 0
      %v4750 = vsel %vm519, %v4703, 0
      %v4753 = vsel %vm519, %v4704, 0
      %v4756 = vsel %vm666, %v4706, 0
      %4758 = vmatprep.subr.mxu0 0.0
      %4759 = vmatpush1.msra.mxu0 0.0
      %4760 = vmatprep.subr.mxu0 0.0
      %4761 = vmatpush1.msra.mxu0 0.0
      %4762 = vmatprep.subr.mxu0 0.0
      %4763 = vmatpush1.msra.mxu0 0.0
      %4764 = vmatprep.subr.mxu0 0.0
      %4765 = vmatpush1.msra.mxu0 0.0
      %4766 = vmatprep.subr.mxu0 0.0
      %4767 = vmatpush1.msra.mxu0 0.0
      %4768 = vmatprep.subr.mxu0 0.0
      %4769 = vmatpush1.msra.mxu0 0.0
      %4770 = vmatprep.subr.mxu0 0.0
      %4771 = vmatpush1.msra.mxu0 0.0
      %4772 = vmatprep.subr.mxu0 0.0
      %4773 = vmatpush1.msra.mxu0 0.0
      %4774 = vmatprep.subr.mxu0 0.0
      %4775 = vmatpush1.msra.mxu0 0.0
      %4776 = vmatprep.subr.mxu0 0.0
      %4777 = vmatpush1.msra.mxu0 0.0
      %4778 = vmatprep.subr.mxu0 0.0
      %4779 = vmatpush1.msra.mxu0 0.0
      %4780 = vmatprep.subr.mxu0 0.0
      %4781 = vmatpush1.msra.mxu0 0.0
      %4782 = vmatprep.subr.mxu0 0.0
      %4783 = vmatpush1.msra.mxu0 0.0
      %4784 = vmatprep.subr.mxu0 0.0
      %4785 = vmatpush1.msra.mxu0 0.0
      %4786 = vmatprep.subr.mxu0 0.0
      %4787 = vmatpush1.msra.mxu0 0.0
      %4788 = vmatprep.subr.mxu0 0.0
      %4789 = vmatpush1.msra.mxu0 %v4756
      %4790 = vmatprep.subr.mxu0 0.0
      %4791 = vmatpush2.msra.mxu0 0.0
      %4792 = vmatprep.subr.mxu0 0.0
      %4793 = vmatpush2.msra.mxu0 0.0
      %4794 = vmatprep.subr.mxu0 0.0
      %4795 = vmatpush2.msra.mxu0 0.0
      %4796 = vmatprep.subr.mxu0 0.0
      %4797 = vmatpush2.msra.mxu0 0.0
      %4798 = vmatprep.subr.mxu0 0.0
      %4799 = vmatpush2.msra.mxu0 0.0
      %4800 = vmatprep.subr.mxu0 0.0
      %4801 = vmatpush2.msra.mxu0 0.0
      %4802 = vmatprep.subr.mxu0 0.0
      %4803 = vmatpush2.msra.mxu0 0.0
      %4804 = vmatprep.subr.mxu0 0.0
      %4805 = vmatpush2.msra.mxu0 0.0
      %4806 = vmatprep.subr.mxu0 0.0
      %4807 = vmatpush2.msra.mxu0 0.0
      %4808 = vmatprep.subr.mxu0 0.0
      %4809 = vmatpush2.msra.mxu0 0.0
      %4810 = vmatprep.subr.mxu0 0.0
      %4811 = vmatpush2.msra.mxu0 0.0
      %4812 = vmatprep.subr.mxu0 0.0
      %4813 = vmatpush2.msra.mxu0 0.0
      %4814 = vmatprep.subr.mxu0 0.0
      %4815 = vmatpush2.msra.mxu0 0.0
      %4816 = vmatprep.subr.mxu0 0.0
      %4817 = vmatpush2.msra.mxu0 0.0
      %4818 = vmatprep.subr.mxu0 0.0
      %4819 = vmatpush2.msra.mxu0 0.0
      %4820 = vmatprep.subr.mxu0 0.0
      %4821 = vmatpush2.msra.mxu0 0.0
      %4822 = vmatprep.mubr.f32.mxu0 0.0
      %4823 = vmatmul.mubr.f32.gmra.mxu0 %v4708
      %v4824 = vpop.f32.mrf.mxu0
      %v4825 = vadd.f32 0.0, %v4824
      %v4826 = vpop.f32.mrf.mxu0
      %4827 = vmatprep.mubr.f32.mxu0 0.0
      %4828 = vmatmul.mubr.f32.gmra.mxu0 %v4711
      %v4829 = vpop.f32.mrf.mxu0
      %v4830 = vadd.f32 0.0, %v4829
      %v4831 = vpop.f32.mrf.mxu0
      %4832 = vmatprep.mubr.f32.mxu0 0.0
      %4833 = vmatmul.mubr.f32.gmra.mxu0 %v4714
      %v4834 = vpop.f32.mrf.mxu0
      %v4835 = vadd.f32 0.0, %v4834
      %v4836 = vpop.f32.mrf.mxu0
      %4837 = vmatprep.mubr.f32.mxu0 0.0
      %4838 = vmatmul.mubr.f32.gmra.mxu0 %v4717
      %v4839 = vpop.f32.mrf.mxu0
      %v4840 = vadd.f32 0.0, %v4839
      %v4841 = vpop.f32.mrf.mxu0
      %4842 = vmatprep.mubr.f32.mxu0 0.0
      %4843 = vmatmul.mubr.f32.gmra.mxu0 %v4720
      %v4844 = vpop.f32.mrf.mxu0
      %v4845 = vadd.f32 0.0, %v4844
      %v4846 = vpop.f32.mrf.mxu0
      %4847 = vmatprep.mubr.f32.mxu0 0.0
      %4848 = vmatmul.mubr.f32.gmra.mxu0 %v4723
      %v4849 = vpop.f32.mrf.mxu0
      %v4850 = vadd.f32 0.0, %v4849
      %v4851 = vpop.f32.mrf.mxu0
      %4852 = vmatprep.mubr.f32.mxu0 0.0
      %4853 = vmatmul.mubr.f32.gmra.mxu0 %v4726
      %v4854 = vpop.f32.mrf.mxu0
      %v4855 = vadd.f32 0.0, %v4854
      %v4856 = vpop.f32.mrf.mxu0
      %4857 = vmatprep.mubr.f32.mxu0 0.0
      %4858 = vmatmul.mubr.f32.gmra.mxu0 %v4729
      %v4859 = vpop.f32.mrf.mxu0
      %v4860 = vadd.f32 0.0, %v4859
      %v4861 = vpop.f32.mrf.mxu0
      %4862 = vmatprep.mubr.f32.mxu0 0.0
      %4863 = vmatmul.mubr.f32.gmra.mxu0 %v4732
      %v4864 = vpop.f32.mrf.mxu0
      %v4865 = vadd.f32 0.0, %v4864
      %v4866 = vpop.f32.mrf.mxu0
      %4867 = vmatprep.mubr.f32.mxu0 0.0
      %4868 = vmatmul.mubr.f32.gmra.mxu0 %v4735
      %v4869 = vpop.f32.mrf.mxu0
      %v4870 = vadd.f32 0.0, %v4869
      %v4871 = vpop.f32.mrf.mxu0
      %4872 = vmatprep.mubr.f32.mxu0 0.0
      %4873 = vmatmul.mubr.f32.gmra.mxu0 %v4738
      %v4874 = vpop.f32.mrf.mxu0
      %v4875 = vadd.f32 0.0, %v4874
      %v4876 = vpop.f32.mrf.mxu0
      %4877 = vmatprep.mubr.f32.mxu0 0.0
      %4878 = vmatmul.mubr.f32.gmra.mxu0 %v4741
      %v4879 = vpop.f32.mrf.mxu0
      %v4880 = vadd.f32 0.0, %v4879
      %v4881 = vpop.f32.mrf.mxu0
      %4882 = vmatprep.mubr.f32.mxu0 0.0
      %4883 = vmatmul.mubr.f32.gmra.mxu0 %v4744
      %v4884 = vpop.f32.mrf.mxu0
      %v4885 = vadd.f32 0.0, %v4884
      %v4886 = vpop.f32.mrf.mxu0
      %4887 = vmatprep.mubr.f32.mxu0 0.0
      %4888 = vmatmul.mubr.f32.gmra.mxu0 %v4747
      %v4889 = vpop.f32.mrf.mxu0
      %v4890 = vadd.f32 0.0, %v4889
      %v4891 = vpop.f32.mrf.mxu0
      %4892 = vmatprep.mubr.f32.mxu0 0.0
      %4893 = vmatmul.mubr.f32.gmra.mxu0 %v4750
      %v4894 = vpop.f32.mrf.mxu0
      %v4895 = vadd.f32 0.0, %v4894
      %v4896 = vpop.f32.mrf.mxu0
      %4897 = vmatprep.mubr.f32.mxu0 0.0
      %4898 = vmatmul.mubr.f32.gmra.mxu0 %v4753
      %v4899 = vpop.f32.mrf.mxu0
      %v4900 = vadd.f32 0.0, %v4899
      %v4901 = vpop.f32.mrf.mxu0
      %4902 = vdwg.mxu0
      %v4903 = vadd.f32 %v4673, %v4825
      %v4904 = vadd.f32 %v4674, %v4830
      %v4905 = vadd.f32 %v4675, %v4835
      %v4906 = vadd.f32 %v4676, %v4840
      %v4907 = vadd.f32 %v4677, %v4845
      %v4908 = vadd.f32 %v4678, %v4850
      %v4909 = vadd.f32 %v4679, %v4855
      %v4910 = vadd.f32 %v4680, %v4860
      %v4911 = vadd.f32 %v4681, %v4865
      %v4912 = vadd.f32 %v4682, %v4870
      %v4913 = vadd.f32 %v4683, %v4875
      %v4914 = vadd.f32 %v4684, %v4880
      %v4915 = vadd.f32 %v4685, %v4885
      %v4916 = vadd.f32 %v4686, %v4890
      %v4917 = vadd.f32 %v4687, %v4895
      %v4918 = vadd.f32 %v4688, %v4900
      %v4919 = vld [vmem:[%s4458 + $0x2] sm:$0xff]
      %v4920 = vld [vmem:[%s4458 + $0xa] sm:$0xff]
      %v4921 = vld [vmem:[%s4458 + $0x1a] sm:$0xff]
      %v4922 = vld [vmem:[%s4458 + $0x22] sm:$0xff]
      %v4923 = vld [vmem:[%s4458 + $0x32] sm:$0xff]
      %v4924 = vld [vmem:[%s4458 + $0x3a] sm:$0xff]
      %v4925 = vld [vmem:[%s4458 + $0x4a] sm:$0xff]
      %v4926 = vld [vmem:[%s4458 + $0x52] sm:$0xff]
      %v4927 = vld [vmem:[%s4458 + $0x62] sm:$0xff]
      %v4928 = vld [vmem:[%s4458 + $0x6a] sm:$0xff]
      %v4929 = vld [vmem:[%s4458 + $0x7a] sm:$0xff]
      %v4930 = vld [vmem:[%s4458 + $0x82] sm:$0xff]
      %v4931 = vld [vmem:[%s4458 + $0x92] sm:$0xff]
      %v4932 = vld [vmem:[%s4458 + $0x9a] sm:$0xff]
      %v4933 = vld [vmem:[%s4458 + $0xaa] sm:$0xff]
      %v4934 = vld [vmem:[%s4458 + $0xb2] sm:$0xff]
      %s4935 = scalar_lea.vmem %s5, 32
      %v4936 = vld [vmem:[%s4935] sm:$0xf]
      %v4938 = vsel %vm519, %v4919, 0
      %v4941 = vsel %vm519, %v4920, 0
      %v4944 = vsel %vm519, %v4921, 0
      %v4947 = vsel %vm519, %v4922, 0
      %v4950 = vsel %vm519, %v4923, 0
      %v4953 = vsel %vm519, %v4924, 0
      %v4956 = vsel %vm519, %v4925, 0
      %v4959 = vsel %vm519, %v4926, 0
      %v4962 = vsel %vm519, %v4927, 0
      %v4965 = vsel %vm519, %v4928, 0
      %v4968 = vsel %vm519, %v4929, 0
      %v4971 = vsel %vm519, %v4930, 0
      %v4974 = vsel %vm519, %v4931, 0
      %v4977 = vsel %vm519, %v4932, 0
      %v4980 = vsel %vm519, %v4933, 0
      %v4983 = vsel %vm519, %v4934, 0
      %v4986 = vsel %vm666, %v4936, 0
      %4988 = vmatprep.subr.mxu0 0.0
      %4989 = vmatpush1.msra.mxu0 0.0
      %4990 = vmatprep.subr.mxu0 0.0
      %4991 = vmatpush1.msra.mxu0 0.0
      %4992 = vmatprep.subr.mxu0 0.0
      %4993 = vmatpush1.msra.mxu0 0.0
      %4994 = vmatprep.subr.mxu0 0.0
      %4995 = vmatpush1.msra.mxu0 0.0
      %4996 = vmatprep.subr.mxu0 0.0
      %4997 = vmatpush1.msra.mxu0 0.0
      %4998 = vmatprep.subr.mxu0 0.0
      %4999 = vmatpush1.msra.mxu0 0.0
      %5000 = vmatprep.subr.mxu0 0.0
      %5001 = vmatpush1.msra.mxu0 0.0
      %5002 = vmatprep.subr.mxu0 0.0
      %5003 = vmatpush1.msra.mxu0 0.0
      %5004 = vmatprep.subr.mxu0 0.0
      %5005 = vmatpush1.msra.mxu0 0.0
      %5006 = vmatprep.subr.mxu0 0.0
      %5007 = vmatpush1.msra.mxu0 0.0
      %5008 = vmatprep.subr.mxu0 0.0
      %5009 = vmatpush1.msra.mxu0 0.0
      %5010 = vmatprep.subr.mxu0 0.0
      %5011 = vmatpush1.msra.mxu0 0.0
      %5012 = vmatprep.subr.mxu0 0.0
      %5013 = vmatpush1.msra.mxu0 0.0
      %5014 = vmatprep.subr.mxu0 0.0
      %5015 = vmatpush1.msra.mxu0 0.0
      %5016 = vmatprep.subr.mxu0 0.0
      %5017 = vmatpush1.msra.mxu0 0.0
      %5018 = vmatprep.subr.mxu0 0.0
      %5019 = vmatpush1.msra.mxu0 %v4986
      %5020 = vmatprep.subr.mxu0 0.0
      %5021 = vmatpush2.msra.mxu0 0.0
      %5022 = vmatprep.subr.mxu0 0.0
      %5023 = vmatpush2.msra.mxu0 0.0
      %5024 = vmatprep.subr.mxu0 0.0
      %5025 = vmatpush2.msra.mxu0 0.0
      %5026 = vmatprep.subr.mxu0 0.0
      %5027 = vmatpush2.msra.mxu0 0.0
      %5028 = vmatprep.subr.mxu0 0.0
      %5029 = vmatpush2.msra.mxu0 0.0
      %5030 = vmatprep.subr.mxu0 0.0
      %5031 = vmatpush2.msra.mxu0 0.0
      %5032 = vmatprep.subr.mxu0 0.0
      %5033 = vmatpush2.msra.mxu0 0.0
      %5034 = vmatprep.subr.mxu0 0.0
      %5035 = vmatpush2.msra.mxu0 0.0
      %5036 = vmatprep.subr.mxu0 0.0
      %5037 = vmatpush2.msra.mxu0 0.0
      %5038 = vmatprep.subr.mxu0 0.0
      %5039 = vmatpush2.msra.mxu0 0.0
      %5040 = vmatprep.subr.mxu0 0.0
      %5041 = vmatpush2.msra.mxu0 0.0
      %5042 = vmatprep.subr.mxu0 0.0
      %5043 = vmatpush2.msra.mxu0 0.0
      %5044 = vmatprep.subr.mxu0 0.0
      %5045 = vmatpush2.msra.mxu0 0.0
      %5046 = vmatprep.subr.mxu0 0.0
      %5047 = vmatpush2.msra.mxu0 0.0
      %5048 = vmatprep.subr.mxu0 0.0
      %5049 = vmatpush2.msra.mxu0 0.0
      %5050 = vmatprep.subr.mxu0 0.0
      %5051 = vmatpush2.msra.mxu0 0.0
      %5052 = vmatprep.mubr.f32.mxu0 0.0
      %5053 = vmatmul.mubr.f32.gmra.mxu0 %v4938
      %v5054 = vpop.f32.mrf.mxu0
      %v5055 = vadd.f32 0.0, %v5054
      %v5056 = vpop.f32.mrf.mxu0
      %5057 = vmatprep.mubr.f32.mxu0 0.0
      %5058 = vmatmul.mubr.f32.gmra.mxu0 %v4941
      %v5059 = vpop.f32.mrf.mxu0
      %v5060 = vadd.f32 0.0, %v5059
      %v5061 = vpop.f32.mrf.mxu0
      %5062 = vmatprep.mubr.f32.mxu0 0.0
      %5063 = vmatmul.mubr.f32.gmra.mxu0 %v4944
      %v5064 = vpop.f32.mrf.mxu0
      %v5065 = vadd.f32 0.0, %v5064
      %v5066 = vpop.f32.mrf.mxu0
      %5067 = vmatprep.mubr.f32.mxu0 0.0
      %5068 = vmatmul.mubr.f32.gmra.mxu0 %v4947
      %v5069 = vpop.f32.mrf.mxu0
      %v5070 = vadd.f32 0.0, %v5069
      %v5071 = vpop.f32.mrf.mxu0
      %5072 = vmatprep.mubr.f32.mxu0 0.0
      %5073 = vmatmul.mubr.f32.gmra.mxu0 %v4950
      %v5074 = vpop.f32.mrf.mxu0
      %v5075 = vadd.f32 0.0, %v5074
      %v5076 = vpop.f32.mrf.mxu0
      %5077 = vmatprep.mubr.f32.mxu0 0.0
      %5078 = vmatmul.mubr.f32.gmra.mxu0 %v4953
      %v5079 = vpop.f32.mrf.mxu0
      %v5080 = vadd.f32 0.0, %v5079
      %v5081 = vpop.f32.mrf.mxu0
      %5082 = vmatprep.mubr.f32.mxu0 0.0
      %5083 = vmatmul.mubr.f32.gmra.mxu0 %v4956
      %v5084 = vpop.f32.mrf.mxu0
      %v5085 = vadd.f32 0.0, %v5084
      %v5086 = vpop.f32.mrf.mxu0
      %5087 = vmatprep.mubr.f32.mxu0 0.0
      %5088 = vmatmul.mubr.f32.gmra.mxu0 %v4959
      %v5089 = vpop.f32.mrf.mxu0
      %v5090 = vadd.f32 0.0, %v5089
      %v5091 = vpop.f32.mrf.mxu0
      %5092 = vmatprep.mubr.f32.mxu0 0.0
      %5093 = vmatmul.mubr.f32.gmra.mxu0 %v4962
      %v5094 = vpop.f32.mrf.mxu0
      %v5095 = vadd.f32 0.0, %v5094
      %v5096 = vpop.f32.mrf.mxu0
      %5097 = vmatprep.mubr.f32.mxu0 0.0
      %5098 = vmatmul.mubr.f32.gmra.mxu0 %v4965
      %v5099 = vpop.f32.mrf.mxu0
      %v5100 = vadd.f32 0.0, %v5099
      %v5101 = vpop.f32.mrf.mxu0
      %5102 = vmatprep.mubr.f32.mxu0 0.0
      %5103 = vmatmul.mubr.f32.gmra.mxu0 %v4968
      %v5104 = vpop.f32.mrf.mxu0
      %v5105 = vadd.f32 0.0, %v5104
      %v5106 = vpop.f32.mrf.mxu0
      %5107 = vmatprep.mubr.f32.mxu0 0.0
      %5108 = vmatmul.mubr.f32.gmra.mxu0 %v4971
      %v5109 = vpop.f32.mrf.mxu0
      %v5110 = vadd.f32 0.0, %v5109
      %v5111 = vpop.f32.mrf.mxu0
      %5112 = vmatprep.mubr.f32.mxu0 0.0
      %5113 = vmatmul.mubr.f32.gmra.mxu0 %v4974
      %v5114 = vpop.f32.mrf.mxu0
      %v5115 = vadd.f32 0.0, %v5114
      %v5116 = vpop.f32.mrf.mxu0
      %5117 = vmatprep.mubr.f32.mxu0 0.0
      %5118 = vmatmul.mubr.f32.gmra.mxu0 %v4977
      %v5119 = vpop.f32.mrf.mxu0
      %v5120 = vadd.f32 0.0, %v5119
      %v5121 = vpop.f32.mrf.mxu0
      %5122 = vmatprep.mubr.f32.mxu0 0.0
      %5123 = vmatmul.mubr.f32.gmra.mxu0 %v4980
      %v5124 = vpop.f32.mrf.mxu0
      %v5125 = vadd.f32 0.0, %v5124
      %v5126 = vpop.f32.mrf.mxu0
      %5127 = vmatprep.mubr.f32.mxu0 0.0
      %5128 = vmatmul.mubr.f32.gmra.mxu0 %v4983
      %v5129 = vpop.f32.mrf.mxu0
      %v5130 = vadd.f32 0.0, %v5129
      %v5131 = vpop.f32.mrf.mxu0
      %5132 = vdwg.mxu0
      %v5133 = vadd.f32 %v4903, %v5055
      %v5134 = vadd.f32 %v4904, %v5060
      %v5135 = vadd.f32 %v4905, %v5065
      %v5136 = vadd.f32 %v4906, %v5070
      %v5137 = vadd.f32 %v4907, %v5075
      %v5138 = vadd.f32 %v4908, %v5080
      %v5139 = vadd.f32 %v4909, %v5085
      %v5140 = vadd.f32 %v4910, %v5090
      %v5141 = vadd.f32 %v4911, %v5095
      %v5142 = vadd.f32 %v4912, %v5100
      %v5143 = vadd.f32 %v4913, %v5105
      %v5144 = vadd.f32 %v4914, %v5110
      %v5145 = vadd.f32 %v4915, %v5115
      %v5146 = vadd.f32 %v4916, %v5120
      %v5147 = vadd.f32 %v4917, %v5125
      %v5148 = vadd.f32 %v4918, %v5130
      %v5149 = vld [vmem:[%s406] sm:$0xff]
      %v5150 = vld [vmem:[%s406 + $0x8] sm:$0xff]
      %v5151 = vld [vmem:[%s406 + $0x10] sm:$0xff]
      %v5152 = vld [vmem:[%s406 + $0x18] sm:$0xff]
      %v5153 = vld [vmem:[%s406 + $0x20] sm:$0xff]
      %v5154 = vld [vmem:[%s406 + $0x28] sm:$0xff]
      %v5155 = vld [vmem:[%s406 + $0x30] sm:$0xff]
      %v5156 = vld [vmem:[%s406 + $0x38] sm:$0xff]
      %v5157 = vld [vmem:[%s406 + $0x40] sm:$0xff]
      %v5158 = vld [vmem:[%s406 + $0x48] sm:$0xff]
      %v5159 = vld [vmem:[%s406 + $0x50] sm:$0xff]
      %v5160 = vld [vmem:[%s406 + $0x58] sm:$0xff]
      %v5161 = vld [vmem:[%s406 + $0x60] sm:$0xff]
      %v5162 = vld [vmem:[%s406 + $0x68] sm:$0xff]
      %v5163 = vld [vmem:[%s406 + $0x70] sm:$0xff]
      %v5164 = vld [vmem:[%s406 + $0x78] sm:$0xff]
      %v5165 = vadd.f32 %v5133, %v5149
      %v5166 = vadd.f32 %v5134, %v5150
      %v5167 = vadd.f32 %v5135, %v5151
      %v5168 = vadd.f32 %v5136, %v5152
      %v5169 = vadd.f32 %v5137, %v5153
      %v5170 = vadd.f32 %v5138, %v5154
      %v5171 = vadd.f32 %v5139, %v5155
      %v5172 = vadd.f32 %v5140, %v5156
      %v5173 = vadd.f32 %v5141, %v5157
      %v5174 = vadd.f32 %v5142, %v5158
      %v5175 = vadd.f32 %v5143, %v5159
      %v5176 = vadd.f32 %v5144, %v5160
      %v5177 = vadd.f32 %v5145, %v5161
      %v5178 = vadd.f32 %v5146, %v5162
      %v5179 = vadd.f32 %v5147, %v5163
      %v5180 = vadd.f32 %v5148, %v5164
      %v5181 = vmax.f32 %v5165, 0.0
      %v5182 = vmax.f32 %v5166, 0.0
      %v5183 = vmax.f32 %v5167, 0.0
      %v5184 = vmax.f32 %v5168, 0.0
      %v5185 = vmax.f32 %v5169, 0.0
      %v5186 = vmax.f32 %v5170, 0.0
      %v5187 = vmax.f32 %v5171, 0.0
      %v5188 = vmax.f32 %v5172, 0.0
      %v5189 = vmax.f32 %v5173, 0.0
      %v5190 = vmax.f32 %v5174, 0.0
      %v5191 = vmax.f32 %v5175, 0.0
      %v5192 = vmax.f32 %v5176, 0.0
      %v5193 = vmax.f32 %v5177, 0.0
      %v5194 = vmax.f32 %v5178, 0.0
      %v5195 = vmax.f32 %v5179, 0.0
      %v5196 = vmax.f32 %v5180, 0.0
      %5197 = vst.msk [vmem:[%s455] sm:$0xff] %vm519, %v5181
      %5198 = vst.msk [vmem:[%s455 + $0x8] sm:$0xff] %vm519, %v5182
      %5199 = vst.msk [vmem:[%s455 + $0x10] sm:$0xff] %vm519, %v5183
      %5200 = vst.msk [vmem:[%s455 + $0x18] sm:$0xff] %vm519, %v5184
      %5201 = vst.msk [vmem:[%s455 + $0x20] sm:$0xff] %vm519, %v5185
      %5202 = vst.msk [vmem:[%s455 + $0x28] sm:$0xff] %vm519, %v5186
      %5203 = vst.msk [vmem:[%s455 + $0x30] sm:$0xff] %vm519, %v5187
      %5204 = vst.msk [vmem:[%s455 + $0x38] sm:$0xff] %vm519, %v5188
      %5205 = vst.msk [vmem:[%s455 + $0x40] sm:$0xff] %vm519, %v5189
      %5206 = vst.msk [vmem:[%s455 + $0x48] sm:$0xff] %vm519, %v5190
      %5207 = vst.msk [vmem:[%s455 + $0x50] sm:$0xff] %vm519, %v5191
      %5208 = vst.msk [vmem:[%s455 + $0x58] sm:$0xff] %vm519, %v5192
      %5209 = vst.msk [vmem:[%s455 + $0x60] sm:$0xff] %vm519, %v5193
      %5210 = vst.msk [vmem:[%s455 + $0x68] sm:$0xff] %vm519, %v5194
      %5211 = vst.msk [vmem:[%s455 + $0x70] sm:$0xff] %vm519, %v5195
      %5212 = vst.msk [vmem:[%s455 + $0x78] sm:$0xff] %vm519, %v5196
      %s5213 = smul.u32 8, %s23
      %p5214 = scmp.lt.s32.totalorder %s22, 1
      %s5215 = scalar_select %p5214, %s22, 1
      %p5216 = scmp.lt.s32.totalorder %s5213, 15
      %s5217 = scalar_select %p5216, %s5213, 15
      %s5218 = smul.addr %s5217, 2
      %s5219 = smul.addr %s5215, 32
      %s5220 = sadd.s32 %s5218, %s5219
      %s5221 = smul.addr %s5220, 8
      %s5222 = scalar_lea.vmem %s7, %s5221
      // Predicated region
      $region73: #{tpu_custom_call.1} parent=47 // pred_check
        %p5223 = pneg %p234
      $region74: #{tpu_custom_call.1} parent=47 // pred_check_branch
        %5225 = sbr.rel (%p5223) target = $region76
      $region75: #{tpu_custom_call.1} parent=47 // pred_region
        %s5226 = smul.u32 8, %s23
      $region76: #{tpu_custom_call.1} parent=47 // pred_fallthru
        _
    $region48: #{tpu_custom_call.1} parent=5 // pred_fallthru
      _
    %p5227 = scmp.le.s32.totalorder 2, %s13
    // Predicated region
    $region77: #{tpu_custom_call.1} parent=5 // pred_check
      %p5228 = pneg %p5227
    $region78: #{tpu_custom_call.1} parent=5 // pred_check_branch
      %5230 = sbr.rel (%p5228) target = $region80
    $region79: #{tpu_custom_call.1} parent=5 // pred_region
      %s5231 = ssub.s32 %s13, 2
      // Predicated region
      $region81: #{tpu_custom_call.1} parent=79 // pred_check
        %p5232 = pneg %p240
      $region82: #{tpu_custom_call.1} parent=79 // pred_check_branch
        %5234 = sbr.rel (%p5232) target = $region84
      $region83: #{tpu_custom_call.1} parent=79 // pred_region
        %s5235 = smul.u32 8, %s25
        %p5236 = scmp.lt.s32.totalorder %s24, 1
        %s5237 = scalar_select %p5236, %s24, 1
        %p5238 = scmp.lt.s32.totalorder %s5235, 15
        %s5239 = scalar_select %p5238, %s5235, 15
        %s5240 = smul.addr %s5239, 2
        %s5241 = smul.addr %s5237, 32
        %s5242 = sadd.s32 %s5240, %s5241
        %s5243 = smul.addr %s5242, 8
        %s5244 = scalar_lea.vmem %s7, %s5243
      $region84: #{tpu_custom_call.1} parent=79 // pred_fallthru
        _
    $region80: #{tpu_custom_call.1} parent=5 // pred_fallthru
      _
  $region6: #{tpu_custom_call.1} parent=0 // loop_footer
    %s17 = sadd.s32 1, %s13
  $region7: #{tpu_custom_call.1} parent=0 // loop_footer_branch
    %12 = sbr.rel target = $region3
  $region8: #{tpu_custom_call.1} parent=0 // loop_exit
    _

</llo_original>
